<compile_context>
chip_gen: v7x
topology: tpu7x:2x2x1
jax: 0.10.0
libtpu: 0.0.40
codegen_flags: <defaults>
</compile_context>

<pallas_src>
import functools

import jax
import jax.numpy as jnp
from jax.experimental import pallas as pl
from jax.experimental.pallas import tpu as pltpu

FP = 128  # lane-padded feature width (>= max(num_features, hidden dims, output_dim))


# ----------------------------- kernels ---------------------------------------


def gcn_layer1_kernel(a_ref, hs_ref, dinv_ref, w_ref, b_ref, hout_ref, acc_ref):
    """Row strip i, contraction block k of
         H1s = dinv * relu( dinv * ((A_raw @ Hs) @ W) + b )
       where Hs = dinv * H_in (pre-scaled outside) and A_raw is the raw int8
       adjacency (self-loops included).  The output is emitted already
       dinv-scaled, i.e. exactly the operand the next layer's aggregation needs.
    """
    k = pl.program_id(1)

    @pl.when(k == 0)
    def _():
        acc_ref[...] = jnp.zeros_like(acc_ref)

    a = a_ref[...].astype(jnp.bfloat16)            # int8 counts -> bf16 for the MXU
    acc_ref[...] += jnp.dot(a, hs_ref[...], preferred_element_type=jnp.float32)

    @pl.when(k == pl.num_programs(1) - 1)
    def _():
        dinv = dinv_ref[...]                        # (TM, 1) f32 row scales
        pre = dinv * jnp.dot(acc_ref[...].astype(jnp.bfloat16), w_ref[...],
                             preferred_element_type=jnp.float32) + b_ref[...]
        h = jnp.maximum(pre, 0.0)
        hout_ref[...] = (dinv * h).astype(hout_ref.dtype)


def gcn_layer2_pool_kernel(a_ref, hs_ref, pool_ref, dinv_ref, w2_ref, b2_ref,
                           w3_ref, part_ref, acc_ref, pa_ref):
    """Layer 2 fused with layer 3 + global_mean_pool for row strip i.

    Emits the per-strip partial
        part_i = (pool_s @ A_raw[strip_i, :]^T) @ ((dinv * H2)[strip_i] @ W3)
    (A_raw symmetric => A_raw[:, strip_i] == A_raw[strip_i, :]^T), so the graph
    embeddings are sum_i part_i + b3 -- no third N^2 pass over the adjacency
    and H2 never leaves VMEM.
    """
    k = pl.program_id(1)

    @pl.when(k == 0)
    def _():
        acc_ref[...] = jnp.zeros_like(acc_ref)
        pa_ref[...] = jnp.zeros_like(pa_ref)

    a = a_ref[...].astype(jnp.bfloat16)
    acc_ref[...] += jnp.dot(a, hs_ref[...], preferred_element_type=jnp.float32)
    # pool_s[:, cols_k] contracted with A[strip_i, cols_k] over the shared node
    # axis ("@ B^T" pattern -- no transpose materialized, contiguous row strips).
    pa_ref[...] += jax.lax.dot_general(
        pool_ref[...], a, (((1,), (1,)), ((), ())),
        preferred_element_type=jnp.float32)

    @pl.when(k == pl.num_programs(1) - 1)
    def _():
        dinv = dinv_ref[...]
        pre = dinv * jnp.dot(acc_ref[...].astype(jnp.bfloat16), w2_ref[...],
                             preferred_element_type=jnp.float32) + b2_ref[...]
        h2s = dinv * jnp.maximum(pre, 0.0)                       # (dinv * H2)[strip]
        t = jnp.dot(h2s.astype(jnp.bfloat16), w3_ref[...],
                    preferred_element_type=jnp.float32)          # (TM, FP)
        part_ref[...] = jnp.dot(pa_ref[...].astype(jnp.bfloat16),
                                t.astype(jnp.bfloat16),
                                preferred_element_type=jnp.float32)


# ----------------------------- pallas_call wrappers ---------------------------


def _gcn_layer1(a_raw, hs, dinv_col, w1, b1, tm, tk, vmem_limit):
    n_pad, fp = hs.shape
    grid = (n_pad // tm, n_pad // tk)
    cost = pl.CostEstimate(
        flops=2 * n_pad * n_pad * fp + 2 * n_pad * fp * fp,
        transcendentals=0,
        bytes_accessed=n_pad * n_pad + grid[0] * n_pad * fp * 2 + n_pad * fp * 2,
    )
    return pl.pallas_call(
        gcn_layer1_kernel,
        out_shape=jax.ShapeDtypeStruct((n_pad, fp), jnp.bfloat16),
        grid_spec=pltpu.PrefetchScalarGridSpec(
            num_scalar_prefetch=0,
            grid=grid,
            in_specs=[
                pl.BlockSpec((tm, tk), lambda i, k: (i, k)),    # raw A block (int8)
                pl.BlockSpec((tk, fp), lambda i, k: (k, 0)),    # dinv-scaled H_in
                pl.BlockSpec((tm, 1), lambda i, k: (i, 0)),     # dinv row strip
                pl.BlockSpec((fp, fp), lambda i, k: (0, 0)),    # W1 (bf16)
                pl.BlockSpec((1, fp), lambda i, k: (0, 0)),     # b1 (f32)
            ],
            out_specs=pl.BlockSpec((tm, fp), lambda i, k: (i, 0)),
            scratch_shapes=[pltpu.VMEM((tm, fp), jnp.float32)],
        ),
        compiler_params=pltpu.CompilerParams(
            dimension_semantics=("parallel", "arbitrary"),   # megacore on row strips
            vmem_limit_bytes=vmem_limit,
        ),
        cost_estimate=cost,
    )(a_raw, hs, dinv_col, w1, b1)


def _gcn_layer2_pool(a_raw, h1s, pool_s, dinv_col, w2, b2, w3, tm, tk, vmem_limit):
    n_pad, fp = h1s.shape
    g_pad = pool_s.shape[0]
    grid = (n_pad // tm, n_pad // tk)
    cost = pl.CostEstimate(
        flops=2 * n_pad * n_pad * (fp + g_pad) + 4 * n_pad * fp * fp
        + 2 * g_pad * n_pad * fp,
        transcendentals=0,
        bytes_accessed=n_pad * n_pad + grid[0] * n_pad * (fp + g_pad) * 2
        + grid[0] * g_pad * fp * 4,
    )
    return pl.pallas_call(
        gcn_layer2_pool_kernel,
        out_shape=jax.ShapeDtypeStruct((grid[0], g_pad, fp), jnp.float32),
        grid_spec=pltpu.PrefetchScalarGridSpec(
            num_scalar_prefetch=0,
            grid=grid,
            in_specs=[
                pl.BlockSpec((tm, tk), lambda i, k: (i, k)),     # raw A block (int8)
                pl.BlockSpec((tk, fp), lambda i, k: (k, 0)),     # dinv-scaled H1
                pl.BlockSpec((g_pad, tk), lambda i, k: (0, k)),  # dinv-scaled pool
                pl.BlockSpec((tm, 1), lambda i, k: (i, 0)),      # dinv row strip
                pl.BlockSpec((fp, fp), lambda i, k: (0, 0)),     # W2 (bf16)
                pl.BlockSpec((1, fp), lambda i, k: (0, 0)),      # b2 (f32)
                pl.BlockSpec((fp, fp), lambda i, k: (0, 0)),     # W3 (bf16)
            ],
            out_specs=pl.BlockSpec((None, g_pad, fp), lambda i, k: (i, 0, 0)),
            scratch_shapes=[pltpu.VMEM((tm, fp), jnp.float32),
                            pltpu.VMEM((g_pad, tm), jnp.float32)],
        ),
        compiler_params=pltpu.CompilerParams(
            dimension_semantics=("parallel", "arbitrary"),
            vmem_limit_bytes=vmem_limit,
        ),
        cost_estimate=cost,
    )(a_raw, h1s, pool_s, dinv_col, w2, b2, w3)


# ----------------------------- tiling / glue -----------------------------------


def _round_up(v, m):
    return ((v + m - 1) // m) * m


def _vmem_capacity_bytes():
    try:
        return int(pltpu.get_tpu_info().vmem_capacity_bytes)
    except Exception:
        return 64 << 20          # conservative fallback (v7x-sized VMEM)


def _layer_vmem_bytes(tm, tk, g_pad, fp=FP):
    a = 2 * tm * tk              # int8 A blocks, double-buffered
    hs = 2 * tk * fp * 2         # bf16 H strip, double-buffered
    pool = 2 * g_pad * tk * 2    # bf16 pool strip (fused layer only)
    dinv = 2 * tm * 128 * 4      # (tm, 1) f32 strip, lane-padded
    outs = 2 * tm * fp * 2 + 2 * g_pad * fp * 4
    scr = tm * fp * 4 + g_pad * tm * 4
    w = 3 * fp * fp * 2 + 2 * fp * 4
    return a + hs + pool + dinv + outs + scr + w + (2 << 20)   # +2 MiB slack


def _pick_tiles(n_pad, g_pad, budget):
    """Largest (TILE_M, TILE_K) blocks that fit the per-generation VMEM budget.

    TILE_K == n_pad keeps H resident (read once).  Only when that cannot fit
    (v7x 64 MiB VMEM at large N) do we drop to 2-D contraction tiling, which
    bounds VMEM independently of N at the cost of re-reading H once per row
    strip.
    """
    tk_cand = [n_pad] + [t for t in (16384, 8192, 4096, 2048, 1024, 512, 256)
                         if t < n_pad and n_pad % t == 0]
    tm_cand = [t for t in (1024, 512, 256) if n_pad % t == 0]
    for tk in tk_cand:
        for tm in tm_cand:
            if _layer_vmem_bytes(tm, tk, g_pad) <= budget:
                return tm, tk
    # TODO(synk): for extreme N even (256, 256) blocks exceed the budget; the
    # feature axis would also need tiling.  Unreachable for pose-graph sizes.
    return 256, 256


def _pad2(m, rows, cols):
    return jnp.zeros((rows, cols), m.dtype).at[: m.shape[0], : m.shape[1]].set(m)


@functools.partial(jax.jit, static_argnames=("num_graphs",))
def pose_gcn_forward(x, edge_index, batch, params, num_graphs):
    """x: (N, F) f32; edge_index: (2, E) int32; batch: (N,) int32 graph ids.

    NOTE: the fused pooled pass assumes the edge list is undirected (both
    directions present) so the raw adjacency is symmetric -- true for PyG
    pose graphs; guard upstream if directed graphs are ever passed.
    """
    N = x.shape[0]
    w1, b1, w2, b2, w3, b3 = params
    out_dim = w3.shape[1]
    assert max(x.shape[1], w1.shape[1], w2.shape[1], out_dim) <= FP

    N_pad = _round_up(max(N, 256), 256)
    G_pad = _round_up(max(num_graphs, 16), 16)

    cap = _vmem_capacity_bytes()
    vmem_limit = (3 * cap) // 4            # ~48 MiB on v7x, ~96 MiB on v5e/v6e
    TM, TK = _pick_tiles(N_pad, G_pad, vmem_limit - (4 << 20))

    # --- glue: raw adjacency (+ self loops) scattered directly into int8 -------
    # Duplicate edges accumulate, matching PyG's sparse message passing.
    idx = jnp.arange(N, dtype=edge_index.dtype)
    src = jnp.concatenate([edge_index[0], idx])
    dst = jnp.concatenate([edge_index[1], idx])
    a_raw = jnp.zeros((N_pad, N_pad), jnp.int8).at[dst, src].add(jnp.int8(1))
    # Degrees straight from the edge list (no N^2 read); D^{-1/2} is folded into
    # H / pool / the in-kernel row scaling, so no N^2 normalization pass at all.
    deg = jnp.zeros((N_pad,), jnp.float32).at[dst].add(1.0)
    dinv = jnp.where(deg > 0.0, jax.lax.rsqrt(jnp.maximum(deg, 1e-12)), 0.0)
    dinv_col = dinv[:, None]                                     # (N_pad, 1) f32

    # --- glue: dinv-scaled mean-pool matrix ------------------------------------
    batch_pad = jnp.concatenate(
        [batch.astype(jnp.int32), jnp.full((N_pad - N,), -1, jnp.int32)])
    onehot = (batch_pad[None, :] == jnp.arange(G_pad, dtype=jnp.int32)[:, None]
              ).astype(jnp.float32)
    counts = jnp.maximum(jnp.sum(onehot, axis=1, keepdims=True), 1.0)
    pool_s = ((onehot / counts) * dinv[None, :]).astype(jnp.bfloat16)

    # --- lane-pad parameters / features; pre-scale features by dinv ------------
    xs = (dinv_col * _pad2(x, N_pad, FP)).astype(jnp.bfloat16)
    w1p = _pad2(w1, FP, FP).astype(jnp.bfloat16)
    w2p = _pad2(w2, FP, FP).astype(jnp.bfloat16)
    w3p = _pad2(w3, FP, FP).astype(jnp.bfloat16)
    b1p, b2p = _pad2(b1, 1, FP), _pad2(b2, 1, FP)

    h1s = _gcn_layer1(a_raw, xs, dinv_col, w1p, b1p, TM, TK, vmem_limit)
    partials = _gcn_layer2_pool(a_raw, h1s, pool_s, dinv_col, w2p, b2p, w3p,
                                TM, TK, vmem_limit)
    # Tiny (n_strips, G_pad, FP) partial sum + bias outside Pallas.
    out = jnp.sum(partials, axis=0)[:num_graphs, :out_dim] + b3
    return out


def _reference_forward(x, edge_index, batch, params, num_graphs):
    """Pure-JAX f32 reference of the same forward pass (correctness check)."""
    N = x.shape[0]
    src = jnp.concatenate([edge_index[0], jnp.arange(N, dtype=edge_index.dtype)])
    dst = jnp.concatenate([edge_index[1], jnp.arange(N, dtype=edge_index.dtype)])
    adj = jnp.zeros((N, N), jnp.float32).at[dst, src].add(1.0)
    deg = jnp.sum(adj, axis=1)
    dinv = jnp.where(deg > 0, 1.0 / jnp.sqrt(deg), 0.0)
    a_hat = dinv[:, None] * adj * dinv[None, :]

    w1, b1, w2, b2, w3, b3 = params
    h = jnp.maximum(a_hat @ (x @ w1) + b1, 0.0)
    h = jnp.maximum(a_hat @ (h @ w2) + b2, 0.0)
    h = a_hat @ (h @ w3) + b3
    onehot = (batch[None, :] == jnp.arange(num_graphs)[:, None]).astype(jnp.float32)
    counts = jnp.maximum(jnp.sum(onehot, axis=1, keepdims=True), 1.0)
    return (onehot / counts) @ h


if __name__ == "__main__":
    # small shapes consistent with the module: per-node features -> GCN -> per-graph output
    num_features, hidden_dim1, hidden_dim2, output_dim = 4, 32, 32, 8
    nodes_per_graph, num_graphs = 8, 2
    N = nodes_per_graph * num_graphs

    # deterministic pose-graph topology: a chain inside each graph (undirected edges)
    srcs, dsts = [], []
    for g in range(num_graphs):
        base = g * nodes_per_graph
        for i in range(nodes_per_graph - 1):
            srcs += [base + i, base + i + 1]
            dsts += [base + i + 1, base + i]
    # fused pooled pass relies on an undirected (symmetric) edge list
    edge_set = set(zip(srcs, dsts))
    assert all((d, s) in edge_set for (s, d) in edge_set), "edge list must be undirected"

    edge_index = jnp.array([srcs, dsts], dtype=jnp.int32)
    batch = jnp.repeat(jnp.arange(num_graphs, dtype=jnp.int32), nodes_per_graph)

    # deterministic parameter init (glorot-uniform weights, zero biases)
    key = jax.random.PRNGKey(0)
    kx, k1, k2, k3 = jax.random.split(key, 4)

    def glorot(k, fan_in, fan_out):
        s = jnp.sqrt(6.0 / (fan_in + fan_out))
        return jax.random.uniform(k, (fan_in, fan_out), jnp.float32, -s, s)

    x = jax.random.normal(kx, (N, num_features), jnp.float32)
    params = (
        glorot(k1, num_features, hidden_dim1), jnp.zeros((1, hidden_dim1), jnp.float32),
        glorot(k2, hidden_dim1, hidden_dim2),  jnp.zeros((1, hidden_dim2), jnp.float32),
        glorot(k3, hidden_dim2, output_dim),   jnp.zeros((1, output_dim), jnp.float32),
    )

    out = pose_gcn_forward(x, edge_index, batch, params, num_graphs=num_graphs)
    jax.block_until_ready(out)

    ref = _reference_forward(x, edge_index, batch, params, num_graphs)
    assert out.shape == (num_graphs, output_dim)
    # bf16 H / W / pool operands (f32 accumulation, exact int8 adjacency)
    assert jnp.allclose(out, ref, atol=5e-2, rtol=5e-2), "Pallas kernel mismatch vs reference"

    print("KERNEL_OK")
</pallas_src>

<mosaic_0001>
module attributes {stable_mosaic.version = 11 : i64} {
  func.func @gcn_layer1_kernel(%arg0: i32, %arg1: i32, %arg2: memref<256x256xi8, #tpu.memory_space<vmem>>, %arg3: memref<256x128xbf16, #tpu.memory_space<vmem>>, %arg4: memref<256x1xf32, #tpu.memory_space<vmem>>, %arg5: memref<128x128xbf16, #tpu.memory_space<vmem>>, %arg6: memref<1x128xf32, #tpu.memory_space<vmem>>, %arg7: memref<256x128xbf16, #tpu.memory_space<vmem>>, %arg8: memref<256x128xf32, #tpu.memory_space<vmem>>) attributes {dimension_semantics = [#tpu.dimension_semantics<parallel>, #tpu.dimension_semantics<arbitrary>], iteration_bounds = array<i64: 1, 1>, scalar_prefetch = 0 : i64, scratch_operands = 1 : i64, tpu.core_type = #tpu.core_type<tc>, window_params = [{transform_indices = @transform_0, window_bounds = array<i64: 256, 256>}, {transform_indices = @transform_1, window_bounds = array<i64: 256, 128>}, {transform_indices = @transform_2, window_bounds = array<i64: 256, 1>}, {pipeline_mode = #tpu.pipeline_mode<synchronous>, transform_indices = @transform_3, window_bounds = array<i64: 128, 128>}, {pipeline_mode = #tpu.pipeline_mode<synchronous>, transform_indices = @transform_4, window_bounds = array<i64: 1, 128>}, {transform_indices = @transform_5, window_bounds = array<i64: 256, 128>}]} {
    %c0_i32 = arith.constant 0 : i32
    %0 = arith.cmpi eq, %arg1, %c0_i32 : i32
    %1 = arith.extui %0 : i1 to i32
    %c0_i32_0 = arith.constant 0 : i32
    %2 = arith.cmpi ne, %1, %c0_i32_0 : i32
    scf.if %2 {
      %cst_10 = arith.constant 0.000000e+00 : f32
      %13 = vector.broadcast %cst_10 : f32 to vector<256x128xf32>
      %c0_11 = arith.constant 0 : index
      %c0_12 = arith.constant 0 : index
      %14 = vector.load %arg8[%c0_11, %c0_12] : memref<256x128xf32, #tpu.memory_space<vmem>>, vector<256x128xf32>
      tpu.vector_store %arg8[%c0_11, %c0_12], %13 {strides = array<i32>} : memref<256x128xf32, #tpu.memory_space<vmem>>, vector<256x128xf32>,
    } else {
    }
    %c0 = arith.constant 0 : index
    %c0_1 = arith.constant 0 : index
    %3 = vector.load %arg2[%c0, %c0_1] : memref<256x256xi8, #tpu.memory_space<vmem>>, vector<256x256xi8>
    %4 = arith.sitofp %3 : vector<256x256xi8> to vector<256x256xbf16>
    %c0_2 = arith.constant 0 : index
    %c0_3 = arith.constant 0 : index
    %5 = vector.load %arg8[%c0_2, %c0_3] : memref<256x128xf32, #tpu.memory_space<vmem>>, vector<256x128xf32>
    %c0_4 = arith.constant 0 : index
    %c0_5 = arith.constant 0 : index
    %6 = vector.load %arg3[%c0_4, %c0_5] : memref<256x128xbf16, #tpu.memory_space<vmem>>, vector<256x128xbf16>
    %cst = arith.constant dense<0.000000e+00> : vector<256x128xf32>
    %7 = tpu.matmul %4, %6, %cst {dimension_numbers = #tpu.dot_dimension_numbers<[1], [0], [0], [1], [0, 0, 1, 1], [], []>} : vector<256x256xbf16>, vector<256x128xbf16>, vector<256x128xf32> -> vector<256x128xf32>
    %8 = arith.addf %5, %7 : vector<256x128xf32>
    %c0_6 = arith.constant 0 : index
    %c0_7 = arith.constant 0 : index
    %9 = vector.load %arg8[%c0_6, %c0_7] : memref<256x128xf32, #tpu.memory_space<vmem>>, vector<256x128xf32>
    tpu.vector_store %arg8[%c0_6, %c0_7], %8 {strides = array<i32>} : memref<256x128xf32, #tpu.memory_space<vmem>>, vector<256x128xf32>,
    %c0_i32_8 = arith.constant 0 : i32
    %10 = arith.cmpi eq, %arg1, %c0_i32_8 : i32
    %11 = arith.extui %10 : i1 to i32
    %c0_i32_9 = arith.constant 0 : i32
    %12 = arith.cmpi ne, %11, %c0_i32_9 : i32
    scf.if %12 {
      %c0_10 = arith.constant 0 : index
      %c0_11 = arith.constant 0 : index
      %13 = vector.load %arg4[%c0_10, %c0_11] : memref<256x1xf32, #tpu.memory_space<vmem>>, vector<256x1xf32>
      %c0_12 = arith.constant 0 : index
      %c0_13 = arith.constant 0 : index
      %14 = vector.load %arg8[%c0_12, %c0_13] : memref<256x128xf32, #tpu.memory_space<vmem>>, vector<256x128xf32>
      %15 = arith.truncf %14 : vector<256x128xf32> to vector<256x128xbf16>
      %c0_14 = arith.constant 0 : index
      %c0_15 = arith.constant 0 : index
      %16 = vector.load %arg5[%c0_14, %c0_15] : memref<128x128xbf16, #tpu.memory_space<vmem>>, vector<128x128xbf16>
      %cst_16 = arith.constant dense<0.000000e+00> : vector<256x128xf32>
      %17 = tpu.matmul %15, %16, %cst_16 {dimension_numbers = #tpu.dot_dimension_numbers<[1], [0], [0], [1], [0, 0, 1, 1], [], []>} : vector<256x128xbf16>, vector<128x128xbf16>, vector<256x128xf32> -> vector<256x128xf32>
      %18 = vector.broadcast %13 : vector<256x1xf32> to vector<256x128xf32>
      %19 = arith.mulf %18, %17 : vector<256x128xf32>
      %c0_17 = arith.constant 0 : index
      %c0_18 = arith.constant 0 : index
      %20 = vector.load %arg6[%c0_17, %c0_18] : memref<1x128xf32, #tpu.memory_space<vmem>>, vector<1x128xf32>
      %21 = vector.broadcast %20 : vector<1x128xf32> to vector<256x128xf32>
      %22 = arith.addf %19, %21 : vector<256x128xf32>
      %cst_19 = arith.constant 0.000000e+00 : f32
      %23 = vector.broadcast %cst_19 : f32 to vector<256x128xf32>
      %24 = arith.maximumf %22, %23 : vector<256x128xf32>
      %25 = vector.broadcast %13 : vector<256x1xf32> to vector<256x128xf32>
      %26 = arith.mulf %25, %24 : vector<256x128xf32>
      %27 = arith.truncf %26 : vector<256x128xf32> to vector<256x128xbf16>
      %c0_20 = arith.constant 0 : index
      %c0_21 = arith.constant 0 : index
      %28 = vector.load %arg7[%c0_20, %c0_21] : memref<256x128xbf16, #tpu.memory_space<vmem>>, vector<256x128xbf16>
      tpu.vector_store %arg7[%c0_20, %c0_21], %27 {strides = array<i32>} : memref<256x128xbf16, #tpu.memory_space<vmem>>, vector<256x128xbf16>,
    } else {
    }
    return
  }
  func.func @transform_0(%arg0: i32, %arg1: i32) -> (i32, i32) {
    %c0_i32 = arith.constant 0 : i32
    return %arg0, %arg1 : i32, i32
  }
  func.func @transform_1(%arg0: i32, %arg1: i32) -> (i32, i32) {
    %c0_i32 = arith.constant 0 : i32
    %c0_i32_0 = arith.constant 0 : i32
    return %arg1, %c0_i32 : i32, i32
  }
  func.func @transform_2(%arg0: i32, %arg1: i32) -> (i32, i32) {
    %c0_i32 = arith.constant 0 : i32
    %c0_i32_0 = arith.constant 0 : i32
    return %arg0, %c0_i32 : i32, i32
  }
  func.func @transform_3(%arg0: i32, %arg1: i32) -> (i32, i32) {
    %c0_i32 = arith.constant 0 : i32
    %c0_i32_0 = arith.constant 0 : i32
    %c0_i32_1 = arith.constant 0 : i32
    return %c0_i32, %c0_i32_0 : i32, i32
  }
  func.func @transform_4(%arg0: i32, %arg1: i32) -> (i32, i32) {
    %c0_i32 = arith.constant 0 : i32
    %c0_i32_0 = arith.constant 0 : i32
    %c0_i32_1 = arith.constant 0 : i32
    return %c0_i32, %c0_i32_0 : i32, i32
  }
  func.func @transform_5(%arg0: i32, %arg1: i32) -> (i32, i32) {
    %c0_i32 = arith.constant 0 : i32
    %c0_i32_0 = arith.constant 0 : i32
    return %arg0, %c0_i32 : i32, i32
  }
}

module attributes {stable_mosaic.version = 11 : i64} {
  func.func @gcn_layer2_pool_kernel(%arg0: i32, %arg1: i32, %arg2: memref<256x256xi8, #tpu.memory_space<vmem>>, %arg3: memref<256x128xbf16, #tpu.memory_space<vmem>>, %arg4: memref<16x256xbf16, #tpu.memory_space<vmem>>, %arg5: memref<256x1xf32, #tpu.memory_space<vmem>>, %arg6: memref<128x128xbf16, #tpu.memory_space<vmem>>, %arg7: memref<1x128xf32, #tpu.memory_space<vmem>>, %arg8: memref<128x128xbf16, #tpu.memory_space<vmem>>, %arg9: memref<1x16x128xf32, #tpu.memory_space<vmem>>, %arg10: memref<256x128xf32, #tpu.memory_space<vmem>>, %arg11: memref<16x256xf32, #tpu.memory_space<vmem>>) attributes {dimension_semantics = [#tpu.dimension_semantics<parallel>, #tpu.dimension_semantics<arbitrary>], iteration_bounds = array<i64: 1, 1>, scalar_prefetch = 0 : i64, scratch_operands = 2 : i64, tpu.core_type = #tpu.core_type<tc>, window_params = [{transform_indices = @transform_0, window_bounds = array<i64: 256, 256>}, {transform_indices = @transform_1, window_bounds = array<i64: 256, 128>}, {transform_indices = @transform_2, window_bounds = array<i64: 16, 256>}, {transform_indices = @transform_3, window_bounds = array<i64: 256, 1>}, {pipeline_mode = #tpu.pipeline_mode<synchronous>, transform_indices = @transform_4, window_bounds = array<i64: 128, 128>}, {pipeline_mode = #tpu.pipeline_mode<synchronous>, transform_indices = @transform_5, window_bounds = array<i64: 1, 128>}, {pipeline_mode = #tpu.pipeline_mode<synchronous>, transform_indices = @transform_6, window_bounds = array<i64: 128, 128>}, {transform_indices = @transform_7, window_bounds = array<i64: 1, 16, 128>}]} {
    %c0_i32 = arith.constant 0 : i32
    %0 = arith.cmpi eq, %arg1, %c0_i32 : i32
    %1 = arith.extui %0 : i1 to i32
    %c0_i32_0 = arith.constant 0 : i32
    %2 = arith.cmpi ne, %1, %c0_i32_0 : i32
    scf.if %2 {
      %cst_17 = arith.constant 0.000000e+00 : f32
      %18 = vector.broadcast %cst_17 : f32 to vector<256x128xf32>
      %c0_18 = arith.constant 0 : index
      %c0_19 = arith.constant 0 : index
      %19 = vector.load %arg10[%c0_18, %c0_19] : memref<256x128xf32, #tpu.memory_space<vmem>>, vector<256x128xf32>
      tpu.vector_store %arg10[%c0_18, %c0_19], %18 {strides = array<i32>} : memref<256x128xf32, #tpu.memory_space<vmem>>, vector<256x128xf32>,
      %cst_20 = arith.constant 0.000000e+00 : f32
      %20 = vector.broadcast %cst_20 : f32 to vector<16x256xf32>
      %c0_21 = arith.constant 0 : index
      %c0_22 = arith.constant 0 : index
      %21 = vector.load %arg11[%c0_21, %c0_22] : memref<16x256xf32, #tpu.memory_space<vmem>>, vector<16x256xf32>
      tpu.vector_store %arg11[%c0_21, %c0_22], %20 {strides = array<i32>} : memref<16x256xf32, #tpu.memory_space<vmem>>, vector<16x256xf32>,
    } else {
    }
    %c0 = arith.constant 0 : index
    %c0_1 = arith.constant 0 : index
    %3 = vector.load %arg2[%c0, %c0_1] : memref<256x256xi8, #tpu.memory_space<vmem>>, vector<256x256xi8>
    %4 = arith.sitofp %3 : vector<256x256xi8> to vector<256x256xbf16>
    %c0_2 = arith.constant 0 : index
    %c0_3 = arith.constant 0 : index
    %5 = vector.load %arg10[%c0_2, %c0_3] : memref<256x128xf32, #tpu.memory_space<vmem>>, vector<256x128xf32>
    %c0_4 = arith.constant 0 : index
    %c0_5 = arith.constant 0 : index
    %6 = vector.load %arg3[%c0_4, %c0_5] : memref<256x128xbf16, #tpu.memory_space<vmem>>, vector<256x128xbf16>
    %cst = arith.constant dense<0.000000e+00> : vector<256x128xf32>
    %7 = tpu.matmul %4, %6, %cst {dimension_numbers = #tpu.dot_dimension_numbers<[1], [0], [0], [1], [0, 0, 1, 1], [], []>} : vector<256x256xbf16>, vector<256x128xbf16>, vector<256x128xf32> -> vector<256x128xf32>
    %8 = arith.addf %5, %7 : vector<256x128xf32>
    %c0_6 = arith.constant 0 : index
    %c0_7 = arith.constant 0 : index
    %9 = vector.load %arg10[%c0_6, %c0_7] : memref<256x128xf32, #tpu.memory_space<vmem>>, vector<256x128xf32>
    tpu.vector_store %arg10[%c0_6, %c0_7], %8 {strides = array<i32>} : memref<256x128xf32, #tpu.memory_space<vmem>>, vector<256x128xf32>,
    %c0_8 = arith.constant 0 : index
    %c0_9 = arith.constant 0 : index
    %10 = vector.load %arg11[%c0_8, %c0_9] : memref<16x256xf32, #tpu.memory_space<vmem>>, vector<16x256xf32>
    %c0_10 = arith.constant 0 : index
    %c0_11 = arith.constant 0 : index
    %11 = vector.load %arg4[%c0_10, %c0_11] : memref<16x256xbf16, #tpu.memory_space<vmem>>, vector<16x256xbf16>
    %cst_12 = arith.constant dense<0.000000e+00> : vector<16x256xf32>
    %12 = tpu.matmul %11, %4, %cst_12 {dimension_numbers = #tpu.dot_dimension_numbers<[1], [1], [0], [0], [0, 0, 1, 0], [], []>} : vector<16x256xbf16>, vector<256x256xbf16>, vector<16x256xf32> -> vector<16x256xf32>
    %13 = arith.addf %10, %12 : vector<16x256xf32>
    %c0_13 = arith.constant 0 : index
    %c0_14 = arith.constant 0 : index
    %14 = vector.load %arg11[%c0_13, %c0_14] : memref<16x256xf32, #tpu.memory_space<vmem>>, vector<16x256xf32>
    tpu.vector_store %arg11[%c0_13, %c0_14], %13 {strides = array<i32>} : memref<16x256xf32, #tpu.memory_space<vmem>>, vector<16x256xf32>,
    %c0_i32_15 = arith.constant 0 : i32
    %15 = arith.cmpi eq, %arg1, %c0_i32_15 : i32
    %16 = arith.extui %15 : i1 to i32
    %c0_i32_16 = arith.constant 0 : i32
    %17 = arith.cmpi ne, %16, %c0_i32_16 : i32
    scf.if %17 {
      %c0_17 = arith.constant 0 : index
      %c0_18 = arith.constant 0 : index
      %18 = vector.load %arg5[%c0_17, %c0_18] : memref<256x1xf32, #tpu.memory_space<vmem>>, vector<256x1xf32>
      %c0_19 = arith.constant 0 : index
      %c0_20 = arith.constant 0 : index
      %19 = vector.load %arg10[%c0_19, %c0_20] : memref<256x128xf32, #tpu.memory_space<vmem>>, vector<256x128xf32>
      %20 = arith.truncf %19 : vector<256x128xf32> to vector<256x128xbf16>
      %c0_21 = arith.constant 0 : index
      %c0_22 = arith.constant 0 : index
      %21 = vector.load %arg6[%c0_21, %c0_22] : memref<128x128xbf16, #tpu.memory_space<vmem>>, vector<128x128xbf16>
      %cst_23 = arith.constant dense<0.000000e+00> : vector<256x128xf32>
      %22 = tpu.matmul %20, %21, %cst_23 {dimension_numbers = #tpu.dot_dimension_numbers<[1], [0], [0], [1], [0, 0, 1, 1], [], []>} : vector<256x128xbf16>, vector<128x128xbf16>, vector<256x128xf32> -> vector<256x128xf32>
      %23 = vector.broadcast %18 : vector<256x1xf32> to vector<256x128xf32>
      %24 = arith.mulf %23, %22 : vector<256x128xf32>
      %c0_24 = arith.constant 0 : index
      %c0_25 = arith.constant 0 : index
      %25 = vector.load %arg7[%c0_24, %c0_25] : memref<1x128xf32, #tpu.memory_space<vmem>>, vector<1x128xf32>
      %26 = vector.broadcast %25 : vector<1x128xf32> to vector<256x128xf32>
      %27 = arith.addf %24, %26 : vector<256x128xf32>
      %cst_26 = arith.constant 0.000000e+00 : f32
      %28 = vector.broadcast %cst_26 : f32 to vector<256x128xf32>
      %29 = arith.maximumf %27, %28 : vector<256x128xf32>
      %30 = vector.broadcast %18 : vector<256x1xf32> to vector<256x128xf32>
      %31 = arith.mulf %30, %29 : vector<256x128xf32>
      %32 = arith.truncf %31 : vector<256x128xf32> to vector<256x128xbf16>
      %c0_27 = arith.constant 0 : index
      %c0_28 = arith.constant 0 : index
      %33 = vector.load %arg8[%c0_27, %c0_28] : memref<128x128xbf16, #tpu.memory_space<vmem>>, vector<128x128xbf16>
      %cst_29 = arith.constant dense<0.000000e+00> : vector<256x128xf32>
      %34 = tpu.matmul %32, %33, %cst_29 {dimension_numbers = #tpu.dot_dimension_numbers<[1], [0], [0], [1], [0, 0, 1, 1], [], []>} : vector<256x128xbf16>, vector<128x128xbf16>, vector<256x128xf32> -> vector<256x128xf32>
      %c0_30 = arith.constant 0 : index
      %c0_31 = arith.constant 0 : index
      %35 = vector.load %arg11[%c0_30, %c0_31] : memref<16x256xf32, #tpu.memory_space<vmem>>, vector<16x256xf32>
      %36 = arith.truncf %35 : vector<16x256xf32> to vector<16x256xbf16>
      %37 = arith.truncf %34 : vector<256x128xf32> to vector<256x128xbf16>
      %cst_32 = arith.constant dense<0.000000e+00> : vector<16x128xf32>
      %38 = tpu.matmul %36, %37, %cst_32 {dimension_numbers = #tpu.dot_dimension_numbers<[1], [0], [0], [1], [0, 0, 1, 1], [], []>} : vector<16x256xbf16>, vector<256x128xbf16>, vector<16x128xf32> -> vector<16x128xf32>
      %c0_33 = arith.constant 0 : index
      %c0_34 = arith.constant 0 : index
      %c0_35 = arith.constant 0 : index
      %39 = vector.load %arg9[%c0_33, %c0_34, %c0_35] : memref<1x16x128xf32, #tpu.memory_space<vmem>>, vector<1x16x128xf32>
      %40 = vector.shape_cast %39 : vector<1x16x128xf32> to vector<16x128xf32>
      %41 = vector.shape_cast %38 : vector<16x128xf32> to vector<1x16x128xf32>
      tpu.vector_store %arg9[%c0_33, %c0_34, %c0_35], %41 {strides = array<i32>} : memref<1x16x128xf32, #tpu.memory_space<vmem>>, vector<1x16x128xf32>,
    } else {
    }
    return
  }
  func.func @transform_0(%arg0: i32, %arg1: i32) -> (i32, i32) {
    %c0_i32 = arith.constant 0 : i32
    return %arg0, %arg1 : i32, i32
  }
  func.func @transform_1(%arg0: i32, %arg1: i32) -> (i32, i32) {
    %c0_i32 = arith.constant 0 : i32
    %c0_i32_0 = arith.constant 0 : i32
    return %arg1, %c0_i32 : i32, i32
  }
  func.func @transform_2(%arg0: i32, %arg1: i32) -> (i32, i32) {
    %c0_i32 = arith.constant 0 : i32
    %c0_i32_0 = arith.constant 0 : i32
    return %c0_i32, %arg1 : i32, i32
  }
  func.func @transform_3(%arg0: i32, %arg1: i32) -> (i32, i32) {
    %c0_i32 = arith.constant 0 : i32
    %c0_i32_0 = arith.constant 0 : i32
    return %arg0, %c0_i32 : i32, i32
  }
  func.func @transform_4(%arg0: i32, %arg1: i32) -> (i32, i32) {
    %c0_i32 = arith.constant 0 : i32
    %c0_i32_0 = arith.constant 0 : i32
    %c0_i32_1 = arith.constant 0 : i32
    return %c0_i32, %c0_i32_0 : i32, i32
  }
  func.func @transform_5(%arg0: i32, %arg1: i32) -> (i32, i32) {
    %c0_i32 = arith.constant 0 : i32
    %c0_i32_0 = arith.constant 0 : i32
    %c0_i32_1 = arith.constant 0 : i32
    return %c0_i32, %c0_i32_0 : i32, i32
  }
  func.func @transform_6(%arg0: i32, %arg1: i32) -> (i32, i32) {
    %c0_i32 = arith.constant 0 : i32
    %c0_i32_0 = arith.constant 0 : i32
    %c0_i32_1 = arith.constant 0 : i32
    return %c0_i32, %c0_i32_0 : i32, i32
  }
  func.func @transform_7(%arg0: i32, %arg1: i32) -> (i32, i32, i32) {
    %c0_i32 = arith.constant 0 : i32
    %c0_i32_0 = arith.constant 0 : i32
    %c0_i32_1 = arith.constant 0 : i32
    return %arg0, %c0_i32, %c0_i32_0 : i32, i32, i32
  }
}

</mosaic_0001>

<llo_original>
// kernel: pose_gcn_forward.2
$region0: #{pose_gcn_forward.2}
  #allocation0 [shape = 'u32[]', space=smem, size = 0x4, offset = 0x4, fixed_abs, tag = 'smem constant byte address 0x4 - core index']
  #allocation1 [shape = 'u32[144,128]{1,0:T(1,128)}', space=vmem, size = 0x12000, scoped, tag = 'internal scratch']
  #allocation2 [shape = 'f32[256,128]{1,0:T(8,128)}', space=vmem, size = 0x20000, scoped, tag = 'scratch operand']
  %s0 = inlined_call_operand.vmem [shape: s8[256,256], index: 0, kind: input, shape index: {}]
  %s1 = inlined_call_operand.vmem [shape: bf16[256,128], index: 1, kind: input, shape index: {}]
  %s2 = inlined_call_operand.vmem [shape: f32[256,1], index: 2, kind: input, shape index: {}]
  %s3 = inlined_call_operand.vmem [shape: bf16[128,128], index: 3, kind: input, shape index: {}]
  %s4 = inlined_call_operand.vmem [shape: f32[1,128], index: 4, kind: input, shape index: {}]
  %s5 = inlined_call_operand.vmem [shape: bf16[256,128], index: 5, kind: output, shape index: {}]
  %s6 = sld [smem:[#allocation0]]
  $region38: #{pose_gcn_forward.2} parent=0
    _
  %s8 = ssub.s32 1, %s6
  %s9 = scalar_select 0, %s8, %s6
  // Predicated region
  $region2: #{pose_gcn_forward.2} parent=0 // pred_check
    _
  $region3: #{pose_gcn_forward.2} parent=0 // pred_check_branch
    %11 = sbr.rel (0) target = $region5
  $region4: #{pose_gcn_forward.2} parent=0 // pred_region
    _
  $region5: #{pose_gcn_forward.2} parent=0 // pred_fallthru
    _
  // Predicated region
  $region6: #{pose_gcn_forward.2} parent=0 // pred_check
    _
  $region7: #{pose_gcn_forward.2} parent=0 // pred_check_branch
    %13 = sbr.rel (0) target = $region9
  $region8: #{pose_gcn_forward.2} parent=0 // pred_region
    _
  $region9: #{pose_gcn_forward.2} parent=0 // pred_fallthru
    _
  // Predicated region
  $region10: #{pose_gcn_forward.2} parent=0 // pred_check
    _
  $region11: #{pose_gcn_forward.2} parent=0 // pred_check_branch
    %15 = sbr.rel (0) target = $region13
  $region12: #{pose_gcn_forward.2} parent=0 // pred_region
    _
  $region13: #{pose_gcn_forward.2} parent=0 // pred_fallthru
    _
  // Predicated region
  $region14: #{pose_gcn_forward.2} parent=0 // pred_check
    _
  $region15: #{pose_gcn_forward.2} parent=0 // pred_check_branch
    %17 = sbr.rel (0) target = $region17
  $region16: #{pose_gcn_forward.2} parent=0 // pred_region
    _
  $region17: #{pose_gcn_forward.2} parent=0 // pred_fallthru
    _
  // Predicated region
  $region18: #{pose_gcn_forward.2} parent=0 // pred_check
    _
  $region19: #{pose_gcn_forward.2} parent=0 // pred_check_branch
    %19 = sbr.rel (0) target = $region21
  $region20: #{pose_gcn_forward.2} parent=0 // pred_region
    _
  $region21: #{pose_gcn_forward.2} parent=0 // pred_fallthru
    _
  %p21 = scmp.eq.s32.totalorder 0, 0
  // Predicated region
  $region22: #{pose_gcn_forward.2} parent=0 // pred_check
    %p22 = pneg %p21
  $region23: #{pose_gcn_forward.2} parent=0 // pred_check_branch
    %24 = sbr.rel (%p22) target = $region25
  $region24: #{pose_gcn_forward.2} parent=0 // pred_region
    %25 = vst [vmem:[#allocation2] sm:$0xff] 0.0
    %26 = vst [vmem:[#allocation2 + $0x8] sm:$0xff] 0.0
    %27 = vst [vmem:[#allocation2 + $0x10] sm:$0xff] 0.0
    %28 = vst [vmem:[#allocation2 + $0x18] sm:$0xff] 0.0
    %29 = vst [vmem:[#allocation2 + $0x20] sm:$0xff] 0.0
    %30 = vst [vmem:[#allocation2 + $0x28] sm:$0xff] 0.0
    %31 = vst [vmem:[#allocation2 + $0x30] sm:$0xff] 0.0
    %32 = vst [vmem:[#allocation2 + $0x38] sm:$0xff] 0.0
    %33 = vst [vmem:[#allocation2 + $0x40] sm:$0xff] 0.0
    %34 = vst [vmem:[#allocation2 + $0x48] sm:$0xff] 0.0
    %35 = vst [vmem:[#allocation2 + $0x50] sm:$0xff] 0.0
    %36 = vst [vmem:[#allocation2 + $0x58] sm:$0xff] 0.0
    %37 = vst [vmem:[#allocation2 + $0x60] sm:$0xff] 0.0
    %38 = vst [vmem:[#allocation2 + $0x68] sm:$0xff] 0.0
    %39 = vst [vmem:[#allocation2 + $0x70] sm:$0xff] 0.0
    %40 = vst [vmem:[#allocation2 + $0x78] sm:$0xff] 0.0
    %41 = vst [vmem:[#allocation2 + $0x80] sm:$0xff] 0.0
    %42 = vst [vmem:[#allocation2 + $0x88] sm:$0xff] 0.0
    %43 = vst [vmem:[#allocation2 + $0x90] sm:$0xff] 0.0
    %44 = vst [vmem:[#allocation2 + $0x98] sm:$0xff] 0.0
    %45 = vst [vmem:[#allocation2 + $0xa0] sm:$0xff] 0.0
    %46 = vst [vmem:[#allocation2 + $0xa8] sm:$0xff] 0.0
    %47 = vst [vmem:[#allocation2 + $0xb0] sm:$0xff] 0.0
    %48 = vst [vmem:[#allocation2 + $0xb8] sm:$0xff] 0.0
    %49 = vst [vmem:[#allocation2 + $0xc0] sm:$0xff] 0.0
    %50 = vst [vmem:[#allocation2 + $0xc8] sm:$0xff] 0.0
    %51 = vst [vmem:[#allocation2 + $0xd0] sm:$0xff] 0.0
    %52 = vst [vmem:[#allocation2 + $0xd8] sm:$0xff] 0.0
    %53 = vst [vmem:[#allocation2 + $0xe0] sm:$0xff] 0.0
    %54 = vst [vmem:[#allocation2 + $0xe8] sm:$0xff] 0.0
    %55 = vst [vmem:[#allocation2 + $0xf0] sm:$0xff] 0.0
    %56 = vst [vmem:[#allocation2 + $0xf8] sm:$0xff] 0.0
  $region25: #{pose_gcn_forward.2} parent=0 // pred_fallthru
    _
  %v57 = vld [vmem:[%s0] sm:$0xf]
  %v58 = vld [vmem:[%s0 + $0x4] sm:$0xf]
  %v59 = vld [vmem:[%s0 + $0x8] sm:$0xf]
  %v60 = vld [vmem:[%s0 + $0xc] sm:$0xf]
  %v61 = vld [vmem:[%s0 + $0x10] sm:$0xf]
  %v62 = vld [vmem:[%s0 + $0x14] sm:$0xf]
  %v63 = vld [vmem:[%s0 + $0x18] sm:$0xf]
  %v64 = vld [vmem:[%s0 + $0x1c] sm:$0xf]
  %v65 = vld [vmem:[%s0 + $0x20] sm:$0xf]
  %v66 = vld [vmem:[%s0 + $0x24] sm:$0xf]
  %v67 = vld [vmem:[%s0 + $0x28] sm:$0xf]
  %v68 = vld [vmem:[%s0 + $0x2c] sm:$0xf]
  %v69 = vld [vmem:[%s0 + $0x30] sm:$0xf]
  %v70 = vld [vmem:[%s0 + $0x34] sm:$0xf]
  %v71 = vld [vmem:[%s0 + $0x38] sm:$0xf]
  %v72 = vld [vmem:[%s0 + $0x3c] sm:$0xf]
  %v73 = vld [vmem:[%s0 + $0x40] sm:$0xf]
  %v74 = vld [vmem:[%s0 + $0x44] sm:$0xf]
  %v75 = vld [vmem:[%s0 + $0x48] sm:$0xf]
  %v76 = vld [vmem:[%s0 + $0x4c] sm:$0xf]
  %v77 = vld [vmem:[%s0 + $0x50] sm:$0xf]
  %v78 = vld [vmem:[%s0 + $0x54] sm:$0xf]
  %v79 = vld [vmem:[%s0 + $0x58] sm:$0xf]
  %v80 = vld [vmem:[%s0 + $0x5c] sm:$0xf]
  %v81 = vld [vmem:[%s0 + $0x60] sm:$0xf]
  %v82 = vld [vmem:[%s0 + $0x64] sm:$0xf]
  %v83 = vld [vmem:[%s0 + $0x68] sm:$0xf]
  %v84 = vld [vmem:[%s0 + $0x6c] sm:$0xf]
  %v85 = vld [vmem:[%s0 + $0x70] sm:$0xf]
  %v86 = vld [vmem:[%s0 + $0x74] sm:$0xf]
  %v87 = vld [vmem:[%s0 + $0x78] sm:$0xf]
  %v88 = vld [vmem:[%s0 + $0x7c] sm:$0xf]
  %v89 = vunpack.c.l.s8.bf16 %v57
  %v90 = vunpack.c.l.s8.bf16 %v58
  %v91 = vunpack.c.l.s8.bf16 %v59
  %v92 = vunpack.c.l.s8.bf16 %v60
  %v93 = vunpack.c.l.s8.bf16 %v61
  %v94 = vunpack.c.l.s8.bf16 %v62
  %v95 = vunpack.c.l.s8.bf16 %v63
  %v96 = vunpack.c.l.s8.bf16 %v64
  %v97 = vunpack.c.l.s8.bf16 %v65
  %v98 = vunpack.c.l.s8.bf16 %v66
  %v99 = vunpack.c.l.s8.bf16 %v67
  %v100 = vunpack.c.l.s8.bf16 %v68
  %v101 = vunpack.c.l.s8.bf16 %v69
  %v102 = vunpack.c.l.s8.bf16 %v70
  %v103 = vunpack.c.l.s8.bf16 %v71
  %v104 = vunpack.c.l.s8.bf16 %v72
  %v105 = vunpack.c.l.s8.bf16 %v73
  %v106 = vunpack.c.l.s8.bf16 %v74
  %v107 = vunpack.c.l.s8.bf16 %v75
  %v108 = vunpack.c.l.s8.bf16 %v76
  %v109 = vunpack.c.l.s8.bf16 %v77
  %v110 = vunpack.c.l.s8.bf16 %v78
  %v111 = vunpack.c.l.s8.bf16 %v79
  %v112 = vunpack.c.l.s8.bf16 %v80
  %v113 = vunpack.c.l.s8.bf16 %v81
  %v114 = vunpack.c.l.s8.bf16 %v82
  %v115 = vunpack.c.l.s8.bf16 %v83
  %v116 = vunpack.c.l.s8.bf16 %v84
  %v117 = vunpack.c.l.s8.bf16 %v85
  %v118 = vunpack.c.l.s8.bf16 %v86
  %v119 = vunpack.c.l.s8.bf16 %v87
  %v120 = vunpack.c.l.s8.bf16 %v88
  %v121 = vld [vmem:[#allocation2] sm:$0xff]
  %v122 = vld [vmem:[#allocation2 + $0x8] sm:$0xff]
  %v123 = vld [vmem:[#allocation2 + $0x10] sm:$0xff]
  %v124 = vld [vmem:[#allocation2 + $0x18] sm:$0xff]
  %v125 = vld [vmem:[#allocation2 + $0x20] sm:$0xff]
  %v126 = vld [vmem:[#allocation2 + $0x28] sm:$0xff]
  %v127 = vld [vmem:[#allocation2 + $0x30] sm:$0xff]
  %v128 = vld [vmem:[#allocation2 + $0x38] sm:$0xff]
  %v129 = vld [vmem:[#allocation2 + $0x40] sm:$0xff]
  %v130 = vld [vmem:[#allocation2 + $0x48] sm:$0xff]
  %v131 = vld [vmem:[#allocation2 + $0x50] sm:$0xff]
  %v132 = vld [vmem:[#allocation2 + $0x58] sm:$0xff]
  %v133 = vld [vmem:[#allocation2 + $0x60] sm:$0xff]
  %v134 = vld [vmem:[#allocation2 + $0x68] sm:$0xff]
  %v135 = vld [vmem:[#allocation2 + $0x70] sm:$0xff]
  %v136 = vld [vmem:[#allocation2 + $0x78] sm:$0xff]
  %v137 = vld [vmem:[#allocation2 + $0x80] sm:$0xff]
  %v138 = vld [vmem:[#allocation2 + $0x88] sm:$0xff]
  %v139 = vld [vmem:[#allocation2 + $0x90] sm:$0xff]
  %v140 = vld [vmem:[#allocation2 + $0x98] sm:$0xff]
  %v141 = vld [vmem:[#allocation2 + $0xa0] sm:$0xff]
  %v142 = vld [vmem:[#allocation2 + $0xa8] sm:$0xff]
  %v143 = vld [vmem:[#allocation2 + $0xb0] sm:$0xff]
  %v144 = vld [vmem:[#allocation2 + $0xb8] sm:$0xff]
  %v145 = vld [vmem:[#allocation2 + $0xc0] sm:$0xff]
  %v146 = vld [vmem:[#allocation2 + $0xc8] sm:$0xff]
  %v147 = vld [vmem:[#allocation2 + $0xd0] sm:$0xff]
  %v148 = vld [vmem:[#allocation2 + $0xd8] sm:$0xff]
  %v149 = vld [vmem:[#allocation2 + $0xe0] sm:$0xff]
  %v150 = vld [vmem:[#allocation2 + $0xe8] sm:$0xff]
  %v151 = vld [vmem:[#allocation2 + $0xf0] sm:$0xff]
  %v152 = vld [vmem:[#allocation2 + $0xf8] sm:$0xff]
  %v153 = vld [vmem:[%s1] sm:$0xf]
  %v154 = vld [vmem:[%s1 + $0x4] sm:$0xf]
  %v155 = vld [vmem:[%s1 + $0x8] sm:$0xf]
  %v156 = vld [vmem:[%s1 + $0xc] sm:$0xf]
  %v157 = vld [vmem:[%s1 + $0x10] sm:$0xf]
  %v158 = vld [vmem:[%s1 + $0x14] sm:$0xf]
  %v159 = vld [vmem:[%s1 + $0x18] sm:$0xf]
  %v160 = vld [vmem:[%s1 + $0x1c] sm:$0xf]
  %v161 = vld [vmem:[%s1 + $0x20] sm:$0xf]
  %v162 = vld [vmem:[%s1 + $0x24] sm:$0xf]
  %v163 = vld [vmem:[%s1 + $0x28] sm:$0xf]
  %v164 = vld [vmem:[%s1 + $0x2c] sm:$0xf]
  %v165 = vld [vmem:[%s1 + $0x30] sm:$0xf]
  %v166 = vld [vmem:[%s1 + $0x34] sm:$0xf]
  %v167 = vld [vmem:[%s1 + $0x38] sm:$0xf]
  %v168 = vld [vmem:[%s1 + $0x3c] sm:$0xf]
  %v169 = vld [vmem:[%s1 + $0x40] sm:$0xf]
  %v170 = vld [vmem:[%s1 + $0x44] sm:$0xf]
  %v171 = vld [vmem:[%s1 + $0x48] sm:$0xf]
  %v172 = vld [vmem:[%s1 + $0x4c] sm:$0xf]
  %v173 = vld [vmem:[%s1 + $0x50] sm:$0xf]
  %v174 = vld [vmem:[%s1 + $0x54] sm:$0xf]
  %v175 = vld [vmem:[%s1 + $0x58] sm:$0xf]
  %v176 = vld [vmem:[%s1 + $0x5c] sm:$0xf]
  %v177 = vld [vmem:[%s1 + $0x60] sm:$0xf]
  %v178 = vld [vmem:[%s1 + $0x64] sm:$0xf]
  %v179 = vld [vmem:[%s1 + $0x68] sm:$0xf]
  %v180 = vld [vmem:[%s1 + $0x6c] sm:$0xf]
  %v181 = vld [vmem:[%s1 + $0x70] sm:$0xf]
  %v182 = vld [vmem:[%s1 + $0x74] sm:$0xf]
  %v183 = vld [vmem:[%s1 + $0x78] sm:$0xf]
  %v184 = vld [vmem:[%s1 + $0x7c] sm:$0xf]
  %v217 = vunpack.c.l.b16 %v89
  %v218 = vunpack.c.h.b16 %v89
  %v219 = vunpack.c.l.b16 %v90
  %v220 = vunpack.c.h.b16 %v90
  %v221 = vunpack.c.l.b16 %v91
  %v222 = vunpack.c.h.b16 %v91
  %v223 = vunpack.c.l.b16 %v92
  %v224 = vunpack.c.h.b16 %v92
  %v225 = vunpack.c.l.b16 %v93
  %v226 = vunpack.c.h.b16 %v93
  %v227 = vunpack.c.l.b16 %v94
  %v228 = vunpack.c.h.b16 %v94
  %v229 = vunpack.c.l.b16 %v95
  %v230 = vunpack.c.h.b16 %v95
  %v231 = vunpack.c.l.b16 %v96
  %v232 = vunpack.c.h.b16 %v96
  %v233 = vunpack.c.l.b16 %v97
  %v234 = vunpack.c.h.b16 %v97
  %v235 = vunpack.c.l.b16 %v98
  %v236 = vunpack.c.h.b16 %v98
  %v237 = vunpack.c.l.b16 %v99
  %v238 = vunpack.c.h.b16 %v99
  %v239 = vunpack.c.l.b16 %v100
  %v240 = vunpack.c.h.b16 %v100
  %v241 = vunpack.c.l.b16 %v101
  %v242 = vunpack.c.h.b16 %v101
  %v243 = vunpack.c.l.b16 %v102
  %v244 = vunpack.c.h.b16 %v102
  %v245 = vunpack.c.l.b16 %v103
  %v246 = vunpack.c.h.b16 %v103
  %v247 = vunpack.c.l.b16 %v104
  %v248 = vunpack.c.h.b16 %v104
  %v249 = vunpack.c.l.b16 %v105
  %v250 = vunpack.c.h.b16 %v105
  %v251 = vunpack.c.l.b16 %v106
  %v252 = vunpack.c.h.b16 %v106
  %v253 = vunpack.c.l.b16 %v107
  %v254 = vunpack.c.h.b16 %v107
  %v255 = vunpack.c.l.b16 %v108
  %v256 = vunpack.c.h.b16 %v108
  %v257 = vunpack.c.l.b16 %v109
  %v258 = vunpack.c.h.b16 %v109
  %v259 = vunpack.c.l.b16 %v110
  %v260 = vunpack.c.h.b16 %v110
  %v261 = vunpack.c.l.b16 %v111
  %v262 = vunpack.c.h.b16 %v111
  %v263 = vunpack.c.l.b16 %v112
  %v264 = vunpack.c.h.b16 %v112
  %v265 = vunpack.c.l.b16 %v113
  %v266 = vunpack.c.h.b16 %v113
  %v267 = vunpack.c.l.b16 %v114
  %v268 = vunpack.c.h.b16 %v114
  %v269 = vunpack.c.l.b16 %v115
  %v270 = vunpack.c.h.b16 %v115
  %v271 = vunpack.c.l.b16 %v116
  %v272 = vunpack.c.h.b16 %v116
  %v273 = vunpack.c.l.b16 %v117
  %v274 = vunpack.c.h.b16 %v117
  %v275 = vunpack.c.l.b16 %v118
  %v276 = vunpack.c.h.b16 %v118
  %v277 = vunpack.c.l.b16 %v119
  %v278 = vunpack.c.h.b16 %v119
  %v279 = vunpack.c.l.b16 %v120
  %v280 = vunpack.c.h.b16 %v120
  %v281 = vpack.c.b16 %v219, %v217
  %v282 = vpack.c.b16 %v220, %v218
  %v283 = vpack.c.b16 %v223, %v221
  %v284 = vpack.c.b16 %v224, %v222
  %v285 = vpack.c.b16 %v227, %v225
  %v286 = vpack.c.b16 %v228, %v226
  %v287 = vpack.c.b16 %v231, %v229
  %v288 = vpack.c.b16 %v232, %v230
  %v289 = vpack.c.b16 %v235, %v233
  %v290 = vpack.c.b16 %v236, %v234
  %v291 = vpack.c.b16 %v239, %v237
  %v292 = vpack.c.b16 %v240, %v238
  %v293 = vpack.c.b16 %v243, %v241
  %v294 = vpack.c.b16 %v244, %v242
  %v295 = vpack.c.b16 %v247, %v245
  %v296 = vpack.c.b16 %v248, %v246
  %v297 = vpack.c.b16 %v251, %v249
  %v298 = vpack.c.b16 %v252, %v250
  %v299 = vpack.c.b16 %v255, %v253
  %v300 = vpack.c.b16 %v256, %v254
  %v301 = vpack.c.b16 %v259, %v257
  %v302 = vpack.c.b16 %v260, %v258
  %v303 = vpack.c.b16 %v263, %v261
  %v304 = vpack.c.b16 %v264, %v262
  %v305 = vpack.c.b16 %v267, %v265
  %v306 = vpack.c.b16 %v268, %v266
  %v307 = vpack.c.b16 %v271, %v269
  %v308 = vpack.c.b16 %v272, %v270
  %v309 = vpack.c.b16 %v275, %v273
  %v310 = vpack.c.b16 %v276, %v274
  %v311 = vpack.c.b16 %v279, %v277
  %v312 = vpack.c.b16 %v280, %v278
  %v377 = vunpack.c.l.b16 %v153
  %v378 = vunpack.c.l.b16 %v154
  %v379 = vunpack.c.l.b16 %v155
  %v380 = vunpack.c.l.b16 %v156
  %v381 = vunpack.c.l.b16 %v157
  %v382 = vunpack.c.l.b16 %v158
  %v383 = vunpack.c.l.b16 %v159
  %v384 = vunpack.c.l.b16 %v160
  %v385 = vunpack.c.l.b16 %v161
  %v386 = vunpack.c.l.b16 %v162
  %v387 = vunpack.c.l.b16 %v163
  %v388 = vunpack.c.l.b16 %v164
  %v389 = vunpack.c.l.b16 %v165
  %v390 = vunpack.c.l.b16 %v166
  %v391 = vunpack.c.l.b16 %v167
  %v392 = vunpack.c.l.b16 %v168
  %v393 = vunpack.c.l.b16 %v169
  %v394 = vunpack.c.l.b16 %v170
  %v395 = vunpack.c.l.b16 %v171
  %v396 = vunpack.c.l.b16 %v172
  %v397 = vunpack.c.l.b16 %v173
  %v398 = vunpack.c.l.b16 %v174
  %v399 = vunpack.c.l.b16 %v175
  %v400 = vunpack.c.l.b16 %v176
  %v401 = vunpack.c.l.b16 %v177
  %v402 = vunpack.c.l.b16 %v178
  %v403 = vunpack.c.l.b16 %v179
  %v404 = vunpack.c.l.b16 %v180
  %v405 = vunpack.c.l.b16 %v181
  %v406 = vunpack.c.l.b16 %v182
  %v407 = vunpack.c.l.b16 %v183
  %v408 = vunpack.c.l.b16 %v184
  %v409 = vpack.c.b16 %v378, %v377
  %v410 = vpack.c.b16 %v380, %v379
  %v411 = vpack.c.b16 %v382, %v381
  %v412 = vpack.c.b16 %v384, %v383
  %v413 = vpack.c.b16 %v386, %v385
  %v414 = vpack.c.b16 %v388, %v387
  %v415 = vpack.c.b16 %v390, %v389
  %v416 = vpack.c.b16 %v392, %v391
  %v417 = vpack.c.b16 %v394, %v393
  %v418 = vpack.c.b16 %v396, %v395
  %v419 = vpack.c.b16 %v398, %v397
  %v420 = vpack.c.b16 %v400, %v399
  %v421 = vpack.c.b16 %v402, %v401
  %v422 = vpack.c.b16 %v404, %v403
  %v423 = vpack.c.b16 %v406, %v405
  %v424 = vpack.c.b16 %v408, %v407
  %441 = vmatprep.subr.bf16.mxu0 0
  %442 = vmatpush1.bf16.msra.mxu0 %v409
  %443 = vmatprep.subr.bf16.mxu0 0
  %444 = vmatpush1.bf16.msra.mxu0 %v410
  %445 = vmatprep.subr.bf16.mxu0 0
  %446 = vmatpush1.bf16.msra.mxu0 %v411
  %447 = vmatprep.subr.bf16.mxu0 0
  %448 = vmatpush1.bf16.msra.mxu0 %v412
  %449 = vmatprep.subr.bf16.mxu0 0
  %450 = vmatpush1.bf16.msra.mxu0 %v413
  %451 = vmatprep.subr.bf16.mxu0 0
  %452 = vmatpush1.bf16.msra.mxu0 %v414
  %453 = vmatprep.subr.bf16.mxu0 0
  %454 = vmatpush1.bf16.msra.mxu0 %v415
  %455 = vmatprep.subr.bf16.mxu0 0
  %456 = vmatpush1.bf16.msra.mxu0 %v416
  %457 = vmatprep.subr.bf16.mxu0 0
  %458 = vmatpush1.bf16.msra.mxu0 %v417
  %459 = vmatprep.subr.bf16.mxu0 0
  %460 = vmatpush1.bf16.msra.mxu0 %v418
  %461 = vmatprep.subr.bf16.mxu0 0
  %462 = vmatpush1.bf16.msra.mxu0 %v419
  %463 = vmatprep.subr.bf16.mxu0 0
  %464 = vmatpush1.bf16.msra.mxu0 %v420
  %465 = vmatprep.subr.bf16.mxu0 0
  %466 = vmatpush1.bf16.msra.mxu0 %v421
  %467 = vmatprep.subr.bf16.mxu0 0
  %468 = vmatpush1.bf16.msra.mxu0 %v422
  %469 = vmatprep.subr.bf16.mxu0 0
  %470 = vmatpush1.bf16.msra.mxu0 %v423
  %471 = vmatprep.subr.bf16.mxu0 0
  %472 = vmatpush1.bf16.msra.mxu0 %v424
  %473 = vmatprep.mubr.bf16.mxu0 %v282
  %474 = vmatmul.mubr.bf16.gmra.mrb[0].mxu0 %v281
  %v475 = vpop.f32.mrb[0].mxu0
  %v476 = vadd.f32 0.0, %v475
  %v477 = vpop.f32.mrb[0].mxu0
  %v478 = vpop.f32.mrb[0].mxu0
  %v479 = vadd.f32 0.0, %v478
  %v480 = vpop.f32.mrb[0].mxu0
  %481 = vmatprep.mubr.bf16.mxu0 %v284
  %482 = vmatmul.mubr.bf16.gmra.mrb[0].mxu0 %v283
  %v483 = vpop.f32.mrb[0].mxu0
  %v484 = vadd.f32 0.0, %v483
  %v485 = vpop.f32.mrb[0].mxu0
  %v486 = vpop.f32.mrb[0].mxu0
  %v487 = vadd.f32 0.0, %v486
  %v488 = vpop.f32.mrb[0].mxu0
  %489 = vmatprep.mubr.bf16.mxu0 %v286
  %490 = vmatmul.mubr.bf16.gmra.mrb[0].mxu0 %v285
  %v491 = vpop.f32.mrb[0].mxu0
  %v492 = vadd.f32 0.0, %v491
  %v493 = vpop.f32.mrb[0].mxu0
  %v494 = vpop.f32.mrb[0].mxu0
  %v495 = vadd.f32 0.0, %v494
  %v496 = vpop.f32.mrb[0].mxu0
  %497 = vmatprep.mubr.bf16.mxu0 %v288
  %498 = vmatmul.mubr.bf16.gmra.mrb[0].mxu0 %v287
  %v499 = vpop.f32.mrb[0].mxu0
  %v500 = vadd.f32 0.0, %v499
  %v501 = vpop.f32.mrb[0].mxu0
  %v502 = vpop.f32.mrb[0].mxu0
  %v503 = vadd.f32 0.0, %v502
  %v504 = vpop.f32.mrb[0].mxu0
  %505 = vmatprep.mubr.bf16.mxu0 %v290
  %506 = vmatmul.mubr.bf16.gmra.mrb[0].mxu0 %v289
  %v507 = vpop.f32.mrb[0].mxu0
  %v508 = vadd.f32 0.0, %v507
  %v509 = vpop.f32.mrb[0].mxu0
  %v510 = vpop.f32.mrb[0].mxu0
  %v511 = vadd.f32 0.0, %v510
  %v512 = vpop.f32.mrb[0].mxu0
  %513 = vmatprep.mubr.bf16.mxu0 %v292
  %514 = vmatmul.mubr.bf16.gmra.mrb[0].mxu0 %v291
  %v515 = vpop.f32.mrb[0].mxu0
  %v516 = vadd.f32 0.0, %v515
  %v517 = vpop.f32.mrb[0].mxu0
  %v518 = vpop.f32.mrb[0].mxu0
  %v519 = vadd.f32 0.0, %v518
  %v520 = vpop.f32.mrb[0].mxu0
  %521 = vmatprep.mubr.bf16.mxu0 %v294
  %522 = vmatmul.mubr.bf16.gmra.mrb[0].mxu0 %v293
  %v523 = vpop.f32.mrb[0].mxu0
  %v524 = vadd.f32 0.0, %v523
  %v525 = vpop.f32.mrb[0].mxu0
  %v526 = vpop.f32.mrb[0].mxu0
  %v527 = vadd.f32 0.0, %v526
  %v528 = vpop.f32.mrb[0].mxu0
  %529 = vmatprep.mubr.bf16.mxu0 %v296
  %530 = vmatmul.mubr.bf16.gmra.mrb[0].mxu0 %v295
  %v531 = vpop.f32.mrb[0].mxu0
  %v532 = vadd.f32 0.0, %v531
  %v533 = vpop.f32.mrb[0].mxu0
  %v534 = vpop.f32.mrb[0].mxu0
  %v535 = vadd.f32 0.0, %v534
  %v536 = vpop.f32.mrb[0].mxu0
  %537 = vmatprep.mubr.bf16.mxu0 %v298
  %538 = vmatmul.mubr.bf16.gmra.mrb[0].mxu0 %v297
  %v539 = vpop.f32.mrb[0].mxu0
  %v540 = vadd.f32 0.0, %v539
  %v541 = vpop.f32.mrb[0].mxu0
  %v542 = vpop.f32.mrb[0].mxu0
  %v543 = vadd.f32 0.0, %v542
  %v544 = vpop.f32.mrb[0].mxu0
  %545 = vmatprep.mubr.bf16.mxu0 %v300
  %546 = vmatmul.mubr.bf16.gmra.mrb[0].mxu0 %v299
  %v547 = vpop.f32.mrb[0].mxu0
  %v548 = vadd.f32 0.0, %v547
  %v549 = vpop.f32.mrb[0].mxu0
  %v550 = vpop.f32.mrb[0].mxu0
  %v551 = vadd.f32 0.0, %v550
  %v552 = vpop.f32.mrb[0].mxu0
  %553 = vmatprep.mubr.bf16.mxu0 %v302
  %554 = vmatmul.mubr.bf16.gmra.mrb[0].mxu0 %v301
  %v555 = vpop.f32.mrb[0].mxu0
  %v556 = vadd.f32 0.0, %v555
  %v557 = vpop.f32.mrb[0].mxu0
  %v558 = vpop.f32.mrb[0].mxu0
  %v559 = vadd.f32 0.0, %v558
  %v560 = vpop.f32.mrb[0].mxu0
  %561 = vmatprep.mubr.bf16.mxu0 %v304
  %562 = vmatmul.mubr.bf16.gmra.mrb[0].mxu0 %v303
  %v563 = vpop.f32.mrb[0].mxu0
  %v564 = vadd.f32 0.0, %v563
  %v565 = vpop.f32.mrb[0].mxu0
  %v566 = vpop.f32.mrb[0].mxu0
  %v567 = vadd.f32 0.0, %v566
  %v568 = vpop.f32.mrb[0].mxu0
  %569 = vmatprep.mubr.bf16.mxu0 %v306
  %570 = vmatmul.mubr.bf16.gmra.mrb[0].mxu0 %v305
  %v571 = vpop.f32.mrb[0].mxu0
  %v572 = vadd.f32 0.0, %v571
  %v573 = vpop.f32.mrb[0].mxu0
  %v574 = vpop.f32.mrb[0].mxu0
  %v575 = vadd.f32 0.0, %v574
  %v576 = vpop.f32.mrb[0].mxu0
  %577 = vmatprep.mubr.bf16.mxu0 %v308
  %578 = vmatmul.mubr.bf16.gmra.mrb[0].mxu0 %v307
  %v579 = vpop.f32.mrb[0].mxu0
  %v580 = vadd.f32 0.0, %v579
  %v581 = vpop.f32.mrb[0].mxu0
  %v582 = vpop.f32.mrb[0].mxu0
  %v583 = vadd.f32 0.0, %v582
  %v584 = vpop.f32.mrb[0].mxu0
  %585 = vmatprep.mubr.bf16.mxu0 %v310
  %586 = vmatmul.mubr.bf16.gmra.mrb[0].mxu0 %v309
  %v587 = vpop.f32.mrb[0].mxu0
  %v588 = vadd.f32 0.0, %v587
  %v589 = vpop.f32.mrb[0].mxu0
  %v590 = vpop.f32.mrb[0].mxu0
  %v591 = vadd.f32 0.0, %v590
  %v592 = vpop.f32.mrb[0].mxu0
  %593 = vmatprep.mubr.bf16.mxu0 %v312
  %594 = vmatmul.mubr.bf16.gmra.mrb[0].mxu0 %v311
  %v595 = vpop.f32.mrb[0].mxu0
  %v596 = vadd.f32 0.0, %v595
  %v597 = vpop.f32.mrb[0].mxu0
  %v598 = vpop.f32.mrb[0].mxu0
  %v599 = vadd.f32 0.0, %v598
  %v600 = vpop.f32.mrb[0].mxu0
  %601 = vdwg.mxu0
  %v602 = vadd.f32 %v121, %v476
  %v603 = vadd.f32 %v122, %v479
  %v604 = vadd.f32 %v123, %v484
  %v605 = vadd.f32 %v124, %v487
  %v606 = vadd.f32 %v125, %v492
  %v607 = vadd.f32 %v126, %v495
  %v608 = vadd.f32 %v127, %v500
  %v609 = vadd.f32 %v128, %v503
  %v610 = vadd.f32 %v129, %v508
  %v611 = vadd.f32 %v130, %v511
  %v612 = vadd.f32 %v131, %v516
  %v613 = vadd.f32 %v132, %v519
  %v614 = vadd.f32 %v133, %v524
  %v615 = vadd.f32 %v134, %v527
  %v616 = vadd.f32 %v135, %v532
  %v617 = vadd.f32 %v136, %v535
  %v618 = vadd.f32 %v137, %v540
  %v619 = vadd.f32 %v138, %v543
  %v620 = vadd.f32 %v139, %v548
  %v621 = vadd.f32 %v140, %v551
  %v622 = vadd.f32 %v141, %v556
  %v623 = vadd.f32 %v142, %v559
  %v624 = vadd.f32 %v143, %v564
  %v625 = vadd.f32 %v144, %v567
  %v626 = vadd.f32 %v145, %v572
  %v627 = vadd.f32 %v146, %v575
  %v628 = vadd.f32 %v147, %v580
  %v629 = vadd.f32 %v148, %v583
  %v630 = vadd.f32 %v149, %v588
  %v631 = vadd.f32 %v150, %v591
  %v632 = vadd.f32 %v151, %v596
  %v633 = vadd.f32 %v152, %v599
  %634 = vst [vmem:[#allocation2] sm:$0xff] %v602
  %635 = vst [vmem:[#allocation2 + $0x8] sm:$0xff] %v603
  %636 = vst [vmem:[#allocation2 + $0x10] sm:$0xff] %v604
  %637 = vst [vmem:[#allocation2 + $0x18] sm:$0xff] %v605
  %638 = vst [vmem:[#allocation2 + $0x20] sm:$0xff] %v606
  %639 = vst [vmem:[#allocation2 + $0x28] sm:$0xff] %v607
  %640 = vst [vmem:[#allocation2 + $0x30] sm:$0xff] %v608
  %641 = vst [vmem:[#allocation2 + $0x38] sm:$0xff] %v609
  %642 = vst [vmem:[#allocation2 + $0x40] sm:$0xff] %v610
  %643 = vst [vmem:[#allocation2 + $0x48] sm:$0xff] %v611
  %644 = vst [vmem:[#allocation2 + $0x50] sm:$0xff] %v612
  %645 = vst [vmem:[#allocation2 + $0x58] sm:$0xff] %v613
  %646 = vst [vmem:[#allocation2 + $0x60] sm:$0xff] %v614
  %647 = vst [vmem:[#allocation2 + $0x68] sm:$0xff] %v615
  %648 = vst [vmem:[#allocation2 + $0x70] sm:$0xff] %v616
  %649 = vst [vmem:[#allocation2 + $0x78] sm:$0xff] %v617
  %650 = vst [vmem:[#allocation2 + $0x80] sm:$0xff] %v618
  %651 = vst [vmem:[#allocation2 + $0x88] sm:$0xff] %v619
  %652 = vst [vmem:[#allocation2 + $0x90] sm:$0xff] %v620
  %653 = vst [vmem:[#allocation2 + $0x98] sm:$0xff] %v621
  %654 = vst [vmem:[#allocation2 + $0xa0] sm:$0xff] %v622
  %655 = vst [vmem:[#allocation2 + $0xa8] sm:$0xff] %v623
  %656 = vst [vmem:[#allocation2 + $0xb0] sm:$0xff] %v624
  %657 = vst [vmem:[#allocation2 + $0xb8] sm:$0xff] %v625
  %658 = vst [vmem:[#allocation2 + $0xc0] sm:$0xff] %v626
  %659 = vst [vmem:[#allocation2 + $0xc8] sm:$0xff] %v627
  %660 = vst [vmem:[#allocation2 + $0xd0] sm:$0xff] %v628
  %661 = vst [vmem:[#allocation2 + $0xd8] sm:$0xff] %v629
  %662 = vst [vmem:[#allocation2 + $0xe0] sm:$0xff] %v630
  %663 = vst [vmem:[#allocation2 + $0xe8] sm:$0xff] %v631
  %664 = vst [vmem:[#allocation2 + $0xf0] sm:$0xff] %v632
  %665 = vst [vmem:[#allocation2 + $0xf8] sm:$0xff] %v633
  // Predicated region
  $region26: #{pose_gcn_forward.2} parent=0 // pred_check
    %p666 = pneg %p21
  $region27: #{pose_gcn_forward.2} parent=0 // pred_check_branch
    %668 = sbr.rel (%p666) target = $region29
  $region28: #{pose_gcn_forward.2} parent=0 // pred_region
    %v669 = vld [vmem:[%s2] sm:$0xff]
    %v670 = vld [vmem:[%s2 + $0x8] sm:$0xff]
    %v671 = vld [vmem:[%s2 + $0x10] sm:$0xff]
    %v672 = vld [vmem:[%s2 + $0x18] sm:$0xff]
    %v673 = vld [vmem:[%s2 + $0x20] sm:$0xff]
    %v674 = vld [vmem:[%s2 + $0x28] sm:$0xff]
    %v675 = vld [vmem:[%s2 + $0x30] sm:$0xff]
    %v676 = vld [vmem:[%s2 + $0x38] sm:$0xff]
    %v677 = vld [vmem:[%s2 + $0x40] sm:$0xff]
    %v678 = vld [vmem:[%s2 + $0x48] sm:$0xff]
    %v679 = vld [vmem:[%s2 + $0x50] sm:$0xff]
    %v680 = vld [vmem:[%s2 + $0x58] sm:$0xff]
    %v681 = vld [vmem:[%s2 + $0x60] sm:$0xff]
    %v682 = vld [vmem:[%s2 + $0x68] sm:$0xff]
    %v683 = vld [vmem:[%s2 + $0x70] sm:$0xff]
    %v684 = vld [vmem:[%s2 + $0x78] sm:$0xff]
    %v685 = vld [vmem:[%s2 + $0x80] sm:$0xff]
    %v686 = vld [vmem:[%s2 + $0x88] sm:$0xff]
    %v687 = vld [vmem:[%s2 + $0x90] sm:$0xff]
    %v688 = vld [vmem:[%s2 + $0x98] sm:$0xff]
    %v689 = vld [vmem:[%s2 + $0xa0] sm:$0xff]
    %v690 = vld [vmem:[%s2 + $0xa8] sm:$0xff]
    %v691 = vld [vmem:[%s2 + $0xb0] sm:$0xff]
    %v692 = vld [vmem:[%s2 + $0xb8] sm:$0xff]
    %v693 = vld [vmem:[%s2 + $0xc0] sm:$0xff]
    %v694 = vld [vmem:[%s2 + $0xc8] sm:$0xff]
    %v695 = vld [vmem:[%s2 + $0xd0] sm:$0xff]
    %v696 = vld [vmem:[%s2 + $0xd8] sm:$0xff]
    %v697 = vld [vmem:[%s2 + $0xe0] sm:$0xff]
    %v698 = vld [vmem:[%s2 + $0xe8] sm:$0xff]
    %v699 = vld [vmem:[%s2 + $0xf0] sm:$0xff]
    %v700 = vld [vmem:[%s2 + $0xf8] sm:$0xff]
    %v701 = vld [vmem:[#allocation2] sm:$0xff]
    %v702 = vld [vmem:[#allocation2 + $0x8] sm:$0xff]
    %v703 = vld [vmem:[#allocation2 + $0x10] sm:$0xff]
    %v704 = vld [vmem:[#allocation2 + $0x18] sm:$0xff]
    %v705 = vld [vmem:[#allocation2 + $0x20] sm:$0xff]
    %v706 = vld [vmem:[#allocation2 + $0x28] sm:$0xff]
    %v707 = vld [vmem:[#allocation2 + $0x30] sm:$0xff]
    %v708 = vld [vmem:[#allocation2 + $0x38] sm:$0xff]
    %v709 = vld [vmem:[#allocation2 + $0x40] sm:$0xff]
    %v710 = vld [vmem:[#allocation2 + $0x48] sm:$0xff]
    %v711 = vld [vmem:[#allocation2 + $0x50] sm:$0xff]
    %v712 = vld [vmem:[#allocation2 + $0x58] sm:$0xff]
    %v713 = vld [vmem:[#allocation2 + $0x60] sm:$0xff]
    %v714 = vld [vmem:[#allocation2 + $0x68] sm:$0xff]
    %v715 = vld [vmem:[#allocation2 + $0x70] sm:$0xff]
    %v716 = vld [vmem:[#allocation2 + $0x78] sm:$0xff]
    %v717 = vld [vmem:[#allocation2 + $0x80] sm:$0xff]
    %v718 = vld [vmem:[#allocation2 + $0x88] sm:$0xff]
    %v719 = vld [vmem:[#allocation2 + $0x90] sm:$0xff]
    %v720 = vld [vmem:[#allocation2 + $0x98] sm:$0xff]
    %v721 = vld [vmem:[#allocation2 + $0xa0] sm:$0xff]
    %v722 = vld [vmem:[#allocation2 + $0xa8] sm:$0xff]
    %v723 = vld [vmem:[#allocation2 + $0xb0] sm:$0xff]
    %v724 = vld [vmem:[#allocation2 + $0xb8] sm:$0xff]
    %v725 = vld [vmem:[#allocation2 + $0xc0] sm:$0xff]
    %v726 = vld [vmem:[#allocation2 + $0xc8] sm:$0xff]
    %v727 = vld [vmem:[#allocation2 + $0xd0] sm:$0xff]
    %v728 = vld [vmem:[#allocation2 + $0xd8] sm:$0xff]
    %v729 = vld [vmem:[#allocation2 + $0xe0] sm:$0xff]
    %v730 = vld [vmem:[#allocation2 + $0xe8] sm:$0xff]
    %v731 = vld [vmem:[#allocation2 + $0xf0] sm:$0xff]
    %v732 = vld [vmem:[#allocation2 + $0xf8] sm:$0xff]
    %v733 = vpack.c.bf16 %v702, %v701
    %v734 = vpack.c.bf16 %v704, %v703
    %v735 = vpack.c.bf16 %v706, %v705
    %v736 = vpack.c.bf16 %v708, %v707
    %v737 = vpack.c.bf16 %v710, %v709
    %v738 = vpack.c.bf16 %v712, %v711
    %v739 = vpack.c.bf16 %v714, %v713
    %v740 = vpack.c.bf16 %v716, %v715
    %v741 = vpack.c.bf16 %v718, %v717
    %v742 = vpack.c.bf16 %v720, %v719
    %v743 = vpack.c.bf16 %v722, %v721
    %v744 = vpack.c.bf16 %v724, %v723
    %v745 = vpack.c.bf16 %v726, %v725
    %v746 = vpack.c.bf16 %v728, %v727
    %v747 = vpack.c.bf16 %v730, %v729
    %v748 = vpack.c.bf16 %v732, %v731
    %v749 = vld [vmem:[%s3] sm:$0xf]
    %v750 = vld [vmem:[%s3 + $0x4] sm:$0xf]
    %v751 = vld [vmem:[%s3 + $0x8] sm:$0xf]
    %v752 = vld [vmem:[%s3 + $0xc] sm:$0xf]
    %v753 = vld [vmem:[%s3 + $0x10] sm:$0xf]
    %v754 = vld [vmem:[%s3 + $0x14] sm:$0xf]
    %v755 = vld [vmem:[%s3 + $0x18] sm:$0xf]
    %v756 = vld [vmem:[%s3 + $0x1c] sm:$0xf]
    %v757 = vld [vmem:[%s3 + $0x20] sm:$0xf]
    %v758 = vld [vmem:[%s3 + $0x24] sm:$0xf]
    %v759 = vld [vmem:[%s3 + $0x28] sm:$0xf]
    %v760 = vld [vmem:[%s3 + $0x2c] sm:$0xf]
    %v761 = vld [vmem:[%s3 + $0x30] sm:$0xf]
    %v762 = vld [vmem:[%s3 + $0x34] sm:$0xf]
    %v763 = vld [vmem:[%s3 + $0x38] sm:$0xf]
    %v764 = vld [vmem:[%s3 + $0x3c] sm:$0xf]
    %v781 = vunpack.c.l.b16 %v749
    %v782 = vunpack.c.l.b16 %v750
    %v783 = vunpack.c.l.b16 %v751
    %v784 = vunpack.c.l.b16 %v752
    %v785 = vunpack.c.l.b16 %v753
    %v786 = vunpack.c.l.b16 %v754
    %v787 = vunpack.c.l.b16 %v755
    %v788 = vunpack.c.l.b16 %v756
    %v789 = vunpack.c.l.b16 %v757
    %v790 = vunpack.c.l.b16 %v758
    %v791 = vunpack.c.l.b16 %v759
    %v792 = vunpack.c.l.b16 %v760
    %v793 = vunpack.c.l.b16 %v761
    %v794 = vunpack.c.l.b16 %v762
    %v795 = vunpack.c.l.b16 %v763
    %v796 = vunpack.c.l.b16 %v764
    %v797 = vpack.c.b16 %v782, %v781
    %v798 = vpack.c.b16 %v784, %v783
    %v799 = vpack.c.b16 %v786, %v785
    %v800 = vpack.c.b16 %v788, %v787
    %v801 = vpack.c.b16 %v790, %v789
    %v802 = vpack.c.b16 %v792, %v791
    %v803 = vpack.c.b16 %v794, %v793
    %v804 = vpack.c.b16 %v796, %v795
    %813 = vmatprep.subr.bf16.mxu0 0
    %814 = vmatpush1.bf16.msra.mxu0 %v797
    %815 = vmatprep.subr.bf16.mxu0 0
    %816 = vmatpush1.bf16.msra.mxu0 %v798
    %817 = vmatprep.subr.bf16.mxu0 0
    %818 = vmatpush1.bf16.msra.mxu0 %v799
    %819 = vmatprep.subr.bf16.mxu0 0
    %820 = vmatpush1.bf16.msra.mxu0 %v800
    %821 = vmatprep.subr.bf16.mxu0 0
    %822 = vmatpush1.bf16.msra.mxu0 %v801
    %823 = vmatprep.subr.bf16.mxu0 0
    %824 = vmatpush1.bf16.msra.mxu0 %v802
    %825 = vmatprep.subr.bf16.mxu0 0
    %826 = vmatpush1.bf16.msra.mxu0 %v803
    %827 = vmatprep.subr.bf16.mxu0 0
    %828 = vmatpush1.bf16.msra.mxu0 %v804
    %829 = vmatprep.subr.bf16.mxu0 0
    %830 = vmatpush1.bf16.msra.mxu0 0
    %831 = vmatprep.subr.bf16.mxu0 0
    %832 = vmatpush1.bf16.msra.mxu0 0
    %833 = vmatprep.subr.bf16.mxu0 0
    %834 = vmatpush1.bf16.msra.mxu0 0
    %835 = vmatprep.subr.bf16.mxu0 0
    %836 = vmatpush1.bf16.msra.mxu0 0
    %837 = vmatprep.subr.bf16.mxu0 0
    %838 = vmatpush1.bf16.msra.mxu0 0
    %839 = vmatprep.subr.bf16.mxu0 0
    %840 = vmatpush1.bf16.msra.mxu0 0
    %841 = vmatprep.subr.bf16.mxu0 0
    %842 = vmatpush1.bf16.msra.mxu0 0
    %843 = vmatprep.subr.bf16.mxu0 0
    %844 = vmatpush1.bf16.msra.mxu0 0
    %845 = vmatprep.mubr.bf16.mxu0 0
    %846 = vmatmul.mubr.bf16.gmra.mrb[0].mxu0 %v733
    %v847 = vpop.f32.mrb[0].mxu0
    %v848 = vadd.f32 0.0, %v847
    %v849 = vpop.f32.mrb[0].mxu0
    %v850 = vpop.f32.mrb[0].mxu0
    %v851 = vadd.f32 0.0, %v850
    %v852 = vpop.f32.mrb[0].mxu0
    %853 = vmatprep.mubr.bf16.mxu0 0
    %854 = vmatmul.mubr.bf16.gmra.mrb[0].mxu0 %v734
    %v855 = vpop.f32.mrb[0].mxu0
    %v856 = vadd.f32 0.0, %v855
    %v857 = vpop.f32.mrb[0].mxu0
    %v858 = vpop.f32.mrb[0].mxu0
    %v859 = vadd.f32 0.0, %v858
    %v860 = vpop.f32.mrb[0].mxu0
    %861 = vmatprep.mubr.bf16.mxu0 0
    %862 = vmatmul.mubr.bf16.gmra.mrb[0].mxu0 %v735
    %v863 = vpop.f32.mrb[0].mxu0
    %v864 = vadd.f32 0.0, %v863
    %v865 = vpop.f32.mrb[0].mxu0
    %v866 = vpop.f32.mrb[0].mxu0
    %v867 = vadd.f32 0.0, %v866
    %v868 = vpop.f32.mrb[0].mxu0
    %869 = vmatprep.mubr.bf16.mxu0 0
    %870 = vmatmul.mubr.bf16.gmra.mrb[0].mxu0 %v736
    %v871 = vpop.f32.mrb[0].mxu0
    %v872 = vadd.f32 0.0, %v871
    %v873 = vpop.f32.mrb[0].mxu0
    %v874 = vpop.f32.mrb[0].mxu0
    %v875 = vadd.f32 0.0, %v874
    %v876 = vpop.f32.mrb[0].mxu0
    %877 = vmatprep.mubr.bf16.mxu0 0
    %878 = vmatmul.mubr.bf16.gmra.mrb[0].mxu0 %v737
    %v879 = vpop.f32.mrb[0].mxu0
    %v880 = vadd.f32 0.0, %v879
    %v881 = vpop.f32.mrb[0].mxu0
    %v882 = vpop.f32.mrb[0].mxu0
    %v883 = vadd.f32 0.0, %v882
    %v884 = vpop.f32.mrb[0].mxu0
    %885 = vmatprep.mubr.bf16.mxu0 0
    %886 = vmatmul.mubr.bf16.gmra.mrb[0].mxu0 %v738
    %v887 = vpop.f32.mrb[0].mxu0
    %v888 = vadd.f32 0.0, %v887
    %v889 = vpop.f32.mrb[0].mxu0
    %v890 = vpop.f32.mrb[0].mxu0
    %v891 = vadd.f32 0.0, %v890
    %v892 = vpop.f32.mrb[0].mxu0
    %893 = vmatprep.mubr.bf16.mxu0 0
    %894 = vmatmul.mubr.bf16.gmra.mrb[0].mxu0 %v739
    %v895 = vpop.f32.mrb[0].mxu0
    %v896 = vadd.f32 0.0, %v895
    %v897 = vpop.f32.mrb[0].mxu0
    %v898 = vpop.f32.mrb[0].mxu0
    %v899 = vadd.f32 0.0, %v898
    %v900 = vpop.f32.mrb[0].mxu0
    %901 = vmatprep.mubr.bf16.mxu0 0
    %902 = vmatmul.mubr.bf16.gmra.mrb[0].mxu0 %v740
    %v903 = vpop.f32.mrb[0].mxu0
    %v904 = vadd.f32 0.0, %v903
    %v905 = vpop.f32.mrb[0].mxu0
    %v906 = vpop.f32.mrb[0].mxu0
    %v907 = vadd.f32 0.0, %v906
    %v908 = vpop.f32.mrb[0].mxu0
    %909 = vmatprep.mubr.bf16.mxu0 0
    %910 = vmatmul.mubr.bf16.gmra.mrb[0].mxu0 %v741
    %v911 = vpop.f32.mrb[0].mxu0
    %v912 = vadd.f32 0.0, %v911
    %v913 = vpop.f32.mrb[0].mxu0
    %v914 = vpop.f32.mrb[0].mxu0
    %v915 = vadd.f32 0.0, %v914
    %v916 = vpop.f32.mrb[0].mxu0
    %917 = vmatprep.mubr.bf16.mxu0 0
    %918 = vmatmul.mubr.bf16.gmra.mrb[0].mxu0 %v742
    %v919 = vpop.f32.mrb[0].mxu0
    %v920 = vadd.f32 0.0, %v919
    %v921 = vpop.f32.mrb[0].mxu0
    %v922 = vpop.f32.mrb[0].mxu0
    %v923 = vadd.f32 0.0, %v922
    %v924 = vpop.f32.mrb[0].mxu0
    %925 = vmatprep.mubr.bf16.mxu0 0
    %926 = vmatmul.mubr.bf16.gmra.mrb[0].mxu0 %v743
    %v927 = vpop.f32.mrb[0].mxu0
    %v928 = vadd.f32 0.0, %v927
    %v929 = vpop.f32.mrb[0].mxu0
    %v930 = vpop.f32.mrb[0].mxu0
    %v931 = vadd.f32 0.0, %v930
    %v932 = vpop.f32.mrb[0].mxu0
    %933 = vmatprep.mubr.bf16.mxu0 0
    %934 = vmatmul.mubr.bf16.gmra.mrb[0].mxu0 %v744
    %v935 = vpop.f32.mrb[0].mxu0
    %v936 = vadd.f32 0.0, %v935
    %v937 = vpop.f32.mrb[0].mxu0
    %v938 = vpop.f32.mrb[0].mxu0
    %v939 = vadd.f32 0.0, %v938
    %v940 = vpop.f32.mrb[0].mxu0
    %941 = vmatprep.mubr.bf16.mxu0 0
    %942 = vmatmul.mubr.bf16.gmra.mrb[0].mxu0 %v745
    %v943 = vpop.f32.mrb[0].mxu0
    %v944 = vadd.f32 0.0, %v943
    %v945 = vpop.f32.mrb[0].mxu0
    %v946 = vpop.f32.mrb[0].mxu0
    %v947 = vadd.f32 0.0, %v946
    %v948 = vpop.f32.mrb[0].mxu0
    %949 = vmatprep.mubr.bf16.mxu0 0
    %950 = vmatmul.mubr.bf16.gmra.mrb[0].mxu0 %v746
    %v951 = vpop.f32.mrb[0].mxu0
    %v952 = vadd.f32 0.0, %v951
    %v953 = vpop.f32.mrb[0].mxu0
    %v954 = vpop.f32.mrb[0].mxu0
    %v955 = vadd.f32 0.0, %v954
    %v956 = vpop.f32.mrb[0].mxu0
    %957 = vmatprep.mubr.bf16.mxu0 0
    %958 = vmatmul.mubr.bf16.gmra.mrb[0].mxu0 %v747
    %v959 = vpop.f32.mrb[0].mxu0
    %v960 = vadd.f32 0.0, %v959
    %v961 = vpop.f32.mrb[0].mxu0
    %v962 = vpop.f32.mrb[0].mxu0
    %v963 = vadd.f32 0.0, %v962
    %v964 = vpop.f32.mrb[0].mxu0
    %965 = vmatprep.mubr.bf16.mxu0 0
    %966 = vmatmul.mubr.bf16.gmra.mrb[0].mxu0 %v748
    %v967 = vpop.f32.mrb[0].mxu0
    %v968 = vadd.f32 0.0, %v967
    %v969 = vpop.f32.mrb[0].mxu0
    %v970 = vpop.f32.mrb[0].mxu0
    %v971 = vadd.f32 0.0, %v970
    %v972 = vpop.f32.mrb[0].mxu0
    %973 = vdwg.mxu0
    %975 = vset.pattern.permute.xlu0 0
    %976 = vperm.xlu0 %975, %v669
    %v977 = vpop.permute.xlu0 %976
    %980 = vset.pattern.permute.xlu0 0
    %981 = vperm.xlu0 %980, %v670
    %v982 = vpop.permute.xlu0 %981
    %985 = vset.pattern.permute.xlu0 0
    %986 = vperm.xlu0 %985, %v671
    %v987 = vpop.permute.xlu0 %986
    %990 = vset.pattern.permute.xlu0 0
    %991 = vperm.xlu0 %990, %v672
    %v992 = vpop.permute.xlu0 %991
    %995 = vset.pattern.permute.xlu0 0
    %996 = vperm.xlu0 %995, %v673
    %v997 = vpop.permute.xlu0 %996
    %1000 = vset.pattern.permute.xlu0 0
    %1001 = vperm.xlu0 %1000, %v674
    %v1002 = vpop.permute.xlu0 %1001
    %1005 = vset.pattern.permute.xlu0 0
    %1006 = vperm.xlu0 %1005, %v675
    %v1007 = vpop.permute.xlu0 %1006
    %1010 = vset.pattern.permute.xlu0 0
    %1011 = vperm.xlu0 %1010, %v676
    %v1012 = vpop.permute.xlu0 %1011
    %1015 = vset.pattern.permute.xlu0 0
    %1016 = vperm.xlu0 %1015, %v677
    %v1017 = vpop.permute.xlu0 %1016
    %1020 = vset.pattern.permute.xlu0 0
    %1021 = vperm.xlu0 %1020, %v678
    %v1022 = vpop.permute.xlu0 %1021
    %1025 = vset.pattern.permute.xlu0 0
    %1026 = vperm.xlu0 %1025, %v679
    %v1027 = vpop.permute.xlu0 %1026
    %1030 = vset.pattern.permute.xlu0 0
    %1031 = vperm.xlu0 %1030, %v680
    %v1032 = vpop.permute.xlu0 %1031
    %1035 = vset.pattern.permute.xlu0 0
    %1036 = vperm.xlu0 %1035, %v681
    %v1037 = vpop.permute.xlu0 %1036
    %1040 = vset.pattern.permute.xlu0 0
    %1041 = vperm.xlu0 %1040, %v682
    %v1042 = vpop.permute.xlu0 %1041
    %1045 = vset.pattern.permute.xlu0 0
    %1046 = vperm.xlu0 %1045, %v683
    %v1047 = vpop.permute.xlu0 %1046
    %1050 = vset.pattern.permute.xlu0 0
    %1051 = vperm.xlu0 %1050, %v684
    %v1052 = vpop.permute.xlu0 %1051
    %1055 = vset.pattern.permute.xlu0 0
    %1056 = vperm.xlu0 %1055, %v685
    %v1057 = vpop.permute.xlu0 %1056
    %1060 = vset.pattern.permute.xlu0 0
    %1061 = vperm.xlu0 %1060, %v686
    %v1062 = vpop.permute.xlu0 %1061
    %1065 = vset.pattern.permute.xlu0 0
    %1066 = vperm.xlu0 %1065, %v687
    %v1067 = vpop.permute.xlu0 %1066
    %1070 = vset.pattern.permute.xlu0 0
    %1071 = vperm.xlu0 %1070, %v688
    %v1072 = vpop.permute.xlu0 %1071
    %1075 = vset.pattern.permute.xlu0 0
    %1076 = vperm.xlu0 %1075, %v689
    %v1077 = vpop.permute.xlu0 %1076
    %1080 = vset.pattern.permute.xlu0 0
    %1081 = vperm.xlu0 %1080, %v690
    %v1082 = vpop.permute.xlu0 %1081
    %1085 = vset.pattern.permute.xlu0 0
    %1086 = vperm.xlu0 %1085, %v691
    %v1087 = vpop.permute.xlu0 %1086
    %1090 = vset.pattern.permute.xlu0 0
    %1091 = vperm.xlu0 %1090, %v692
    %v1092 = vpop.permute.xlu0 %1091
    %1095 = vset.pattern.permute.xlu0 0
    %1096 = vperm.xlu0 %1095, %v693
    %v1097 = vpop.permute.xlu0 %1096
    %1100 = vset.pattern.permute.xlu0 0
    %1101 = vperm.xlu0 %1100, %v694
    %v1102 = vpop.permute.xlu0 %1101
    %1105 = vset.pattern.permute.xlu0 0
    %1106 = vperm.xlu0 %1105, %v695
    %v1107 = vpop.permute.xlu0 %1106
    %1110 = vset.pattern.permute.xlu0 0
    %1111 = vperm.xlu0 %1110, %v696
    %v1112 = vpop.permute.xlu0 %1111
    %1115 = vset.pattern.permute.xlu0 0
    %1116 = vperm.xlu0 %1115, %v697
    %v1117 = vpop.permute.xlu0 %1116
    %1120 = vset.pattern.permute.xlu0 0
    %1121 = vperm.xlu0 %1120, %v698
    %v1122 = vpop.permute.xlu0 %1121
    %1125 = vset.pattern.permute.xlu0 0
    %1126 = vperm.xlu0 %1125, %v699
    %v1127 = vpop.permute.xlu0 %1126
    %1130 = vset.pattern.permute.xlu0 0
    %1131 = vperm.xlu0 %1130, %v700
    %v1132 = vpop.permute.xlu0 %1131
    %v1134 = vmul.f32 %v977, %v848
    %v1135 = vmul.f32 %v982, %v851
    %v1136 = vmul.f32 %v987, %v856
    %v1137 = vmul.f32 %v992, %v859
    %v1138 = vmul.f32 %v997, %v864
    %v1139 = vmul.f32 %v1002, %v867
    %v1140 = vmul.f32 %v1007, %v872
    %v1141 = vmul.f32 %v1012, %v875
    %v1142 = vmul.f32 %v1017, %v880
    %v1143 = vmul.f32 %v1022, %v883
    %v1144 = vmul.f32 %v1027, %v888
    %v1145 = vmul.f32 %v1032, %v891
    %v1146 = vmul.f32 %v1037, %v896
    %v1147 = vmul.f32 %v1042, %v899
    %v1148 = vmul.f32 %v1047, %v904
    %v1149 = vmul.f32 %v1052, %v907
    %v1150 = vmul.f32 %v1057, %v912
    %v1151 = vmul.f32 %v1062, %v915
    %v1152 = vmul.f32 %v1067, %v920
    %v1153 = vmul.f32 %v1072, %v923
    %v1154 = vmul.f32 %v1077, %v928
    %v1155 = vmul.f32 %v1082, %v931
    %v1156 = vmul.f32 %v1087, %v936
    %v1157 = vmul.f32 %v1092, %v939
    %v1158 = vmul.f32 %v1097, %v944
    %v1159 = vmul.f32 %v1102, %v947
    %v1160 = vmul.f32 %v1107, %v952
    %v1161 = vmul.f32 %v1112, %v955
    %v1162 = vmul.f32 %v1117, %v960
    %v1163 = vmul.f32 %v1122, %v963
    %v1164 = vmul.f32 %v1127, %v968
    %v1165 = vmul.f32 %v1132, %v971
    %v1166 = vld [vmem:[%s4] sm:$0x1]
    %v1168 = vlaneseq
    %v1169 = vshrl.u32 %v1168, 7
    %v1170 = vsub.s32 0, %v1169
    %v1171 = vrot.slane %v1166, %v1170
    %v1173 = vadd.f32 %v1134, %v1171
    %v1174 = vadd.f32 %v1135, %v1171
    %v1175 = vadd.f32 %v1136, %v1171
    %v1176 = vadd.f32 %v1137, %v1171
    %v1177 = vadd.f32 %v1138, %v1171
    %v1178 = vadd.f32 %v1139, %v1171
    %v1179 = vadd.f32 %v1140, %v1171
    %v1180 = vadd.f32 %v1141, %v1171
    %v1181 = vadd.f32 %v1142, %v1171
    %v1182 = vadd.f32 %v1143, %v1171
    %v1183 = vadd.f32 %v1144, %v1171
    %v1184 = vadd.f32 %v1145, %v1171
    %v1185 = vadd.f32 %v1146, %v1171
    %v1186 = vadd.f32 %v1147, %v1171
    %v1187 = vadd.f32 %v1148, %v1171
    %v1188 = vadd.f32 %v1149, %v1171
    %v1189 = vadd.f32 %v1150, %v1171
    %v1190 = vadd.f32 %v1151, %v1171
    %v1191 = vadd.f32 %v1152, %v1171
    %v1192 = vadd.f32 %v1153, %v1171
    %v1193 = vadd.f32 %v1154, %v1171
    %v1194 = vadd.f32 %v1155, %v1171
    %v1195 = vadd.f32 %v1156, %v1171
    %v1196 = vadd.f32 %v1157, %v1171
    %v1197 = vadd.f32 %v1158, %v1171
    %v1198 = vadd.f32 %v1159, %v1171
    %v1199 = vadd.f32 %v1160, %v1171
    %v1200 = vadd.f32 %v1161, %v1171
    %v1201 = vadd.f32 %v1162, %v1171
    %v1202 = vadd.f32 %v1163, %v1171
    %v1203 = vadd.f32 %v1164, %v1171
    %v1204 = vadd.f32 %v1165, %v1171
    %v1205 = vmax.f32 %v1173, 0.0
    %v1206 = vmax.f32 %v1174, 0.0
    %v1207 = vmax.f32 %v1175, 0.0
    %v1208 = vmax.f32 %v1176, 0.0
    %v1209 = vmax.f32 %v1177, 0.0
    %v1210 = vmax.f32 %v1178, 0.0
    %v1211 = vmax.f32 %v1179, 0.0
    %v1212 = vmax.f32 %v1180, 0.0
    %v1213 = vmax.f32 %v1181, 0.0
    %v1214 = vmax.f32 %v1182, 0.0
    %v1215 = vmax.f32 %v1183, 0.0
    %v1216 = vmax.f32 %v1184, 0.0
    %v1217 = vmax.f32 %v1185, 0.0
    %v1218 = vmax.f32 %v1186, 0.0
    %v1219 = vmax.f32 %v1187, 0.0
    %v1220 = vmax.f32 %v1188, 0.0
    %v1221 = vmax.f32 %v1189, 0.0
    %v1222 = vmax.f32 %v1190, 0.0
    %v1223 = vmax.f32 %v1191, 0.0
    %v1224 = vmax.f32 %v1192, 0.0
    %v1225 = vmax.f32 %v1193, 0.0
    %v1226 = vmax.f32 %v1194, 0.0
    %v1227 = vmax.f32 %v1195, 0.0
    %v1228 = vmax.f32 %v1196, 0.0
    %v1229 = vmax.f32 %v1197, 0.0
    %v1230 = vmax.f32 %v1198, 0.0
    %v1231 = vmax.f32 %v1199, 0.0
    %v1232 = vmax.f32 %v1200, 0.0
    %v1233 = vmax.f32 %v1201, 0.0
    %v1234 = vmax.f32 %v1202, 0.0
    %v1235 = vmax.f32 %v1203, 0.0
    %v1236 = vmax.f32 %v1204, 0.0
    %v1237 = vmul.f32 %v977, %v1205
    %v1238 = vmul.f32 %v982, %v1206
    %v1239 = vmul.f32 %v987, %v1207
    %v1240 = vmul.f32 %v992, %v1208
    %v1241 = vmul.f32 %v997, %v1209
    %v1242 = vmul.f32 %v1002, %v1210
    %v1243 = vmul.f32 %v1007, %v1211
    %v1244 = vmul.f32 %v1012, %v1212
    %v1245 = vmul.f32 %v1017, %v1213
    %v1246 = vmul.f32 %v1022, %v1214
    %v1247 = vmul.f32 %v1027, %v1215
    %v1248 = vmul.f32 %v1032, %v1216
    %v1249 = vmul.f32 %v1037, %v1217
    %v1250 = vmul.f32 %v1042, %v1218
    %v1251 = vmul.f32 %v1047, %v1219
    %v1252 = vmul.f32 %v1052, %v1220
    %v1253 = vmul.f32 %v1057, %v1221
    %v1254 = vmul.f32 %v1062, %v1222
    %v1255 = vmul.f32 %v1067, %v1223
    %v1256 = vmul.f32 %v1072, %v1224
    %v1257 = vmul.f32 %v1077, %v1225
    %v1258 = vmul.f32 %v1082, %v1226
    %v1259 = vmul.f32 %v1087, %v1227
    %v1260 = vmul.f32 %v1092, %v1228
    %v1261 = vmul.f32 %v1097, %v1229
    %v1262 = vmul.f32 %v1102, %v1230
    %v1263 = vmul.f32 %v1107, %v1231
    %v1264 = vmul.f32 %v1112, %v1232
    %v1265 = vmul.f32 %v1117, %v1233
    %v1266 = vmul.f32 %v1122, %v1234
    %v1267 = vmul.f32 %v1127, %v1235
    %v1268 = vmul.f32 %v1132, %v1236
    %v1269 = vpack.c.bf16 %v1238, %v1237
    %v1270 = vpack.c.bf16 %v1240, %v1239
    %v1271 = vpack.c.bf16 %v1242, %v1241
    %v1272 = vpack.c.bf16 %v1244, %v1243
    %v1273 = vpack.c.bf16 %v1246, %v1245
    %v1274 = vpack.c.bf16 %v1248, %v1247
    %v1275 = vpack.c.bf16 %v1250, %v1249
    %v1276 = vpack.c.bf16 %v1252, %v1251
    %v1277 = vpack.c.bf16 %v1254, %v1253
    %v1278 = vpack.c.bf16 %v1256, %v1255
    %v1279 = vpack.c.bf16 %v1258, %v1257
    %v1280 = vpack.c.bf16 %v1260, %v1259
    %v1281 = vpack.c.bf16 %v1262, %v1261
    %v1282 = vpack.c.bf16 %v1264, %v1263
    %v1283 = vpack.c.bf16 %v1266, %v1265
    %v1284 = vpack.c.bf16 %v1268, %v1267
    %v1301 = vunpack.c.l.b16 %v1269
    %v1302 = vunpack.c.h.b16 %v1269
    %v1303 = vunpack.c.l.b16 %v1270
    %v1304 = vunpack.c.h.b16 %v1270
    %v1305 = vunpack.c.l.b16 %v1271
    %v1306 = vunpack.c.h.b16 %v1271
    %v1307 = vunpack.c.l.b16 %v1272
    %v1308 = vunpack.c.h.b16 %v1272
    %v1309 = vunpack.c.l.b16 %v1273
    %v1310 = vunpack.c.h.b16 %v1273
    %v1311 = vunpack.c.l.b16 %v1274
    %v1312 = vunpack.c.h.b16 %v1274
    %v1313 = vunpack.c.l.b16 %v1275
    %v1314 = vunpack.c.h.b16 %v1275
    %v1315 = vunpack.c.l.b16 %v1276
    %v1316 = vunpack.c.h.b16 %v1276
    %v1317 = vunpack.c.l.b16 %v1277
    %v1318 = vunpack.c.h.b16 %v1277
    %v1319 = vunpack.c.l.b16 %v1278
    %v1320 = vunpack.c.h.b16 %v1278
    %v1321 = vunpack.c.l.b16 %v1279
    %v1322 = vunpack.c.h.b16 %v1279
    %v1323 = vunpack.c.l.b16 %v1280
    %v1324 = vunpack.c.h.b16 %v1280
    %v1325 = vunpack.c.l.b16 %v1281
    %v1326 = vunpack.c.h.b16 %v1281
    %v1327 = vunpack.c.l.b16 %v1282
    %v1328 = vunpack.c.h.b16 %v1282
    %v1329 = vunpack.c.l.b16 %v1283
    %v1330 = vunpack.c.h.b16 %v1283
    %v1331 = vunpack.c.l.b16 %v1284
    %v1332 = vunpack.c.h.b16 %v1284
    %v1333 = vpack.c.b16 %v1301, %v1301
    %v1334 = vpack.c.b16 %v1302, %v1302
    %v1335 = vpack.c.b16 %v1303, %v1303
    %v1336 = vpack.c.b16 %v1304, %v1304
    %v1337 = vpack.c.b16 %v1305, %v1305
    %v1338 = vpack.c.b16 %v1306, %v1306
    %v1339 = vpack.c.b16 %v1307, %v1307
    %v1340 = vpack.c.b16 %v1308, %v1308
    %v1341 = vpack.c.b16 %v1309, %v1309
    %v1342 = vpack.c.b16 %v1310, %v1310
    %v1343 = vpack.c.b16 %v1311, %v1311
    %v1344 = vpack.c.b16 %v1312, %v1312
    %v1345 = vpack.c.b16 %v1313, %v1313
    %v1346 = vpack.c.b16 %v1314, %v1314
    %v1347 = vpack.c.b16 %v1315, %v1315
    %v1348 = vpack.c.b16 %v1316, %v1316
    %v1349 = vpack.c.b16 %v1317, %v1317
    %v1350 = vpack.c.b16 %v1318, %v1318
    %v1351 = vpack.c.b16 %v1319, %v1319
    %v1352 = vpack.c.b16 %v1320, %v1320
    %v1353 = vpack.c.b16 %v1321, %v1321
    %v1354 = vpack.c.b16 %v1322, %v1322
    %v1355 = vpack.c.b16 %v1323, %v1323
    %v1356 = vpack.c.b16 %v1324, %v1324
    %v1357 = vpack.c.b16 %v1325, %v1325
    %v1358 = vpack.c.b16 %v1326, %v1326
    %v1359 = vpack.c.b16 %v1327, %v1327
    %v1360 = vpack.c.b16 %v1328, %v1328
    %v1361 = vpack.c.b16 %v1329, %v1329
    %v1362 = vpack.c.b16 %v1330, %v1330
    %v1363 = vpack.c.b16 %v1331, %v1331
    %v1364 = vpack.c.b16 %v1332, %v1332
    %1397 = vst [vmem:[%s5] sm:$0xf] %v1333
    %1398 = vst [vmem:[%s5 + $0x4] sm:$0xf] %v1334
    %1399 = vst [vmem:[%s5 + $0x8] sm:$0xf] %v1335
    %1400 = vst [vmem:[%s5 + $0xc] sm:$0xf] %v1336
    %1401 = vst [vmem:[%s5 + $0x10] sm:$0xf] %v1337
    %1402 = vst [vmem:[%s5 + $0x14] sm:$0xf] %v1338
    %1403 = vst [vmem:[%s5 + $0x18] sm:$0xf] %v1339
    %1404 = vst [vmem:[%s5 + $0x1c] sm:$0xf] %v1340
    %1405 = vst [vmem:[%s5 + $0x20] sm:$0xf] %v1341
    %1406 = vst [vmem:[%s5 + $0x24] sm:$0xf] %v1342
    %1407 = vst [vmem:[%s5 + $0x28] sm:$0xf] %v1343
    %1408 = vst [vmem:[%s5 + $0x2c] sm:$0xf] %v1344
    %1409 = vst [vmem:[%s5 + $0x30] sm:$0xf] %v1345
    %1410 = vst [vmem:[%s5 + $0x34] sm:$0xf] %v1346
    %1411 = vst [vmem:[%s5 + $0x38] sm:$0xf] %v1347
    %1412 = vst [vmem:[%s5 + $0x3c] sm:$0xf] %v1348
    %1413 = vst [vmem:[%s5 + $0x40] sm:$0xf] %v1349
    %1414 = vst [vmem:[%s5 + $0x44] sm:$0xf] %v1350
    %1415 = vst [vmem:[%s5 + $0x48] sm:$0xf] %v1351
    %1416 = vst [vmem:[%s5 + $0x4c] sm:$0xf] %v1352
    %1417 = vst [vmem:[%s5 + $0x50] sm:$0xf] %v1353
    %1418 = vst [vmem:[%s5 + $0x54] sm:$0xf] %v1354
    %1419 = vst [vmem:[%s5 + $0x58] sm:$0xf] %v1355
    %1420 = vst [vmem:[%s5 + $0x5c] sm:$0xf] %v1356
    %1421 = vst [vmem:[%s5 + $0x60] sm:$0xf] %v1357
    %1422 = vst [vmem:[%s5 + $0x64] sm:$0xf] %v1358
    %1423 = vst [vmem:[%s5 + $0x68] sm:$0xf] %v1359
    %1424 = vst [vmem:[%s5 + $0x6c] sm:$0xf] %v1360
    %1425 = vst [vmem:[%s5 + $0x70] sm:$0xf] %v1361
    %1426 = vst [vmem:[%s5 + $0x74] sm:$0xf] %v1362
    %1427 = vst [vmem:[%s5 + $0x78] sm:$0xf] %v1363
    %1428 = vst [vmem:[%s5 + $0x7c] sm:$0xf] %v1364
  $region29: #{pose_gcn_forward.2} parent=0 // pred_fallthru
    _
  // Predicated region
  $region30: #{pose_gcn_forward.2} parent=0 // pred_check
    _
  $region31: #{pose_gcn_forward.2} parent=0 // pred_check_branch
    %1430 = sbr.rel (0) target = $region33
  $region32: #{pose_gcn_forward.2} parent=0 // pred_region
    _
  $region33: #{pose_gcn_forward.2} parent=0 // pred_fallthru
    _
  // Predicated region
  $region34: #{pose_gcn_forward.2} parent=0 // pred_check
    _
  $region35: #{pose_gcn_forward.2} parent=0 // pred_check_branch
    %1432 = sbr.rel (0) target = $region37
  $region36: #{pose_gcn_forward.2} parent=0 // pred_region
    _
  $region37: #{pose_gcn_forward.2} parent=0 // pred_fallthru
    _

// kernel: pose_gcn_forward.3
$region0: #{pose_gcn_forward.3}
  #allocation0 [shape = 'u32[]', space=smem, size = 0x4, offset = 0x4, fixed_abs, tag = 'smem constant byte address 0x4 - core index']
  #allocation1 [shape = 'u32[144,128]{1,0:T(1,128)}', space=vmem, size = 0x12000, scoped, tag = 'internal scratch']
  #allocation2 [shape = 'f32[256,128]{1,0:T(8,128)}', space=vmem, size = 0x20000, scoped, tag = 'scratch operand']
  #allocation3 [shape = 'f32[16,256]{1,0:T(8,128)}', space=vmem, size = 0x4000, scoped, tag = 'scratch operand']
  %s0 = inlined_call_operand.vmem [shape: s8[256,256], index: 0, kind: input, shape index: {}]
  %s1 = inlined_call_operand.vmem [shape: bf16[256,128], index: 1, kind: input, shape index: {}]
  %s2 = inlined_call_operand.vmem [shape: bf16[16,256], index: 2, kind: input, shape index: {}]
  %s3 = inlined_call_operand.vmem [shape: f32[256,1], index: 3, kind: input, shape index: {}]
  %s4 = inlined_call_operand.vmem [shape: bf16[128,128], index: 4, kind: input, shape index: {}]
  %s5 = inlined_call_operand.vmem [shape: f32[1,128], index: 5, kind: input, shape index: {}]
  %s6 = inlined_call_operand.vmem [shape: bf16[128,128], index: 6, kind: input, shape index: {}]
  %s7 = inlined_call_operand.vmem [shape: f32[1,16,128], index: 7, kind: output, shape index: {}]
  %s8 = sld [smem:[#allocation0]]
  $region46: #{pose_gcn_forward.3} parent=0
    _
  %s10 = ssub.s32 1, %s8
  %s11 = scalar_select 0, %s10, %s8
  // Predicated region
  $region2: #{pose_gcn_forward.3} parent=0 // pred_check
    _
  $region3: #{pose_gcn_forward.3} parent=0 // pred_check_branch
    %13 = sbr.rel (0) target = $region5
  $region4: #{pose_gcn_forward.3} parent=0 // pred_region
    _
  $region5: #{pose_gcn_forward.3} parent=0 // pred_fallthru
    _
  // Predicated region
  $region6: #{pose_gcn_forward.3} parent=0 // pred_check
    _
  $region7: #{pose_gcn_forward.3} parent=0 // pred_check_branch
    %15 = sbr.rel (0) target = $region9
  $region8: #{pose_gcn_forward.3} parent=0 // pred_region
    _
  $region9: #{pose_gcn_forward.3} parent=0 // pred_fallthru
    _
  // Predicated region
  $region10: #{pose_gcn_forward.3} parent=0 // pred_check
    _
  $region11: #{pose_gcn_forward.3} parent=0 // pred_check_branch
    %17 = sbr.rel (0) target = $region13
  $region12: #{pose_gcn_forward.3} parent=0 // pred_region
    _
  $region13: #{pose_gcn_forward.3} parent=0 // pred_fallthru
    _
  // Predicated region
  $region14: #{pose_gcn_forward.3} parent=0 // pred_check
    _
  $region15: #{pose_gcn_forward.3} parent=0 // pred_check_branch
    %19 = sbr.rel (0) target = $region17
  $region16: #{pose_gcn_forward.3} parent=0 // pred_region
    _
  $region17: #{pose_gcn_forward.3} parent=0 // pred_fallthru
    _
  // Predicated region
  $region18: #{pose_gcn_forward.3} parent=0 // pred_check
    _
  $region19: #{pose_gcn_forward.3} parent=0 // pred_check_branch
    %21 = sbr.rel (0) target = $region21
  $region20: #{pose_gcn_forward.3} parent=0 // pred_region
    _
  $region21: #{pose_gcn_forward.3} parent=0 // pred_fallthru
    _
  // Predicated region
  $region22: #{pose_gcn_forward.3} parent=0 // pred_check
    _
  $region23: #{pose_gcn_forward.3} parent=0 // pred_check_branch
    %23 = sbr.rel (0) target = $region25
  $region24: #{pose_gcn_forward.3} parent=0 // pred_region
    _
  $region25: #{pose_gcn_forward.3} parent=0 // pred_fallthru
    _
  // Predicated region
  $region26: #{pose_gcn_forward.3} parent=0 // pred_check
    _
  $region27: #{pose_gcn_forward.3} parent=0 // pred_check_branch
    %25 = sbr.rel (0) target = $region29
  $region28: #{pose_gcn_forward.3} parent=0 // pred_region
    _
  $region29: #{pose_gcn_forward.3} parent=0 // pred_fallthru
    _
  %p27 = scmp.eq.s32.totalorder 0, 0
  // Predicated region
  $region30: #{pose_gcn_forward.3} parent=0 // pred_check
    %p28 = pneg %p27
  $region31: #{pose_gcn_forward.3} parent=0 // pred_check_branch
    %30 = sbr.rel (%p28) target = $region33
  $region32: #{pose_gcn_forward.3} parent=0 // pred_region
    %31 = vst [vmem:[#allocation2] sm:$0xff] 0.0
    %32 = vst [vmem:[#allocation2 + $0x8] sm:$0xff] 0.0
    %33 = vst [vmem:[#allocation2 + $0x10] sm:$0xff] 0.0
    %34 = vst [vmem:[#allocation2 + $0x18] sm:$0xff] 0.0
    %35 = vst [vmem:[#allocation2 + $0x20] sm:$0xff] 0.0
    %36 = vst [vmem:[#allocation2 + $0x28] sm:$0xff] 0.0
    %37 = vst [vmem:[#allocation2 + $0x30] sm:$0xff] 0.0
    %38 = vst [vmem:[#allocation2 + $0x38] sm:$0xff] 0.0
    %39 = vst [vmem:[#allocation2 + $0x40] sm:$0xff] 0.0
    %40 = vst [vmem:[#allocation2 + $0x48] sm:$0xff] 0.0
    %41 = vst [vmem:[#allocation2 + $0x50] sm:$0xff] 0.0
    %42 = vst [vmem:[#allocation2 + $0x58] sm:$0xff] 0.0
    %43 = vst [vmem:[#allocation2 + $0x60] sm:$0xff] 0.0
    %44 = vst [vmem:[#allocation2 + $0x68] sm:$0xff] 0.0
    %45 = vst [vmem:[#allocation2 + $0x70] sm:$0xff] 0.0
    %46 = vst [vmem:[#allocation2 + $0x78] sm:$0xff] 0.0
    %47 = vst [vmem:[#allocation2 + $0x80] sm:$0xff] 0.0
    %48 = vst [vmem:[#allocation2 + $0x88] sm:$0xff] 0.0
    %49 = vst [vmem:[#allocation2 + $0x90] sm:$0xff] 0.0
    %50 = vst [vmem:[#allocation2 + $0x98] sm:$0xff] 0.0
    %51 = vst [vmem:[#allocation2 + $0xa0] sm:$0xff] 0.0
    %52 = vst [vmem:[#allocation2 + $0xa8] sm:$0xff] 0.0
    %53 = vst [vmem:[#allocation2 + $0xb0] sm:$0xff] 0.0
    %54 = vst [vmem:[#allocation2 + $0xb8] sm:$0xff] 0.0
    %55 = vst [vmem:[#allocation2 + $0xc0] sm:$0xff] 0.0
    %56 = vst [vmem:[#allocation2 + $0xc8] sm:$0xff] 0.0
    %57 = vst [vmem:[#allocation2 + $0xd0] sm:$0xff] 0.0
    %58 = vst [vmem:[#allocation2 + $0xd8] sm:$0xff] 0.0
    %59 = vst [vmem:[#allocation2 + $0xe0] sm:$0xff] 0.0
    %60 = vst [vmem:[#allocation2 + $0xe8] sm:$0xff] 0.0
    %61 = vst [vmem:[#allocation2 + $0xf0] sm:$0xff] 0.0
    %62 = vst [vmem:[#allocation2 + $0xf8] sm:$0xff] 0.0
    %63 = vst [vmem:[#allocation3] sm:$0xff] 0.0
    %64 = vst [vmem:[#allocation3 + $0x8] sm:$0xff] 0.0
    %65 = vst [vmem:[#allocation3 + $0x10] sm:$0xff] 0.0
    %66 = vst [vmem:[#allocation3 + $0x18] sm:$0xff] 0.0
  $region33: #{pose_gcn_forward.3} parent=0 // pred_fallthru
    _
  %v67 = vld [vmem:[%s0] sm:$0xf]
  %v68 = vld [vmem:[%s0 + $0x4] sm:$0xf]
  %v69 = vld [vmem:[%s0 + $0x8] sm:$0xf]
  %v70 = vld [vmem:[%s0 + $0xc] sm:$0xf]
  %v71 = vld [vmem:[%s0 + $0x10] sm:$0xf]
  %v72 = vld [vmem:[%s0 + $0x14] sm:$0xf]
  %v73 = vld [vmem:[%s0 + $0x18] sm:$0xf]
  %v74 = vld [vmem:[%s0 + $0x1c] sm:$0xf]
  %v75 = vld [vmem:[%s0 + $0x20] sm:$0xf]
  %v76 = vld [vmem:[%s0 + $0x24] sm:$0xf]
  %v77 = vld [vmem:[%s0 + $0x28] sm:$0xf]
  %v78 = vld [vmem:[%s0 + $0x2c] sm:$0xf]
  %v79 = vld [vmem:[%s0 + $0x30] sm:$0xf]
  %v80 = vld [vmem:[%s0 + $0x34] sm:$0xf]
  %v81 = vld [vmem:[%s0 + $0x38] sm:$0xf]
  %v82 = vld [vmem:[%s0 + $0x3c] sm:$0xf]
  %v83 = vld [vmem:[%s0 + $0x40] sm:$0xf]
  %v84 = vld [vmem:[%s0 + $0x44] sm:$0xf]
  %v85 = vld [vmem:[%s0 + $0x48] sm:$0xf]
  %v86 = vld [vmem:[%s0 + $0x4c] sm:$0xf]
  %v87 = vld [vmem:[%s0 + $0x50] sm:$0xf]
  %v88 = vld [vmem:[%s0 + $0x54] sm:$0xf]
  %v89 = vld [vmem:[%s0 + $0x58] sm:$0xf]
  %v90 = vld [vmem:[%s0 + $0x5c] sm:$0xf]
  %v91 = vld [vmem:[%s0 + $0x60] sm:$0xf]
  %v92 = vld [vmem:[%s0 + $0x64] sm:$0xf]
  %v93 = vld [vmem:[%s0 + $0x68] sm:$0xf]
  %v94 = vld [vmem:[%s0 + $0x6c] sm:$0xf]
  %v95 = vld [vmem:[%s0 + $0x70] sm:$0xf]
  %v96 = vld [vmem:[%s0 + $0x74] sm:$0xf]
  %v97 = vld [vmem:[%s0 + $0x78] sm:$0xf]
  %v98 = vld [vmem:[%s0 + $0x7c] sm:$0xf]
  %v99 = vunpack.c.l.s8.bf16 %v67
  %v100 = vunpack.c.l.s8.bf16 %v68
  %v101 = vunpack.c.l.s8.bf16 %v69
  %v102 = vunpack.c.l.s8.bf16 %v70
  %v103 = vunpack.c.l.s8.bf16 %v71
  %v104 = vunpack.c.l.s8.bf16 %v72
  %v105 = vunpack.c.l.s8.bf16 %v73
  %v106 = vunpack.c.l.s8.bf16 %v74
  %v107 = vunpack.c.l.s8.bf16 %v75
  %v108 = vunpack.c.l.s8.bf16 %v76
  %v109 = vunpack.c.l.s8.bf16 %v77
  %v110 = vunpack.c.l.s8.bf16 %v78
  %v111 = vunpack.c.l.s8.bf16 %v79
  %v112 = vunpack.c.l.s8.bf16 %v80
  %v113 = vunpack.c.l.s8.bf16 %v81
  %v114 = vunpack.c.l.s8.bf16 %v82
  %v115 = vunpack.c.l.s8.bf16 %v83
  %v116 = vunpack.c.l.s8.bf16 %v84
  %v117 = vunpack.c.l.s8.bf16 %v85
  %v118 = vunpack.c.l.s8.bf16 %v86
  %v119 = vunpack.c.l.s8.bf16 %v87
  %v120 = vunpack.c.l.s8.bf16 %v88
  %v121 = vunpack.c.l.s8.bf16 %v89
  %v122 = vunpack.c.l.s8.bf16 %v90
  %v123 = vunpack.c.l.s8.bf16 %v91
  %v124 = vunpack.c.l.s8.bf16 %v92
  %v125 = vunpack.c.l.s8.bf16 %v93
  %v126 = vunpack.c.l.s8.bf16 %v94
  %v127 = vunpack.c.l.s8.bf16 %v95
  %v128 = vunpack.c.l.s8.bf16 %v96
  %v129 = vunpack.c.l.s8.bf16 %v97
  %v130 = vunpack.c.l.s8.bf16 %v98
  %v131 = vld [vmem:[#allocation2] sm:$0xff]
  %v132 = vld [vmem:[#allocation2 + $0x8] sm:$0xff]
  %v133 = vld [vmem:[#allocation2 + $0x10] sm:$0xff]
  %v134 = vld [vmem:[#allocation2 + $0x18] sm:$0xff]
  %v135 = vld [vmem:[#allocation2 + $0x20] sm:$0xff]
  %v136 = vld [vmem:[#allocation2 + $0x28] sm:$0xff]
  %v137 = vld [vmem:[#allocation2 + $0x30] sm:$0xff]
  %v138 = vld [vmem:[#allocation2 + $0x38] sm:$0xff]
  %v139 = vld [vmem:[#allocation2 + $0x40] sm:$0xff]
  %v140 = vld [vmem:[#allocation2 + $0x48] sm:$0xff]
  %v141 = vld [vmem:[#allocation2 + $0x50] sm:$0xff]
  %v142 = vld [vmem:[#allocation2 + $0x58] sm:$0xff]
  %v143 = vld [vmem:[#allocation2 + $0x60] sm:$0xff]
  %v144 = vld [vmem:[#allocation2 + $0x68] sm:$0xff]
  %v145 = vld [vmem:[#allocation2 + $0x70] sm:$0xff]
  %v146 = vld [vmem:[#allocation2 + $0x78] sm:$0xff]
  %v147 = vld [vmem:[#allocation2 + $0x80] sm:$0xff]
  %v148 = vld [vmem:[#allocation2 + $0x88] sm:$0xff]
  %v149 = vld [vmem:[#allocation2 + $0x90] sm:$0xff]
  %v150 = vld [vmem:[#allocation2 + $0x98] sm:$0xff]
  %v151 = vld [vmem:[#allocation2 + $0xa0] sm:$0xff]
  %v152 = vld [vmem:[#allocation2 + $0xa8] sm:$0xff]
  %v153 = vld [vmem:[#allocation2 + $0xb0] sm:$0xff]
  %v154 = vld [vmem:[#allocation2 + $0xb8] sm:$0xff]
  %v155 = vld [vmem:[#allocation2 + $0xc0] sm:$0xff]
  %v156 = vld [vmem:[#allocation2 + $0xc8] sm:$0xff]
  %v157 = vld [vmem:[#allocation2 + $0xd0] sm:$0xff]
  %v158 = vld [vmem:[#allocation2 + $0xd8] sm:$0xff]
  %v159 = vld [vmem:[#allocation2 + $0xe0] sm:$0xff]
  %v160 = vld [vmem:[#allocation2 + $0xe8] sm:$0xff]
  %v161 = vld [vmem:[#allocation2 + $0xf0] sm:$0xff]
  %v162 = vld [vmem:[#allocation2 + $0xf8] sm:$0xff]
  %v163 = vld [vmem:[%s1] sm:$0xf]
  %v164 = vld [vmem:[%s1 + $0x4] sm:$0xf]
  %v165 = vld [vmem:[%s1 + $0x8] sm:$0xf]
  %v166 = vld [vmem:[%s1 + $0xc] sm:$0xf]
  %v167 = vld [vmem:[%s1 + $0x10] sm:$0xf]
  %v168 = vld [vmem:[%s1 + $0x14] sm:$0xf]
  %v169 = vld [vmem:[%s1 + $0x18] sm:$0xf]
  %v170 = vld [vmem:[%s1 + $0x1c] sm:$0xf]
  %v171 = vld [vmem:[%s1 + $0x20] sm:$0xf]
  %v172 = vld [vmem:[%s1 + $0x24] sm:$0xf]
  %v173 = vld [vmem:[%s1 + $0x28] sm:$0xf]
  %v174 = vld [vmem:[%s1 + $0x2c] sm:$0xf]
  %v175 = vld [vmem:[%s1 + $0x30] sm:$0xf]
  %v176 = vld [vmem:[%s1 + $0x34] sm:$0xf]
  %v177 = vld [vmem:[%s1 + $0x38] sm:$0xf]
  %v178 = vld [vmem:[%s1 + $0x3c] sm:$0xf]
  %v179 = vld [vmem:[%s1 + $0x40] sm:$0xf]
  %v180 = vld [vmem:[%s1 + $0x44] sm:$0xf]
  %v181 = vld [vmem:[%s1 + $0x48] sm:$0xf]
  %v182 = vld [vmem:[%s1 + $0x4c] sm:$0xf]
  %v183 = vld [vmem:[%s1 + $0x50] sm:$0xf]
  %v184 = vld [vmem:[%s1 + $0x54] sm:$0xf]
  %v185 = vld [vmem:[%s1 + $0x58] sm:$0xf]
  %v186 = vld [vmem:[%s1 + $0x5c] sm:$0xf]
  %v187 = vld [vmem:[%s1 + $0x60] sm:$0xf]
  %v188 = vld [vmem:[%s1 + $0x64] sm:$0xf]
  %v189 = vld [vmem:[%s1 + $0x68] sm:$0xf]
  %v190 = vld [vmem:[%s1 + $0x6c] sm:$0xf]
  %v191 = vld [vmem:[%s1 + $0x70] sm:$0xf]
  %v192 = vld [vmem:[%s1 + $0x74] sm:$0xf]
  %v193 = vld [vmem:[%s1 + $0x78] sm:$0xf]
  %v194 = vld [vmem:[%s1 + $0x7c] sm:$0xf]
  %v227 = vunpack.c.l.b16 %v99
  %v228 = vunpack.c.h.b16 %v99
  %v229 = vunpack.c.l.b16 %v100
  %v230 = vunpack.c.h.b16 %v100
  %v231 = vunpack.c.l.b16 %v101
  %v232 = vunpack.c.h.b16 %v101
  %v233 = vunpack.c.l.b16 %v102
  %v234 = vunpack.c.h.b16 %v102
  %v235 = vunpack.c.l.b16 %v103
  %v236 = vunpack.c.h.b16 %v103
  %v237 = vunpack.c.l.b16 %v104
  %v238 = vunpack.c.h.b16 %v104
  %v239 = vunpack.c.l.b16 %v105
  %v240 = vunpack.c.h.b16 %v105
  %v241 = vunpack.c.l.b16 %v106
  %v242 = vunpack.c.h.b16 %v106
  %v243 = vunpack.c.l.b16 %v107
  %v244 = vunpack.c.h.b16 %v107
  %v245 = vunpack.c.l.b16 %v108
  %v246 = vunpack.c.h.b16 %v108
  %v247 = vunpack.c.l.b16 %v109
  %v248 = vunpack.c.h.b16 %v109
  %v249 = vunpack.c.l.b16 %v110
  %v250 = vunpack.c.h.b16 %v110
  %v251 = vunpack.c.l.b16 %v111
  %v252 = vunpack.c.h.b16 %v111
  %v253 = vunpack.c.l.b16 %v112
  %v254 = vunpack.c.h.b16 %v112
  %v255 = vunpack.c.l.b16 %v113
  %v256 = vunpack.c.h.b16 %v113
  %v257 = vunpack.c.l.b16 %v114
  %v258 = vunpack.c.h.b16 %v114
  %v259 = vunpack.c.l.b16 %v115
  %v260 = vunpack.c.h.b16 %v115
  %v261 = vunpack.c.l.b16 %v116
  %v262 = vunpack.c.h.b16 %v116
  %v263 = vunpack.c.l.b16 %v117
  %v264 = vunpack.c.h.b16 %v117
  %v265 = vunpack.c.l.b16 %v118
  %v266 = vunpack.c.h.b16 %v118
  %v267 = vunpack.c.l.b16 %v119
  %v268 = vunpack.c.h.b16 %v119
  %v269 = vunpack.c.l.b16 %v120
  %v270 = vunpack.c.h.b16 %v120
  %v271 = vunpack.c.l.b16 %v121
  %v272 = vunpack.c.h.b16 %v121
  %v273 = vunpack.c.l.b16 %v122
  %v274 = vunpack.c.h.b16 %v122
  %v275 = vunpack.c.l.b16 %v123
  %v276 = vunpack.c.h.b16 %v123
  %v277 = vunpack.c.l.b16 %v124
  %v278 = vunpack.c.h.b16 %v124
  %v279 = vunpack.c.l.b16 %v125
  %v280 = vunpack.c.h.b16 %v125
  %v281 = vunpack.c.l.b16 %v126
  %v282 = vunpack.c.h.b16 %v126
  %v283 = vunpack.c.l.b16 %v127
  %v284 = vunpack.c.h.b16 %v127
  %v285 = vunpack.c.l.b16 %v128
  %v286 = vunpack.c.h.b16 %v128
  %v287 = vunpack.c.l.b16 %v129
  %v288 = vunpack.c.h.b16 %v129
  %v289 = vunpack.c.l.b16 %v130
  %v290 = vunpack.c.h.b16 %v130
  %v291 = vpack.c.b16 %v229, %v227
  %v292 = vpack.c.b16 %v230, %v228
  %v293 = vpack.c.b16 %v233, %v231
  %v294 = vpack.c.b16 %v234, %v232
  %v295 = vpack.c.b16 %v237, %v235
  %v296 = vpack.c.b16 %v238, %v236
  %v297 = vpack.c.b16 %v241, %v239
  %v298 = vpack.c.b16 %v242, %v240
  %v299 = vpack.c.b16 %v245, %v243
  %v300 = vpack.c.b16 %v246, %v244
  %v301 = vpack.c.b16 %v249, %v247
  %v302 = vpack.c.b16 %v250, %v248
  %v303 = vpack.c.b16 %v253, %v251
  %v304 = vpack.c.b16 %v254, %v252
  %v305 = vpack.c.b16 %v257, %v255
  %v306 = vpack.c.b16 %v258, %v256
  %v307 = vpack.c.b16 %v261, %v259
  %v308 = vpack.c.b16 %v262, %v260
  %v309 = vpack.c.b16 %v265, %v263
  %v310 = vpack.c.b16 %v266, %v264
  %v311 = vpack.c.b16 %v269, %v267
  %v312 = vpack.c.b16 %v270, %v268
  %v313 = vpack.c.b16 %v273, %v271
  %v314 = vpack.c.b16 %v274, %v272
  %v315 = vpack.c.b16 %v277, %v275
  %v316 = vpack.c.b16 %v278, %v276
  %v317 = vpack.c.b16 %v281, %v279
  %v318 = vpack.c.b16 %v282, %v280
  %v319 = vpack.c.b16 %v285, %v283
  %v320 = vpack.c.b16 %v286, %v284
  %v321 = vpack.c.b16 %v289, %v287
  %v322 = vpack.c.b16 %v290, %v288
  %v387 = vunpack.c.l.b16 %v163
  %v388 = vunpack.c.l.b16 %v164
  %v389 = vunpack.c.l.b16 %v165
  %v390 = vunpack.c.l.b16 %v166
  %v391 = vunpack.c.l.b16 %v167
  %v392 = vunpack.c.l.b16 %v168
  %v393 = vunpack.c.l.b16 %v169
  %v394 = vunpack.c.l.b16 %v170
  %v395 = vunpack.c.l.b16 %v171
  %v396 = vunpack.c.l.b16 %v172
  %v397 = vunpack.c.l.b16 %v173
  %v398 = vunpack.c.l.b16 %v174
  %v399 = vunpack.c.l.b16 %v175
  %v400 = vunpack.c.l.b16 %v176
  %v401 = vunpack.c.l.b16 %v177
  %v402 = vunpack.c.l.b16 %v178
  %v403 = vunpack.c.l.b16 %v179
  %v404 = vunpack.c.l.b16 %v180
  %v405 = vunpack.c.l.b16 %v181
  %v406 = vunpack.c.l.b16 %v182
  %v407 = vunpack.c.l.b16 %v183
  %v408 = vunpack.c.l.b16 %v184
  %v409 = vunpack.c.l.b16 %v185
  %v410 = vunpack.c.l.b16 %v186
  %v411 = vunpack.c.l.b16 %v187
  %v412 = vunpack.c.l.b16 %v188
  %v413 = vunpack.c.l.b16 %v189
  %v414 = vunpack.c.l.b16 %v190
  %v415 = vunpack.c.l.b16 %v191
  %v416 = vunpack.c.l.b16 %v192
  %v417 = vunpack.c.l.b16 %v193
  %v418 = vunpack.c.l.b16 %v194
  %v419 = vpack.c.b16 %v388, %v387
  %v420 = vpack.c.b16 %v390, %v389
  %v421 = vpack.c.b16 %v392, %v391
  %v422 = vpack.c.b16 %v394, %v393
  %v423 = vpack.c.b16 %v396, %v395
  %v424 = vpack.c.b16 %v398, %v397
  %v425 = vpack.c.b16 %v400, %v399
  %v426 = vpack.c.b16 %v402, %v401
  %v427 = vpack.c.b16 %v404, %v403
  %v428 = vpack.c.b16 %v406, %v405
  %v429 = vpack.c.b16 %v408, %v407
  %v430 = vpack.c.b16 %v410, %v409
  %v431 = vpack.c.b16 %v412, %v411
  %v432 = vpack.c.b16 %v414, %v413
  %v433 = vpack.c.b16 %v416, %v415
  %v434 = vpack.c.b16 %v418, %v417
  %451 = vmatprep.subr.bf16.mxu0 0
  %452 = vmatpush1.bf16.msra.mxu0 %v419
  %453 = vmatprep.subr.bf16.mxu0 0
  %454 = vmatpush1.bf16.msra.mxu0 %v420
  %455 = vmatprep.subr.bf16.mxu0 0
  %456 = vmatpush1.bf16.msra.mxu0 %v421
  %457 = vmatprep.subr.bf16.mxu0 0
  %458 = vmatpush1.bf16.msra.mxu0 %v422
  %459 = vmatprep.subr.bf16.mxu0 0
  %460 = vmatpush1.bf16.msra.mxu0 %v423
  %461 = vmatprep.subr.bf16.mxu0 0
  %462 = vmatpush1.bf16.msra.mxu0 %v424
  %463 = vmatprep.subr.bf16.mxu0 0
  %464 = vmatpush1.bf16.msra.mxu0 %v425
  %465 = vmatprep.subr.bf16.mxu0 0
  %466 = vmatpush1.bf16.msra.mxu0 %v426
  %467 = vmatprep.subr.bf16.mxu0 0
  %468 = vmatpush1.bf16.msra.mxu0 %v427
  %469 = vmatprep.subr.bf16.mxu0 0
  %470 = vmatpush1.bf16.msra.mxu0 %v428
  %471 = vmatprep.subr.bf16.mxu0 0
  %472 = vmatpush1.bf16.msra.mxu0 %v429
  %473 = vmatprep.subr.bf16.mxu0 0
  %474 = vmatpush1.bf16.msra.mxu0 %v430
  %475 = vmatprep.subr.bf16.mxu0 0
  %476 = vmatpush1.bf16.msra.mxu0 %v431
  %477 = vmatprep.subr.bf16.mxu0 0
  %478 = vmatpush1.bf16.msra.mxu0 %v432
  %479 = vmatprep.subr.bf16.mxu0 0
  %480 = vmatpush1.bf16.msra.mxu0 %v433
  %481 = vmatprep.subr.bf16.mxu0 0
  %482 = vmatpush1.bf16.msra.mxu0 %v434
  %483 = vmatprep.mubr.bf16.mxu0 %v292
  %484 = vmatmul.mubr.bf16.gmra.mrb[0].mxu0 %v291
  %v485 = vpop.f32.mrb[0].mxu0
  %v486 = vadd.f32 0.0, %v485
  %v487 = vpop.f32.mrb[0].mxu0
  %v488 = vpop.f32.mrb[0].mxu0
  %v489 = vadd.f32 0.0, %v488
  %v490 = vpop.f32.mrb[0].mxu0
  %491 = vmatprep.mubr.bf16.mxu0 %v294
  %492 = vmatmul.mubr.bf16.gmra.mrb[0].mxu0 %v293
  %v493 = vpop.f32.mrb[0].mxu0
  %v494 = vadd.f32 0.0, %v493
  %v495 = vpop.f32.mrb[0].mxu0
  %v496 = vpop.f32.mrb[0].mxu0
  %v497 = vadd.f32 0.0, %v496
  %v498 = vpop.f32.mrb[0].mxu0
  %499 = vmatprep.mubr.bf16.mxu0 %v296
  %500 = vmatmul.mubr.bf16.gmra.mrb[0].mxu0 %v295
  %v501 = vpop.f32.mrb[0].mxu0
  %v502 = vadd.f32 0.0, %v501
  %v503 = vpop.f32.mrb[0].mxu0
  %v504 = vpop.f32.mrb[0].mxu0
  %v505 = vadd.f32 0.0, %v504
  %v506 = vpop.f32.mrb[0].mxu0
  %507 = vmatprep.mubr.bf16.mxu0 %v298
  %508 = vmatmul.mubr.bf16.gmra.mrb[0].mxu0 %v297
  %v509 = vpop.f32.mrb[0].mxu0
  %v510 = vadd.f32 0.0, %v509
  %v511 = vpop.f32.mrb[0].mxu0
  %v512 = vpop.f32.mrb[0].mxu0
  %v513 = vadd.f32 0.0, %v512
  %v514 = vpop.f32.mrb[0].mxu0
  %515 = vmatprep.mubr.bf16.mxu0 %v300
  %516 = vmatmul.mubr.bf16.gmra.mrb[0].mxu0 %v299
  %v517 = vpop.f32.mrb[0].mxu0
  %v518 = vadd.f32 0.0, %v517
  %v519 = vpop.f32.mrb[0].mxu0
  %v520 = vpop.f32.mrb[0].mxu0
  %v521 = vadd.f32 0.0, %v520
  %v522 = vpop.f32.mrb[0].mxu0
  %523 = vmatprep.mubr.bf16.mxu0 %v302
  %524 = vmatmul.mubr.bf16.gmra.mrb[0].mxu0 %v301
  %v525 = vpop.f32.mrb[0].mxu0
  %v526 = vadd.f32 0.0, %v525
  %v527 = vpop.f32.mrb[0].mxu0
  %v528 = vpop.f32.mrb[0].mxu0
  %v529 = vadd.f32 0.0, %v528
  %v530 = vpop.f32.mrb[0].mxu0
  %531 = vmatprep.mubr.bf16.mxu0 %v304
  %532 = vmatmul.mubr.bf16.gmra.mrb[0].mxu0 %v303
  %v533 = vpop.f32.mrb[0].mxu0
  %v534 = vadd.f32 0.0, %v533
  %v535 = vpop.f32.mrb[0].mxu0
  %v536 = vpop.f32.mrb[0].mxu0
  %v537 = vadd.f32 0.0, %v536
  %v538 = vpop.f32.mrb[0].mxu0
  %539 = vmatprep.mubr.bf16.mxu0 %v306
  %540 = vmatmul.mubr.bf16.gmra.mrb[0].mxu0 %v305
  %v541 = vpop.f32.mrb[0].mxu0
  %v542 = vadd.f32 0.0, %v541
  %v543 = vpop.f32.mrb[0].mxu0
  %v544 = vpop.f32.mrb[0].mxu0
  %v545 = vadd.f32 0.0, %v544
  %v546 = vpop.f32.mrb[0].mxu0
  %547 = vmatprep.mubr.bf16.mxu0 %v308
  %548 = vmatmul.mubr.bf16.gmra.mrb[0].mxu0 %v307
  %v549 = vpop.f32.mrb[0].mxu0
  %v550 = vadd.f32 0.0, %v549
  %v551 = vpop.f32.mrb[0].mxu0
  %v552 = vpop.f32.mrb[0].mxu0
  %v553 = vadd.f32 0.0, %v552
  %v554 = vpop.f32.mrb[0].mxu0
  %555 = vmatprep.mubr.bf16.mxu0 %v310
  %556 = vmatmul.mubr.bf16.gmra.mrb[0].mxu0 %v309
  %v557 = vpop.f32.mrb[0].mxu0
  %v558 = vadd.f32 0.0, %v557
  %v559 = vpop.f32.mrb[0].mxu0
  %v560 = vpop.f32.mrb[0].mxu0
  %v561 = vadd.f32 0.0, %v560
  %v562 = vpop.f32.mrb[0].mxu0
  %563 = vmatprep.mubr.bf16.mxu0 %v312
  %564 = vmatmul.mubr.bf16.gmra.mrb[0].mxu0 %v311
  %v565 = vpop.f32.mrb[0].mxu0
  %v566 = vadd.f32 0.0, %v565
  %v567 = vpop.f32.mrb[0].mxu0
  %v568 = vpop.f32.mrb[0].mxu0
  %v569 = vadd.f32 0.0, %v568
  %v570 = vpop.f32.mrb[0].mxu0
  %571 = vmatprep.mubr.bf16.mxu0 %v314
  %572 = vmatmul.mubr.bf16.gmra.mrb[0].mxu0 %v313
  %v573 = vpop.f32.mrb[0].mxu0
  %v574 = vadd.f32 0.0, %v573
  %v575 = vpop.f32.mrb[0].mxu0
  %v576 = vpop.f32.mrb[0].mxu0
  %v577 = vadd.f32 0.0, %v576
  %v578 = vpop.f32.mrb[0].mxu0
  %579 = vmatprep.mubr.bf16.mxu0 %v316
  %580 = vmatmul.mubr.bf16.gmra.mrb[0].mxu0 %v315
  %v581 = vpop.f32.mrb[0].mxu0
  %v582 = vadd.f32 0.0, %v581
  %v583 = vpop.f32.mrb[0].mxu0
  %v584 = vpop.f32.mrb[0].mxu0
  %v585 = vadd.f32 0.0, %v584
  %v586 = vpop.f32.mrb[0].mxu0
  %587 = vmatprep.mubr.bf16.mxu0 %v318
  %588 = vmatmul.mubr.bf16.gmra.mrb[0].mxu0 %v317
  %v589 = vpop.f32.mrb[0].mxu0
  %v590 = vadd.f32 0.0, %v589
  %v591 = vpop.f32.mrb[0].mxu0
  %v592 = vpop.f32.mrb[0].mxu0
  %v593 = vadd.f32 0.0, %v592
  %v594 = vpop.f32.mrb[0].mxu0
  %595 = vmatprep.mubr.bf16.mxu0 %v320
  %596 = vmatmul.mubr.bf16.gmra.mrb[0].mxu0 %v319
  %v597 = vpop.f32.mrb[0].mxu0
  %v598 = vadd.f32 0.0, %v597
  %v599 = vpop.f32.mrb[0].mxu0
  %v600 = vpop.f32.mrb[0].mxu0
  %v601 = vadd.f32 0.0, %v600
  %v602 = vpop.f32.mrb[0].mxu0
  %603 = vmatprep.mubr.bf16.mxu0 %v322
  %604 = vmatmul.mubr.bf16.gmra.mrb[0].mxu0 %v321
  %v605 = vpop.f32.mrb[0].mxu0
  %v606 = vadd.f32 0.0, %v605
  %v607 = vpop.f32.mrb[0].mxu0
  %v608 = vpop.f32.mrb[0].mxu0
  %v609 = vadd.f32 0.0, %v608
  %v610 = vpop.f32.mrb[0].mxu0
  %611 = vdwg.mxu0
  %v612 = vadd.f32 %v131, %v486
  %v613 = vadd.f32 %v132, %v489
  %v614 = vadd.f32 %v133, %v494
  %v615 = vadd.f32 %v134, %v497
  %v616 = vadd.f32 %v135, %v502
  %v617 = vadd.f32 %v136, %v505
  %v618 = vadd.f32 %v137, %v510
  %v619 = vadd.f32 %v138, %v513
  %v620 = vadd.f32 %v139, %v518
  %v621 = vadd.f32 %v140, %v521
  %v622 = vadd.f32 %v141, %v526
  %v623 = vadd.f32 %v142, %v529
  %v624 = vadd.f32 %v143, %v534
  %v625 = vadd.f32 %v144, %v537
  %v626 = vadd.f32 %v145, %v542
  %v627 = vadd.f32 %v146, %v545
  %v628 = vadd.f32 %v147, %v550
  %v629 = vadd.f32 %v148, %v553
  %v630 = vadd.f32 %v149, %v558
  %v631 = vadd.f32 %v150, %v561
  %v632 = vadd.f32 %v151, %v566
  %v633 = vadd.f32 %v152, %v569
  %v634 = vadd.f32 %v153, %v574
  %v635 = vadd.f32 %v154, %v577
  %v636 = vadd.f32 %v155, %v582
  %v637 = vadd.f32 %v156, %v585
  %v638 = vadd.f32 %v157, %v590
  %v639 = vadd.f32 %v158, %v593
  %v640 = vadd.f32 %v159, %v598
  %v641 = vadd.f32 %v160, %v601
  %v642 = vadd.f32 %v161, %v606
  %v643 = vadd.f32 %v162, %v609
  %644 = vst [vmem:[#allocation2] sm:$0xff] %v612
  %645 = vst [vmem:[#allocation2 + $0x8] sm:$0xff] %v613
  %646 = vst [vmem:[#allocation2 + $0x10] sm:$0xff] %v614
  %647 = vst [vmem:[#allocation2 + $0x18] sm:$0xff] %v615
  %648 = vst [vmem:[#allocation2 + $0x20] sm:$0xff] %v616
  %649 = vst [vmem:[#allocation2 + $0x28] sm:$0xff] %v617
  %650 = vst [vmem:[#allocation2 + $0x30] sm:$0xff] %v618
  %651 = vst [vmem:[#allocation2 + $0x38] sm:$0xff] %v619
  %652 = vst [vmem:[#allocation2 + $0x40] sm:$0xff] %v620
  %653 = vst [vmem:[#allocation2 + $0x48] sm:$0xff] %v621
  %654 = vst [vmem:[#allocation2 + $0x50] sm:$0xff] %v622
  %655 = vst [vmem:[#allocation2 + $0x58] sm:$0xff] %v623
  %656 = vst [vmem:[#allocation2 + $0x60] sm:$0xff] %v624
  %657 = vst [vmem:[#allocation2 + $0x68] sm:$0xff] %v625
  %658 = vst [vmem:[#allocation2 + $0x70] sm:$0xff] %v626
  %659 = vst [vmem:[#allocation2 + $0x78] sm:$0xff] %v627
  %660 = vst [vmem:[#allocation2 + $0x80] sm:$0xff] %v628
  %661 = vst [vmem:[#allocation2 + $0x88] sm:$0xff] %v629
  %662 = vst [vmem:[#allocation2 + $0x90] sm:$0xff] %v630
  %663 = vst [vmem:[#allocation2 + $0x98] sm:$0xff] %v631
  %664 = vst [vmem:[#allocation2 + $0xa0] sm:$0xff] %v632
  %665 = vst [vmem:[#allocation2 + $0xa8] sm:$0xff] %v633
  %666 = vst [vmem:[#allocation2 + $0xb0] sm:$0xff] %v634
  %667 = vst [vmem:[#allocation2 + $0xb8] sm:$0xff] %v635
  %668 = vst [vmem:[#allocation2 + $0xc0] sm:$0xff] %v636
  %669 = vst [vmem:[#allocation2 + $0xc8] sm:$0xff] %v637
  %670 = vst [vmem:[#allocation2 + $0xd0] sm:$0xff] %v638
  %671 = vst [vmem:[#allocation2 + $0xd8] sm:$0xff] %v639
  %672 = vst [vmem:[#allocation2 + $0xe0] sm:$0xff] %v640
  %673 = vst [vmem:[#allocation2 + $0xe8] sm:$0xff] %v641
  %674 = vst [vmem:[#allocation2 + $0xf0] sm:$0xff] %v642
  %675 = vst [vmem:[#allocation2 + $0xf8] sm:$0xff] %v643
  %v676 = vld [vmem:[#allocation3] sm:$0xff]
  %v677 = vld [vmem:[#allocation3 + $0x8] sm:$0xff]
  %v678 = vld [vmem:[#allocation3 + $0x10] sm:$0xff]
  %v679 = vld [vmem:[#allocation3 + $0x18] sm:$0xff]
  %v680 = vld [vmem:[%s2] sm:$0xff]
  %v681 = vld [vmem:[%s2 + $0x8] sm:$0xff]
  %v684 = vunpack.c.l.b16 %v680
  %v685 = vunpack.c.h.b16 %v680
  %v686 = vunpack.c.l.b16 %v681
  %v687 = vunpack.c.h.b16 %v681
  %v688 = vpack.c.b16 %v686, %v684
  %v689 = vpack.c.b16 %v687, %v685
  %692 = vmatprep.subr.bf16.mxu0 %v292
  %693 = vmatpush1.bf16.xpose.msra.mxu0 %v291
  %694 = vmatprep.subr.bf16.mxu0 %v294
  %695 = vmatpush1.bf16.xpose.msra.mxu0 %v293
  %696 = vmatprep.subr.bf16.mxu0 %v296
  %697 = vmatpush1.bf16.xpose.msra.mxu0 %v295
  %698 = vmatprep.subr.bf16.mxu0 %v298
  %699 = vmatpush1.bf16.xpose.msra.mxu0 %v297
  %700 = vmatprep.subr.bf16.mxu0 %v300
  %701 = vmatpush1.bf16.xpose.msra.mxu0 %v299
  %702 = vmatprep.subr.bf16.mxu0 %v302
  %703 = vmatpush1.bf16.xpose.msra.mxu0 %v301
  %704 = vmatprep.subr.bf16.mxu0 %v304
  %705 = vmatpush1.bf16.xpose.msra.mxu0 %v303
  %706 = vmatprep.subr.bf16.mxu0 %v306
  %707 = vmatpush1.bf16.xpose.msra.mxu0 %v305
  %708 = vmatprep.subr.bf16.mxu0 %v308
  %709 = vmatpush1.bf16.xpose.msra.mxu0 %v307
  %710 = vmatprep.subr.bf16.mxu0 %v310
  %711 = vmatpush1.bf16.xpose.msra.mxu0 %v309
  %712 = vmatprep.subr.bf16.mxu0 %v312
  %713 = vmatpush1.bf16.xpose.msra.mxu0 %v311
  %714 = vmatprep.subr.bf16.mxu0 %v314
  %715 = vmatpush1.bf16.xpose.msra.mxu0 %v313
  %716 = vmatprep.subr.bf16.mxu0 %v316
  %717 = vmatpush1.bf16.xpose.msra.mxu0 %v315
  %718 = vmatprep.subr.bf16.mxu0 %v318
  %719 = vmatpush1.bf16.xpose.msra.mxu0 %v317
  %720 = vmatprep.subr.bf16.mxu0 %v320
  %721 = vmatpush1.bf16.xpose.msra.mxu0 %v319
  %722 = vmatprep.subr.bf16.mxu0 %v322
  %723 = vmatpush1.bf16.xpose.msra.mxu0 %v321
  %724 = vmatprep.mubr.bf16.mxu0 %v689
  %725 = vmatmul.mubr.bf16.gmra.mrb[0].mxu0 %v688
  %v726 = vpop.f32.mrb[0].mxu0
  %v727 = vadd.f32 0.0, %v726
  %v728 = vpop.f32.mrb[0].mxu0
  %v729 = vadd.f32 0.0, %v728
  %v730 = vpop.f32.mrb[0].mxu0
  %v731 = vadd.f32 0.0, %v730
  %v732 = vpop.f32.mrb[0].mxu0
  %v733 = vadd.f32 0.0, %v732
  %734 = vdwg.mxu0
  %v735 = vadd.f32 %v676, %v727
  %v736 = vadd.f32 %v677, %v729
  %v737 = vadd.f32 %v678, %v731
  %v738 = vadd.f32 %v679, %v733
  %739 = vst [vmem:[#allocation3] sm:$0xff] %v735
  %740 = vst [vmem:[#allocation3 + $0x8] sm:$0xff] %v736
  %741 = vst [vmem:[#allocation3 + $0x10] sm:$0xff] %v737
  %742 = vst [vmem:[#allocation3 + $0x18] sm:$0xff] %v738
  // Predicated region
  $region34: #{pose_gcn_forward.3} parent=0 // pred_check
    %p743 = pneg %p27
  $region35: #{pose_gcn_forward.3} parent=0 // pred_check_branch
    %745 = sbr.rel (%p743) target = $region37
  $region36: #{pose_gcn_forward.3} parent=0 // pred_region
    %v746 = vld [vmem:[%s3] sm:$0xff]
    %v747 = vld [vmem:[%s3 + $0x8] sm:$0xff]
    %v748 = vld [vmem:[%s3 + $0x10] sm:$0xff]
    %v749 = vld [vmem:[%s3 + $0x18] sm:$0xff]
    %v750 = vld [vmem:[%s3 + $0x20] sm:$0xff]
    %v751 = vld [vmem:[%s3 + $0x28] sm:$0xff]
    %v752 = vld [vmem:[%s3 + $0x30] sm:$0xff]
    %v753 = vld [vmem:[%s3 + $0x38] sm:$0xff]
    %v754 = vld [vmem:[%s3 + $0x40] sm:$0xff]
    %v755 = vld [vmem:[%s3 + $0x48] sm:$0xff]
    %v756 = vld [vmem:[%s3 + $0x50] sm:$0xff]
    %v757 = vld [vmem:[%s3 + $0x58] sm:$0xff]
    %v758 = vld [vmem:[%s3 + $0x60] sm:$0xff]
    %v759 = vld [vmem:[%s3 + $0x68] sm:$0xff]
    %v760 = vld [vmem:[%s3 + $0x70] sm:$0xff]
    %v761 = vld [vmem:[%s3 + $0x78] sm:$0xff]
    %v762 = vld [vmem:[%s3 + $0x80] sm:$0xff]
    %v763 = vld [vmem:[%s3 + $0x88] sm:$0xff]
    %v764 = vld [vmem:[%s3 + $0x90] sm:$0xff]
    %v765 = vld [vmem:[%s3 + $0x98] sm:$0xff]
    %v766 = vld [vmem:[%s3 + $0xa0] sm:$0xff]
    %v767 = vld [vmem:[%s3 + $0xa8] sm:$0xff]
    %v768 = vld [vmem:[%s3 + $0xb0] sm:$0xff]
    %v769 = vld [vmem:[%s3 + $0xb8] sm:$0xff]
    %v770 = vld [vmem:[%s3 + $0xc0] sm:$0xff]
    %v771 = vld [vmem:[%s3 + $0xc8] sm:$0xff]
    %v772 = vld [vmem:[%s3 + $0xd0] sm:$0xff]
    %v773 = vld [vmem:[%s3 + $0xd8] sm:$0xff]
    %v774 = vld [vmem:[%s3 + $0xe0] sm:$0xff]
    %v775 = vld [vmem:[%s3 + $0xe8] sm:$0xff]
    %v776 = vld [vmem:[%s3 + $0xf0] sm:$0xff]
    %v777 = vld [vmem:[%s3 + $0xf8] sm:$0xff]
    %v778 = vld [vmem:[#allocation2] sm:$0xff]
    %v779 = vld [vmem:[#allocation2 + $0x8] sm:$0xff]
    %v780 = vld [vmem:[#allocation2 + $0x10] sm:$0xff]
    %v781 = vld [vmem:[#allocation2 + $0x18] sm:$0xff]
    %v782 = vld [vmem:[#allocation2 + $0x20] sm:$0xff]
    %v783 = vld [vmem:[#allocation2 + $0x28] sm:$0xff]
    %v784 = vld [vmem:[#allocation2 + $0x30] sm:$0xff]
    %v785 = vld [vmem:[#allocation2 + $0x38] sm:$0xff]
    %v786 = vld [vmem:[#allocation2 + $0x40] sm:$0xff]
    %v787 = vld [vmem:[#allocation2 + $0x48] sm:$0xff]
    %v788 = vld [vmem:[#allocation2 + $0x50] sm:$0xff]
    %v789 = vld [vmem:[#allocation2 + $0x58] sm:$0xff]
    %v790 = vld [vmem:[#allocation2 + $0x60] sm:$0xff]
    %v791 = vld [vmem:[#allocation2 + $0x68] sm:$0xff]
    %v792 = vld [vmem:[#allocation2 + $0x70] sm:$0xff]
    %v793 = vld [vmem:[#allocation2 + $0x78] sm:$0xff]
    %v794 = vld [vmem:[#allocation2 + $0x80] sm:$0xff]
    %v795 = vld [vmem:[#allocation2 + $0x88] sm:$0xff]
    %v796 = vld [vmem:[#allocation2 + $0x90] sm:$0xff]
    %v797 = vld [vmem:[#allocation2 + $0x98] sm:$0xff]
    %v798 = vld [vmem:[#allocation2 + $0xa0] sm:$0xff]
    %v799 = vld [vmem:[#allocation2 + $0xa8] sm:$0xff]
    %v800 = vld [vmem:[#allocation2 + $0xb0] sm:$0xff]
    %v801 = vld [vmem:[#allocation2 + $0xb8] sm:$0xff]
    %v802 = vld [vmem:[#allocation2 + $0xc0] sm:$0xff]
    %v803 = vld [vmem:[#allocation2 + $0xc8] sm:$0xff]
    %v804 = vld [vmem:[#allocation2 + $0xd0] sm:$0xff]
    %v805 = vld [vmem:[#allocation2 + $0xd8] sm:$0xff]
    %v806 = vld [vmem:[#allocation2 + $0xe0] sm:$0xff]
    %v807 = vld [vmem:[#allocation2 + $0xe8] sm:$0xff]
    %v808 = vld [vmem:[#allocation2 + $0xf0] sm:$0xff]
    %v809 = vld [vmem:[#allocation2 + $0xf8] sm:$0xff]
    %v810 = vpack.c.bf16 %v779, %v778
    %v811 = vpack.c.bf16 %v781, %v780
    %v812 = vpack.c.bf16 %v783, %v782
    %v813 = vpack.c.bf16 %v785, %v784
    %v814 = vpack.c.bf16 %v787, %v786
    %v815 = vpack.c.bf16 %v789, %v788
    %v816 = vpack.c.bf16 %v791, %v790
    %v817 = vpack.c.bf16 %v793, %v792
    %v818 = vpack.c.bf16 %v795, %v794
    %v819 = vpack.c.bf16 %v797, %v796
    %v820 = vpack.c.bf16 %v799, %v798
    %v821 = vpack.c.bf16 %v801, %v800
    %v822 = vpack.c.bf16 %v803, %v802
    %v823 = vpack.c.bf16 %v805, %v804
    %v824 = vpack.c.bf16 %v807, %v806
    %v825 = vpack.c.bf16 %v809, %v808
    %v826 = vld [vmem:[%s4] sm:$0xf]
    %v827 = vld [vmem:[%s4 + $0x4] sm:$0xf]
    %v828 = vld [vmem:[%s4 + $0x8] sm:$0xf]
    %v829 = vld [vmem:[%s4 + $0xc] sm:$0xf]
    %v830 = vld [vmem:[%s4 + $0x10] sm:$0xf]
    %v831 = vld [vmem:[%s4 + $0x14] sm:$0xf]
    %v832 = vld [vmem:[%s4 + $0x18] sm:$0xf]
    %v833 = vld [vmem:[%s4 + $0x1c] sm:$0xf]
    %v834 = vld [vmem:[%s4 + $0x20] sm:$0xf]
    %v835 = vld [vmem:[%s4 + $0x24] sm:$0xf]
    %v836 = vld [vmem:[%s4 + $0x28] sm:$0xf]
    %v837 = vld [vmem:[%s4 + $0x2c] sm:$0xf]
    %v838 = vld [vmem:[%s4 + $0x30] sm:$0xf]
    %v839 = vld [vmem:[%s4 + $0x34] sm:$0xf]
    %v840 = vld [vmem:[%s4 + $0x38] sm:$0xf]
    %v841 = vld [vmem:[%s4 + $0x3c] sm:$0xf]
    %v858 = vunpack.c.l.b16 %v826
    %v859 = vunpack.c.l.b16 %v827
    %v860 = vunpack.c.l.b16 %v828
    %v861 = vunpack.c.l.b16 %v829
    %v862 = vunpack.c.l.b16 %v830
    %v863 = vunpack.c.l.b16 %v831
    %v864 = vunpack.c.l.b16 %v832
    %v865 = vunpack.c.l.b16 %v833
    %v866 = vunpack.c.l.b16 %v834
    %v867 = vunpack.c.l.b16 %v835
    %v868 = vunpack.c.l.b16 %v836
    %v869 = vunpack.c.l.b16 %v837
    %v870 = vunpack.c.l.b16 %v838
    %v871 = vunpack.c.l.b16 %v839
    %v872 = vunpack.c.l.b16 %v840
    %v873 = vunpack.c.l.b16 %v841
    %v874 = vpack.c.b16 %v859, %v858
    %v875 = vpack.c.b16 %v861, %v860
    %v876 = vpack.c.b16 %v863, %v862
    %v877 = vpack.c.b16 %v865, %v864
    %v878 = vpack.c.b16 %v867, %v866
    %v879 = vpack.c.b16 %v869, %v868
    %v880 = vpack.c.b16 %v871, %v870
    %v881 = vpack.c.b16 %v873, %v872
    %890 = vmatprep.subr.bf16.mxu0 0
    %891 = vmatpush1.bf16.msra.mxu0 %v874
    %892 = vmatprep.subr.bf16.mxu0 0
    %893 = vmatpush1.bf16.msra.mxu0 %v875
    %894 = vmatprep.subr.bf16.mxu0 0
    %895 = vmatpush1.bf16.msra.mxu0 %v876
    %896 = vmatprep.subr.bf16.mxu0 0
    %897 = vmatpush1.bf16.msra.mxu0 %v877
    %898 = vmatprep.subr.bf16.mxu0 0
    %899 = vmatpush1.bf16.msra.mxu0 %v878
    %900 = vmatprep.subr.bf16.mxu0 0
    %901 = vmatpush1.bf16.msra.mxu0 %v879
    %902 = vmatprep.subr.bf16.mxu0 0
    %903 = vmatpush1.bf16.msra.mxu0 %v880
    %904 = vmatprep.subr.bf16.mxu0 0
    %905 = vmatpush1.bf16.msra.mxu0 %v881
    %906 = vmatprep.subr.bf16.mxu0 0
    %907 = vmatpush1.bf16.msra.mxu0 0
    %908 = vmatprep.subr.bf16.mxu0 0
    %909 = vmatpush1.bf16.msra.mxu0 0
    %910 = vmatprep.subr.bf16.mxu0 0
    %911 = vmatpush1.bf16.msra.mxu0 0
    %912 = vmatprep.subr.bf16.mxu0 0
    %913 = vmatpush1.bf16.msra.mxu0 0
    %914 = vmatprep.subr.bf16.mxu0 0
    %915 = vmatpush1.bf16.msra.mxu0 0
    %916 = vmatprep.subr.bf16.mxu0 0
    %917 = vmatpush1.bf16.msra.mxu0 0
    %918 = vmatprep.subr.bf16.mxu0 0
    %919 = vmatpush1.bf16.msra.mxu0 0
    %920 = vmatprep.subr.bf16.mxu0 0
    %921 = vmatpush1.bf16.msra.mxu0 0
    %922 = vmatprep.mubr.bf16.mxu0 0
    %923 = vmatmul.mubr.bf16.gmra.mrb[0].mxu0 %v810
    %v924 = vpop.f32.mrb[0].mxu0
    %v925 = vadd.f32 0.0, %v924
    %v926 = vpop.f32.mrb[0].mxu0
    %v927 = vpop.f32.mrb[0].mxu0
    %v928 = vadd.f32 0.0, %v927
    %v929 = vpop.f32.mrb[0].mxu0
    %930 = vmatprep.mubr.bf16.mxu0 0
    %931 = vmatmul.mubr.bf16.gmra.mrb[0].mxu0 %v811
    %v932 = vpop.f32.mrb[0].mxu0
    %v933 = vadd.f32 0.0, %v932
    %v934 = vpop.f32.mrb[0].mxu0
    %v935 = vpop.f32.mrb[0].mxu0
    %v936 = vadd.f32 0.0, %v935
    %v937 = vpop.f32.mrb[0].mxu0
    %938 = vmatprep.mubr.bf16.mxu0 0
    %939 = vmatmul.mubr.bf16.gmra.mrb[0].mxu0 %v812
    %v940 = vpop.f32.mrb[0].mxu0
    %v941 = vadd.f32 0.0, %v940
    %v942 = vpop.f32.mrb[0].mxu0
    %v943 = vpop.f32.mrb[0].mxu0
    %v944 = vadd.f32 0.0, %v943
    %v945 = vpop.f32.mrb[0].mxu0
    %946 = vmatprep.mubr.bf16.mxu0 0
    %947 = vmatmul.mubr.bf16.gmra.mrb[0].mxu0 %v813
    %v948 = vpop.f32.mrb[0].mxu0
    %v949 = vadd.f32 0.0, %v948
    %v950 = vpop.f32.mrb[0].mxu0
    %v951 = vpop.f32.mrb[0].mxu0
    %v952 = vadd.f32 0.0, %v951
    %v953 = vpop.f32.mrb[0].mxu0
    %954 = vmatprep.mubr.bf16.mxu0 0
    %955 = vmatmul.mubr.bf16.gmra.mrb[0].mxu0 %v814
    %v956 = vpop.f32.mrb[0].mxu0
    %v957 = vadd.f32 0.0, %v956
    %v958 = vpop.f32.mrb[0].mxu0
    %v959 = vpop.f32.mrb[0].mxu0
    %v960 = vadd.f32 0.0, %v959
    %v961 = vpop.f32.mrb[0].mxu0
    %962 = vmatprep.mubr.bf16.mxu0 0
    %963 = vmatmul.mubr.bf16.gmra.mrb[0].mxu0 %v815
    %v964 = vpop.f32.mrb[0].mxu0
    %v965 = vadd.f32 0.0, %v964
    %v966 = vpop.f32.mrb[0].mxu0
    %v967 = vpop.f32.mrb[0].mxu0
    %v968 = vadd.f32 0.0, %v967
    %v969 = vpop.f32.mrb[0].mxu0
    %970 = vmatprep.mubr.bf16.mxu0 0
    %971 = vmatmul.mubr.bf16.gmra.mrb[0].mxu0 %v816
    %v972 = vpop.f32.mrb[0].mxu0
    %v973 = vadd.f32 0.0, %v972
    %v974 = vpop.f32.mrb[0].mxu0
    %v975 = vpop.f32.mrb[0].mxu0
    %v976 = vadd.f32 0.0, %v975
    %v977 = vpop.f32.mrb[0].mxu0
    %978 = vmatprep.mubr.bf16.mxu0 0
    %979 = vmatmul.mubr.bf16.gmra.mrb[0].mxu0 %v817
    %v980 = vpop.f32.mrb[0].mxu0
    %v981 = vadd.f32 0.0, %v980
    %v982 = vpop.f32.mrb[0].mxu0
    %v983 = vpop.f32.mrb[0].mxu0
    %v984 = vadd.f32 0.0, %v983
    %v985 = vpop.f32.mrb[0].mxu0
    %986 = vmatprep.mubr.bf16.mxu0 0
    %987 = vmatmul.mubr.bf16.gmra.mrb[0].mxu0 %v818
    %v988 = vpop.f32.mrb[0].mxu0
    %v989 = vadd.f32 0.0, %v988
    %v990 = vpop.f32.mrb[0].mxu0
    %v991 = vpop.f32.mrb[0].mxu0
    %v992 = vadd.f32 0.0, %v991
    %v993 = vpop.f32.mrb[0].mxu0
    %994 = vmatprep.mubr.bf16.mxu0 0
    %995 = vmatmul.mubr.bf16.gmra.mrb[0].mxu0 %v819
    %v996 = vpop.f32.mrb[0].mxu0
    %v997 = vadd.f32 0.0, %v996
    %v998 = vpop.f32.mrb[0].mxu0
    %v999 = vpop.f32.mrb[0].mxu0
    %v1000 = vadd.f32 0.0, %v999
    %v1001 = vpop.f32.mrb[0].mxu0
    %1002 = vmatprep.mubr.bf16.mxu0 0
    %1003 = vmatmul.mubr.bf16.gmra.mrb[0].mxu0 %v820
    %v1004 = vpop.f32.mrb[0].mxu0
    %v1005 = vadd.f32 0.0, %v1004
    %v1006 = vpop.f32.mrb[0].mxu0
    %v1007 = vpop.f32.mrb[0].mxu0
    %v1008 = vadd.f32 0.0, %v1007
    %v1009 = vpop.f32.mrb[0].mxu0
    %1010 = vmatprep.mubr.bf16.mxu0 0
    %1011 = vmatmul.mubr.bf16.gmra.mrb[0].mxu0 %v821
    %v1012 = vpop.f32.mrb[0].mxu0
    %v1013 = vadd.f32 0.0, %v1012
    %v1014 = vpop.f32.mrb[0].mxu0
    %v1015 = vpop.f32.mrb[0].mxu0
    %v1016 = vadd.f32 0.0, %v1015
    %v1017 = vpop.f32.mrb[0].mxu0
    %1018 = vmatprep.mubr.bf16.mxu0 0
    %1019 = vmatmul.mubr.bf16.gmra.mrb[0].mxu0 %v822
    %v1020 = vpop.f32.mrb[0].mxu0
    %v1021 = vadd.f32 0.0, %v1020
    %v1022 = vpop.f32.mrb[0].mxu0
    %v1023 = vpop.f32.mrb[0].mxu0
    %v1024 = vadd.f32 0.0, %v1023
    %v1025 = vpop.f32.mrb[0].mxu0
    %1026 = vmatprep.mubr.bf16.mxu0 0
    %1027 = vmatmul.mubr.bf16.gmra.mrb[0].mxu0 %v823
    %v1028 = vpop.f32.mrb[0].mxu0
    %v1029 = vadd.f32 0.0, %v1028
    %v1030 = vpop.f32.mrb[0].mxu0
    %v1031 = vpop.f32.mrb[0].mxu0
    %v1032 = vadd.f32 0.0, %v1031
    %v1033 = vpop.f32.mrb[0].mxu0
    %1034 = vmatprep.mubr.bf16.mxu0 0
    %1035 = vmatmul.mubr.bf16.gmra.mrb[0].mxu0 %v824
    %v1036 = vpop.f32.mrb[0].mxu0
    %v1037 = vadd.f32 0.0, %v1036
    %v1038 = vpop.f32.mrb[0].mxu0
    %v1039 = vpop.f32.mrb[0].mxu0
    %v1040 = vadd.f32 0.0, %v1039
    %v1041 = vpop.f32.mrb[0].mxu0
    %1042 = vmatprep.mubr.bf16.mxu0 0
    %1043 = vmatmul.mubr.bf16.gmra.mrb[0].mxu0 %v825
    %v1044 = vpop.f32.mrb[0].mxu0
    %v1045 = vadd.f32 0.0, %v1044
    %v1046 = vpop.f32.mrb[0].mxu0
    %v1047 = vpop.f32.mrb[0].mxu0
    %v1048 = vadd.f32 0.0, %v1047
    %v1049 = vpop.f32.mrb[0].mxu0
    %1050 = vdwg.mxu0
    %1052 = vset.pattern.permute.xlu0 0
    %1053 = vperm.xlu0 %1052, %v746
    %v1054 = vpop.permute.xlu0 %1053
    %1057 = vset.pattern.permute.xlu0 0
    %1058 = vperm.xlu0 %1057, %v747
    %v1059 = vpop.permute.xlu0 %1058
    %1062 = vset.pattern.permute.xlu0 0
    %1063 = vperm.xlu0 %1062, %v748
    %v1064 = vpop.permute.xlu0 %1063
    %1067 = vset.pattern.permute.xlu0 0
    %1068 = vperm.xlu0 %1067, %v749
    %v1069 = vpop.permute.xlu0 %1068
    %1072 = vset.pattern.permute.xlu0 0
    %1073 = vperm.xlu0 %1072, %v750
    %v1074 = vpop.permute.xlu0 %1073
    %1077 = vset.pattern.permute.xlu0 0
    %1078 = vperm.xlu0 %1077, %v751
    %v1079 = vpop.permute.xlu0 %1078
    %1082 = vset.pattern.permute.xlu0 0
    %1083 = vperm.xlu0 %1082, %v752
    %v1084 = vpop.permute.xlu0 %1083
    %1087 = vset.pattern.permute.xlu0 0
    %1088 = vperm.xlu0 %1087, %v753
    %v1089 = vpop.permute.xlu0 %1088
    %1092 = vset.pattern.permute.xlu0 0
    %1093 = vperm.xlu0 %1092, %v754
    %v1094 = vpop.permute.xlu0 %1093
    %1097 = vset.pattern.permute.xlu0 0
    %1098 = vperm.xlu0 %1097, %v755
    %v1099 = vpop.permute.xlu0 %1098
    %1102 = vset.pattern.permute.xlu0 0
    %1103 = vperm.xlu0 %1102, %v756
    %v1104 = vpop.permute.xlu0 %1103
    %1107 = vset.pattern.permute.xlu0 0
    %1108 = vperm.xlu0 %1107, %v757
    %v1109 = vpop.permute.xlu0 %1108
    %1112 = vset.pattern.permute.xlu0 0
    %1113 = vperm.xlu0 %1112, %v758
    %v1114 = vpop.permute.xlu0 %1113
    %1117 = vset.pattern.permute.xlu0 0
    %1118 = vperm.xlu0 %1117, %v759
    %v1119 = vpop.permute.xlu0 %1118
    %1122 = vset.pattern.permute.xlu0 0
    %1123 = vperm.xlu0 %1122, %v760
    %v1124 = vpop.permute.xlu0 %1123
    %1127 = vset.pattern.permute.xlu0 0
    %1128 = vperm.xlu0 %1127, %v761
    %v1129 = vpop.permute.xlu0 %1128
    %1132 = vset.pattern.permute.xlu0 0
    %1133 = vperm.xlu0 %1132, %v762
    %v1134 = vpop.permute.xlu0 %1133
    %1137 = vset.pattern.permute.xlu0 0
    %1138 = vperm.xlu0 %1137, %v763
    %v1139 = vpop.permute.xlu0 %1138
    %1142 = vset.pattern.permute.xlu0 0
    %1143 = vperm.xlu0 %1142, %v764
    %v1144 = vpop.permute.xlu0 %1143
    %1147 = vset.pattern.permute.xlu0 0
    %1148 = vperm.xlu0 %1147, %v765
    %v1149 = vpop.permute.xlu0 %1148
    %1152 = vset.pattern.permute.xlu0 0
    %1153 = vperm.xlu0 %1152, %v766
    %v1154 = vpop.permute.xlu0 %1153
    %1157 = vset.pattern.permute.xlu0 0
    %1158 = vperm.xlu0 %1157, %v767
    %v1159 = vpop.permute.xlu0 %1158
    %1162 = vset.pattern.permute.xlu0 0
    %1163 = vperm.xlu0 %1162, %v768
    %v1164 = vpop.permute.xlu0 %1163
    %1167 = vset.pattern.permute.xlu0 0
    %1168 = vperm.xlu0 %1167, %v769
    %v1169 = vpop.permute.xlu0 %1168
    %1172 = vset.pattern.permute.xlu0 0
    %1173 = vperm.xlu0 %1172, %v770
    %v1174 = vpop.permute.xlu0 %1173
    %1177 = vset.pattern.permute.xlu0 0
    %1178 = vperm.xlu0 %1177, %v771
    %v1179 = vpop.permute.xlu0 %1178
    %1182 = vset.pattern.permute.xlu0 0
    %1183 = vperm.xlu0 %1182, %v772
    %v1184 = vpop.permute.xlu0 %1183
    %1187 = vset.pattern.permute.xlu0 0
    %1188 = vperm.xlu0 %1187, %v773
    %v1189 = vpop.permute.xlu0 %1188
    %1192 = vset.pattern.permute.xlu0 0
    %1193 = vperm.xlu0 %1192, %v774
    %v1194 = vpop.permute.xlu0 %1193
    %1197 = vset.pattern.permute.xlu0 0
    %1198 = vperm.xlu0 %1197, %v775
    %v1199 = vpop.permute.xlu0 %1198
    %1202 = vset.pattern.permute.xlu0 0
    %1203 = vperm.xlu0 %1202, %v776
    %v1204 = vpop.permute.xlu0 %1203
    %1207 = vset.pattern.permute.xlu0 0
    %1208 = vperm.xlu0 %1207, %v777
    %v1209 = vpop.permute.xlu0 %1208
    %v1211 = vmul.f32 %v1054, %v925
    %v1212 = vmul.f32 %v1059, %v928
    %v1213 = vmul.f32 %v1064, %v933
    %v1214 = vmul.f32 %v1069, %v936
    %v1215 = vmul.f32 %v1074, %v941
    %v1216 = vmul.f32 %v1079, %v944
    %v1217 = vmul.f32 %v1084, %v949
    %v1218 = vmul.f32 %v1089, %v952
    %v1219 = vmul.f32 %v1094, %v957
    %v1220 = vmul.f32 %v1099, %v960
    %v1221 = vmul.f32 %v1104, %v965
    %v1222 = vmul.f32 %v1109, %v968
    %v1223 = vmul.f32 %v1114, %v973
    %v1224 = vmul.f32 %v1119, %v976
    %v1225 = vmul.f32 %v1124, %v981
    %v1226 = vmul.f32 %v1129, %v984
    %v1227 = vmul.f32 %v1134, %v989
    %v1228 = vmul.f32 %v1139, %v992
    %v1229 = vmul.f32 %v1144, %v997
    %v1230 = vmul.f32 %v1149, %v1000
    %v1231 = vmul.f32 %v1154, %v1005
    %v1232 = vmul.f32 %v1159, %v1008
    %v1233 = vmul.f32 %v1164, %v1013
    %v1234 = vmul.f32 %v1169, %v1016
    %v1235 = vmul.f32 %v1174, %v1021
    %v1236 = vmul.f32 %v1179, %v1024
    %v1237 = vmul.f32 %v1184, %v1029
    %v1238 = vmul.f32 %v1189, %v1032
    %v1239 = vmul.f32 %v1194, %v1037
    %v1240 = vmul.f32 %v1199, %v1040
    %v1241 = vmul.f32 %v1204, %v1045
    %v1242 = vmul.f32 %v1209, %v1048
    %v1243 = vld [vmem:[%s5] sm:$0x1]
    %v1245 = vlaneseq
    %v1246 = vshrl.u32 %v1245, 7
    %v1247 = vsub.s32 0, %v1246
    %v1248 = vrot.slane %v1243, %v1247
    %v1250 = vadd.f32 %v1211, %v1248
    %v1251 = vadd.f32 %v1212, %v1248
    %v1252 = vadd.f32 %v1213, %v1248
    %v1253 = vadd.f32 %v1214, %v1248
    %v1254 = vadd.f32 %v1215, %v1248
    %v1255 = vadd.f32 %v1216, %v1248
    %v1256 = vadd.f32 %v1217, %v1248
    %v1257 = vadd.f32 %v1218, %v1248
    %v1258 = vadd.f32 %v1219, %v1248
    %v1259 = vadd.f32 %v1220, %v1248
    %v1260 = vadd.f32 %v1221, %v1248
    %v1261 = vadd.f32 %v1222, %v1248
    %v1262 = vadd.f32 %v1223, %v1248
    %v1263 = vadd.f32 %v1224, %v1248
    %v1264 = vadd.f32 %v1225, %v1248
    %v1265 = vadd.f32 %v1226, %v1248
    %v1266 = vadd.f32 %v1227, %v1248
    %v1267 = vadd.f32 %v1228, %v1248
    %v1268 = vadd.f32 %v1229, %v1248
    %v1269 = vadd.f32 %v1230, %v1248
    %v1270 = vadd.f32 %v1231, %v1248
    %v1271 = vadd.f32 %v1232, %v1248
    %v1272 = vadd.f32 %v1233, %v1248
    %v1273 = vadd.f32 %v1234, %v1248
    %v1274 = vadd.f32 %v1235, %v1248
    %v1275 = vadd.f32 %v1236, %v1248
    %v1276 = vadd.f32 %v1237, %v1248
    %v1277 = vadd.f32 %v1238, %v1248
    %v1278 = vadd.f32 %v1239, %v1248
    %v1279 = vadd.f32 %v1240, %v1248
    %v1280 = vadd.f32 %v1241, %v1248
    %v1281 = vadd.f32 %v1242, %v1248
    %v1282 = vmax.f32 %v1250, 0.0
    %v1283 = vmax.f32 %v1251, 0.0
    %v1284 = vmax.f32 %v1252, 0.0
    %v1285 = vmax.f32 %v1253, 0.0
    %v1286 = vmax.f32 %v1254, 0.0
    %v1287 = vmax.f32 %v1255, 0.0
    %v1288 = vmax.f32 %v1256, 0.0
    %v1289 = vmax.f32 %v1257, 0.0
    %v1290 = vmax.f32 %v1258, 0.0
    %v1291 = vmax.f32 %v1259, 0.0
    %v1292 = vmax.f32 %v1260, 0.0
    %v1293 = vmax.f32 %v1261, 0.0
    %v1294 = vmax.f32 %v1262, 0.0
    %v1295 = vmax.f32 %v1263, 0.0
    %v1296 = vmax.f32 %v1264, 0.0
    %v1297 = vmax.f32 %v1265, 0.0
    %v1298 = vmax.f32 %v1266, 0.0
    %v1299 = vmax.f32 %v1267, 0.0
    %v1300 = vmax.f32 %v1268, 0.0
    %v1301 = vmax.f32 %v1269, 0.0
    %v1302 = vmax.f32 %v1270, 0.0
    %v1303 = vmax.f32 %v1271, 0.0
    %v1304 = vmax.f32 %v1272, 0.0
    %v1305 = vmax.f32 %v1273, 0.0
    %v1306 = vmax.f32 %v1274, 0.0
    %v1307 = vmax.f32 %v1275, 0.0
    %v1308 = vmax.f32 %v1276, 0.0
    %v1309 = vmax.f32 %v1277, 0.0
    %v1310 = vmax.f32 %v1278, 0.0
    %v1311 = vmax.f32 %v1279, 0.0
    %v1312 = vmax.f32 %v1280, 0.0
    %v1313 = vmax.f32 %v1281, 0.0
    %v1314 = vmul.f32 %v1054, %v1282
    %v1315 = vmul.f32 %v1059, %v1283
    %v1316 = vmul.f32 %v1064, %v1284
    %v1317 = vmul.f32 %v1069, %v1285
    %v1318 = vmul.f32 %v1074, %v1286
    %v1319 = vmul.f32 %v1079, %v1287
    %v1320 = vmul.f32 %v1084, %v1288
    %v1321 = vmul.f32 %v1089, %v1289
    %v1322 = vmul.f32 %v1094, %v1290
    %v1323 = vmul.f32 %v1099, %v1291
    %v1324 = vmul.f32 %v1104, %v1292
    %v1325 = vmul.f32 %v1109, %v1293
    %v1326 = vmul.f32 %v1114, %v1294
    %v1327 = vmul.f32 %v1119, %v1295
    %v1328 = vmul.f32 %v1124, %v1296
    %v1329 = vmul.f32 %v1129, %v1297
    %v1330 = vmul.f32 %v1134, %v1298
    %v1331 = vmul.f32 %v1139, %v1299
    %v1332 = vmul.f32 %v1144, %v1300
    %v1333 = vmul.f32 %v1149, %v1301
    %v1334 = vmul.f32 %v1154, %v1302
    %v1335 = vmul.f32 %v1159, %v1303
    %v1336 = vmul.f32 %v1164, %v1304
    %v1337 = vmul.f32 %v1169, %v1305
    %v1338 = vmul.f32 %v1174, %v1306
    %v1339 = vmul.f32 %v1179, %v1307
    %v1340 = vmul.f32 %v1184, %v1308
    %v1341 = vmul.f32 %v1189, %v1309
    %v1342 = vmul.f32 %v1194, %v1310
    %v1343 = vmul.f32 %v1199, %v1311
    %v1344 = vmul.f32 %v1204, %v1312
    %v1345 = vmul.f32 %v1209, %v1313
    %v1346 = vpack.c.bf16 %v1315, %v1314
    %v1347 = vpack.c.bf16 %v1317, %v1316
    %v1348 = vpack.c.bf16 %v1319, %v1318
    %v1349 = vpack.c.bf16 %v1321, %v1320
    %v1350 = vpack.c.bf16 %v1323, %v1322
    %v1351 = vpack.c.bf16 %v1325, %v1324
    %v1352 = vpack.c.bf16 %v1327, %v1326
    %v1353 = vpack.c.bf16 %v1329, %v1328
    %v1354 = vpack.c.bf16 %v1331, %v1330
    %v1355 = vpack.c.bf16 %v1333, %v1332
    %v1356 = vpack.c.bf16 %v1335, %v1334
    %v1357 = vpack.c.bf16 %v1337, %v1336
    %v1358 = vpack.c.bf16 %v1339, %v1338
    %v1359 = vpack.c.bf16 %v1341, %v1340
    %v1360 = vpack.c.bf16 %v1343, %v1342
    %v1361 = vpack.c.bf16 %v1345, %v1344
    %v1362 = vld [vmem:[%s6] sm:$0xf]
    %v1363 = vld [vmem:[%s6 + $0x4] sm:$0xf]
    %v1364 = vld [vmem:[%s6 + $0x8] sm:$0xf]
    %v1365 = vld [vmem:[%s6 + $0xc] sm:$0xf]
    %v1366 = vld [vmem:[%s6 + $0x10] sm:$0xf]
    %v1367 = vld [vmem:[%s6 + $0x14] sm:$0xf]
    %v1368 = vld [vmem:[%s6 + $0x18] sm:$0xf]
    %v1369 = vld [vmem:[%s6 + $0x1c] sm:$0xf]
    %v1370 = vld [vmem:[%s6 + $0x20] sm:$0xf]
    %v1371 = vld [vmem:[%s6 + $0x24] sm:$0xf]
    %v1372 = vld [vmem:[%s6 + $0x28] sm:$0xf]
    %v1373 = vld [vmem:[%s6 + $0x2c] sm:$0xf]
    %v1374 = vld [vmem:[%s6 + $0x30] sm:$0xf]
    %v1375 = vld [vmem:[%s6 + $0x34] sm:$0xf]
    %v1376 = vld [vmem:[%s6 + $0x38] sm:$0xf]
    %v1377 = vld [vmem:[%s6 + $0x3c] sm:$0xf]
    %v1394 = vunpack.c.l.b16 %v1362
    %v1395 = vunpack.c.l.b16 %v1363
    %v1396 = vunpack.c.l.b16 %v1364
    %v1397 = vunpack.c.l.b16 %v1365
    %v1398 = vunpack.c.l.b16 %v1366
    %v1399 = vunpack.c.l.b16 %v1367
    %v1400 = vunpack.c.l.b16 %v1368
    %v1401 = vunpack.c.l.b16 %v1369
    %v1402 = vunpack.c.l.b16 %v1370
    %v1403 = vunpack.c.l.b16 %v1371
    %v1404 = vunpack.c.l.b16 %v1372
    %v1405 = vunpack.c.l.b16 %v1373
    %v1406 = vunpack.c.l.b16 %v1374
    %v1407 = vunpack.c.l.b16 %v1375
    %v1408 = vunpack.c.l.b16 %v1376
    %v1409 = vunpack.c.l.b16 %v1377
    %v1410 = vpack.c.b16 %v1395, %v1394
    %v1411 = vpack.c.b16 %v1397, %v1396
    %v1412 = vpack.c.b16 %v1399, %v1398
    %v1413 = vpack.c.b16 %v1401, %v1400
    %v1414 = vpack.c.b16 %v1403, %v1402
    %v1415 = vpack.c.b16 %v1405, %v1404
    %v1416 = vpack.c.b16 %v1407, %v1406
    %v1417 = vpack.c.b16 %v1409, %v1408
    %1426 = vmatprep.subr.bf16.mxu0 0
    %1427 = vmatpush1.bf16.msra.mxu0 %v1410
    %1428 = vmatprep.subr.bf16.mxu0 0
    %1429 = vmatpush1.bf16.msra.mxu0 %v1411
    %1430 = vmatprep.subr.bf16.mxu0 0
    %1431 = vmatpush1.bf16.msra.mxu0 %v1412
    %1432 = vmatprep.subr.bf16.mxu0 0
    %1433 = vmatpush1.bf16.msra.mxu0 %v1413
    %1434 = vmatprep.subr.bf16.mxu0 0
    %1435 = vmatpush1.bf16.msra.mxu0 %v1414
    %1436 = vmatprep.subr.bf16.mxu0 0
    %1437 = vmatpush1.bf16.msra.mxu0 %v1415
    %1438 = vmatprep.subr.bf16.mxu0 0
    %1439 = vmatpush1.bf16.msra.mxu0 %v1416
    %1440 = vmatprep.subr.bf16.mxu0 0
    %1441 = vmatpush1.bf16.msra.mxu0 %v1417
    %1442 = vmatprep.subr.bf16.mxu0 0
    %1443 = vmatpush1.bf16.msra.mxu0 0
    %1444 = vmatprep.subr.bf16.mxu0 0
    %1445 = vmatpush1.bf16.msra.mxu0 0
    %1446 = vmatprep.subr.bf16.mxu0 0
    %1447 = vmatpush1.bf16.msra.mxu0 0
    %1448 = vmatprep.subr.bf16.mxu0 0
    %1449 = vmatpush1.bf16.msra.mxu0 0
    %1450 = vmatprep.subr.bf16.mxu0 0
    %1451 = vmatpush1.bf16.msra.mxu0 0
    %1452 = vmatprep.subr.bf16.mxu0 0
    %1453 = vmatpush1.bf16.msra.mxu0 0
    %1454 = vmatprep.subr.bf16.mxu0 0
    %1455 = vmatpush1.bf16.msra.mxu0 0
    %1456 = vmatprep.subr.bf16.mxu0 0
    %1457 = vmatpush1.bf16.msra.mxu0 0
    %1458 = vmatprep.mubr.bf16.mxu0 0
    %1459 = vmatmul.mubr.bf16.gmra.mrb[0].mxu0 %v1346
    %v1460 = vpop.f32.mrb[0].mxu0
    %v1461 = vadd.f32 0.0, %v1460
    %v1462 = vpop.f32.mrb[0].mxu0
    %v1463 = vpop.f32.mrb[0].mxu0
    %v1464 = vadd.f32 0.0, %v1463
    %v1465 = vpop.f32.mrb[0].mxu0
    %1466 = vmatprep.mubr.bf16.mxu0 0
    %1467 = vmatmul.mubr.bf16.gmra.mrb[0].mxu0 %v1347
    %v1468 = vpop.f32.mrb[0].mxu0
    %v1469 = vadd.f32 0.0, %v1468
    %v1470 = vpop.f32.mrb[0].mxu0
    %v1471 = vpop.f32.mrb[0].mxu0
    %v1472 = vadd.f32 0.0, %v1471
    %v1473 = vpop.f32.mrb[0].mxu0
    %1474 = vmatprep.mubr.bf16.mxu0 0
    %1475 = vmatmul.mubr.bf16.gmra.mrb[0].mxu0 %v1348
    %v1476 = vpop.f32.mrb[0].mxu0
    %v1477 = vadd.f32 0.0, %v1476
    %v1478 = vpop.f32.mrb[0].mxu0
    %v1479 = vpop.f32.mrb[0].mxu0
    %v1480 = vadd.f32 0.0, %v1479
    %v1481 = vpop.f32.mrb[0].mxu0
    %1482 = vmatprep.mubr.bf16.mxu0 0
    %1483 = vmatmul.mubr.bf16.gmra.mrb[0].mxu0 %v1349
    %v1484 = vpop.f32.mrb[0].mxu0
    %v1485 = vadd.f32 0.0, %v1484
    %v1486 = vpop.f32.mrb[0].mxu0
    %v1487 = vpop.f32.mrb[0].mxu0
    %v1488 = vadd.f32 0.0, %v1487
    %v1489 = vpop.f32.mrb[0].mxu0
    %1490 = vmatprep.mubr.bf16.mxu0 0
    %1491 = vmatmul.mubr.bf16.gmra.mrb[0].mxu0 %v1350
    %v1492 = vpop.f32.mrb[0].mxu0
    %v1493 = vadd.f32 0.0, %v1492
    %v1494 = vpop.f32.mrb[0].mxu0
    %v1495 = vpop.f32.mrb[0].mxu0
    %v1496 = vadd.f32 0.0, %v1495
    %v1497 = vpop.f32.mrb[0].mxu0
    %1498 = vmatprep.mubr.bf16.mxu0 0
    %1499 = vmatmul.mubr.bf16.gmra.mrb[0].mxu0 %v1351
    %v1500 = vpop.f32.mrb[0].mxu0
    %v1501 = vadd.f32 0.0, %v1500
    %v1502 = vpop.f32.mrb[0].mxu0
    %v1503 = vpop.f32.mrb[0].mxu0
    %v1504 = vadd.f32 0.0, %v1503
    %v1505 = vpop.f32.mrb[0].mxu0
    %1506 = vmatprep.mubr.bf16.mxu0 0
    %1507 = vmatmul.mubr.bf16.gmra.mrb[0].mxu0 %v1352
    %v1508 = vpop.f32.mrb[0].mxu0
    %v1509 = vadd.f32 0.0, %v1508
    %v1510 = vpop.f32.mrb[0].mxu0
    %v1511 = vpop.f32.mrb[0].mxu0
    %v1512 = vadd.f32 0.0, %v1511
    %v1513 = vpop.f32.mrb[0].mxu0
    %1514 = vmatprep.mubr.bf16.mxu0 0
    %1515 = vmatmul.mubr.bf16.gmra.mrb[0].mxu0 %v1353
    %v1516 = vpop.f32.mrb[0].mxu0
    %v1517 = vadd.f32 0.0, %v1516
    %v1518 = vpop.f32.mrb[0].mxu0
    %v1519 = vpop.f32.mrb[0].mxu0
    %v1520 = vadd.f32 0.0, %v1519
    %v1521 = vpop.f32.mrb[0].mxu0
    %1522 = vmatprep.mubr.bf16.mxu0 0
    %1523 = vmatmul.mubr.bf16.gmra.mrb[0].mxu0 %v1354
    %v1524 = vpop.f32.mrb[0].mxu0
    %v1525 = vadd.f32 0.0, %v1524
    %v1526 = vpop.f32.mrb[0].mxu0
    %v1527 = vpop.f32.mrb[0].mxu0
    %v1528 = vadd.f32 0.0, %v1527
    %v1529 = vpop.f32.mrb[0].mxu0
    %1530 = vmatprep.mubr.bf16.mxu0 0
    %1531 = vmatmul.mubr.bf16.gmra.mrb[0].mxu0 %v1355
    %v1532 = vpop.f32.mrb[0].mxu0
    %v1533 = vadd.f32 0.0, %v1532
    %v1534 = vpop.f32.mrb[0].mxu0
    %v1535 = vpop.f32.mrb[0].mxu0
    %v1536 = vadd.f32 0.0, %v1535
    %v1537 = vpop.f32.mrb[0].mxu0
    %1538 = vmatprep.mubr.bf16.mxu0 0
    %1539 = vmatmul.mubr.bf16.gmra.mrb[0].mxu0 %v1356
    %v1540 = vpop.f32.mrb[0].mxu0
    %v1541 = vadd.f32 0.0, %v1540
    %v1542 = vpop.f32.mrb[0].mxu0
    %v1543 = vpop.f32.mrb[0].mxu0
    %v1544 = vadd.f32 0.0, %v1543
    %v1545 = vpop.f32.mrb[0].mxu0
    %1546 = vmatprep.mubr.bf16.mxu0 0
    %1547 = vmatmul.mubr.bf16.gmra.mrb[0].mxu0 %v1357
    %v1548 = vpop.f32.mrb[0].mxu0
    %v1549 = vadd.f32 0.0, %v1548
    %v1550 = vpop.f32.mrb[0].mxu0
    %v1551 = vpop.f32.mrb[0].mxu0
    %v1552 = vadd.f32 0.0, %v1551
    %v1553 = vpop.f32.mrb[0].mxu0
    %1554 = vmatprep.mubr.bf16.mxu0 0
    %1555 = vmatmul.mubr.bf16.gmra.mrb[0].mxu0 %v1358
    %v1556 = vpop.f32.mrb[0].mxu0
    %v1557 = vadd.f32 0.0, %v1556
    %v1558 = vpop.f32.mrb[0].mxu0
    %v1559 = vpop.f32.mrb[0].mxu0
    %v1560 = vadd.f32 0.0, %v1559
    %v1561 = vpop.f32.mrb[0].mxu0
    %1562 = vmatprep.mubr.bf16.mxu0 0
    %1563 = vmatmul.mubr.bf16.gmra.mrb[0].mxu0 %v1359
    %v1564 = vpop.f32.mrb[0].mxu0
    %v1565 = vadd.f32 0.0, %v1564
    %v1566 = vpop.f32.mrb[0].mxu0
    %v1567 = vpop.f32.mrb[0].mxu0
    %v1568 = vadd.f32 0.0, %v1567
    %v1569 = vpop.f32.mrb[0].mxu0
    %1570 = vmatprep.mubr.bf16.mxu0 0
    %1571 = vmatmul.mubr.bf16.gmra.mrb[0].mxu0 %v1360
    %v1572 = vpop.f32.mrb[0].mxu0
    %v1573 = vadd.f32 0.0, %v1572
    %v1574 = vpop.f32.mrb[0].mxu0
    %v1575 = vpop.f32.mrb[0].mxu0
    %v1576 = vadd.f32 0.0, %v1575
    %v1577 = vpop.f32.mrb[0].mxu0
    %1578 = vmatprep.mubr.bf16.mxu0 0
    %1579 = vmatmul.mubr.bf16.gmra.mrb[0].mxu0 %v1361
    %v1580 = vpop.f32.mrb[0].mxu0
    %v1581 = vadd.f32 0.0, %v1580
    %v1582 = vpop.f32.mrb[0].mxu0
    %v1583 = vpop.f32.mrb[0].mxu0
    %v1584 = vadd.f32 0.0, %v1583
    %v1585 = vpop.f32.mrb[0].mxu0
    %1586 = vdwg.mxu0
    %v1587 = vld [vmem:[#allocation3] sm:$0xff]
    %v1588 = vld [vmem:[#allocation3 + $0x8] sm:$0xff]
    %v1589 = vld [vmem:[#allocation3 + $0x10] sm:$0xff]
    %v1590 = vld [vmem:[#allocation3 + $0x18] sm:$0xff]
    %v1591 = vpack.c.bf16 %v1589, %v1587
    %v1592 = vpack.c.bf16 %v1590, %v1588
    %v1593 = vpack.c.bf16 %v1464, %v1461
    %v1594 = vpack.c.bf16 %v1472, %v1469
    %v1595 = vpack.c.bf16 %v1480, %v1477
    %v1596 = vpack.c.bf16 %v1488, %v1485
    %v1597 = vpack.c.bf16 %v1496, %v1493
    %v1598 = vpack.c.bf16 %v1504, %v1501
    %v1599 = vpack.c.bf16 %v1512, %v1509
    %v1600 = vpack.c.bf16 %v1520, %v1517
    %v1601 = vpack.c.bf16 %v1528, %v1525
    %v1602 = vpack.c.bf16 %v1536, %v1533
    %v1603 = vpack.c.bf16 %v1544, %v1541
    %v1604 = vpack.c.bf16 %v1552, %v1549
    %v1605 = vpack.c.bf16 %v1560, %v1557
    %v1606 = vpack.c.bf16 %v1568, %v1565
    %v1607 = vpack.c.bf16 %v1576, %v1573
    %v1608 = vpack.c.bf16 %v1584, %v1581
    %1609 = vmatprep.subr.bf16.mxu0 0
    %1610 = vmatpush1.bf16.msra.mxu0 %v1593
    %1611 = vmatprep.subr.bf16.mxu0 0
    %1612 = vmatpush1.bf16.msra.mxu0 %v1594
    %1613 = vmatprep.subr.bf16.mxu0 0
    %1614 = vmatpush1.bf16.msra.mxu0 %v1595
    %1615 = vmatprep.subr.bf16.mxu0 0
    %1616 = vmatpush1.bf16.msra.mxu0 %v1596
    %1617 = vmatprep.subr.bf16.mxu0 0
    %1618 = vmatpush1.bf16.msra.mxu0 %v1597
    %1619 = vmatprep.subr.bf16.mxu0 0
    %1620 = vmatpush1.bf16.msra.mxu0 %v1598
    %1621 = vmatprep.subr.bf16.mxu0 0
    %1622 = vmatpush1.bf16.msra.mxu0 %v1599
    %1623 = vmatprep.subr.bf16.mxu0 0
    %1624 = vmatpush1.bf16.msra.mxu0 %v1600
    %1625 = vmatprep.subr.bf16.mxu0 0
    %1626 = vmatpush1.bf16.msra.mxu0 %v1601
    %1627 = vmatprep.subr.bf16.mxu0 0
    %1628 = vmatpush1.bf16.msra.mxu0 %v1602
    %1629 = vmatprep.subr.bf16.mxu0 0
    %1630 = vmatpush1.bf16.msra.mxu0 %v1603
    %1631 = vmatprep.subr.bf16.mxu0 0
    %1632 = vmatpush1.bf16.msra.mxu0 %v1604
    %1633 = vmatprep.subr.bf16.mxu0 0
    %1634 = vmatpush1.bf16.msra.mxu0 %v1605
    %1635 = vmatprep.subr.bf16.mxu0 0
    %1636 = vmatpush1.bf16.msra.mxu0 %v1606
    %1637 = vmatprep.subr.bf16.mxu0 0
    %1638 = vmatpush1.bf16.msra.mxu0 %v1607
    %1639 = vmatprep.subr.bf16.mxu0 0
    %1640 = vmatpush1.bf16.msra.mxu0 %v1608
    %1641 = vmatprep.mubr.bf16.mxu0 %v1592
    %1642 = vmatmul.mubr.bf16.gmra.mrb[0].mxu0 %v1591
    %v1643 = vpop.f32.mrb[0].mxu0
    %v1644 = vadd.f32 0.0, %v1643
    %v1645 = vpop.f32.mrb[0].mxu0
    %v1646 = vpop.f32.mrb[0].mxu0
    %v1647 = vadd.f32 0.0, %v1646
    %v1648 = vpop.f32.mrb[0].mxu0
    %1649 = vdwg.mxu0
    %1650 = vst [vmem:[%s7] sm:$0xff] %v1644
    %1651 = vst [vmem:[%s7 + $0x8] sm:$0xff] %v1647
  $region37: #{pose_gcn_forward.3} parent=0 // pred_fallthru
    _
  // Predicated region
  $region38: #{pose_gcn_forward.3} parent=0 // pred_check
    _
  $region39: #{pose_gcn_forward.3} parent=0 // pred_check_branch
    %1653 = sbr.rel (0) target = $region41
  $region40: #{pose_gcn_forward.3} parent=0 // pred_region
    _
  $region41: #{pose_gcn_forward.3} parent=0 // pred_fallthru
    _
  // Predicated region
  $region42: #{pose_gcn_forward.3} parent=0 // pred_check
    _
  $region43: #{pose_gcn_forward.3} parent=0 // pred_check_branch
    %1655 = sbr.rel (0) target = $region45
  $region44: #{pose_gcn_forward.3} parent=0 // pred_region
    _
  $region45: #{pose_gcn_forward.3} parent=0 // pred_fallthru
    _

</llo_original>
